<compile_context>
chip_gen: v7x
topology: tpu7x:2x2x1
jax: 0.10.0
libtpu: 0.0.40
codegen_flags: <defaults>
</compile_context>

<pallas_src>
import functools

import jax
import jax.numpy as jnp
from jax.experimental import pallas as pl
from jax.experimental.pallas import tpu as pltpu

LANE = 128  # TPU lane width; channel dims are padded to a multiple of this.


def _round_up(x, m):
    return (x + m - 1) // m * m


def _pad_channels(x, m):
    c = x.shape[-1]
    cp = _round_up(c, m)
    if cp == c:
        return x
    pad = ((0, 0),) * (x.ndim - 1) + ((0, cp - c),)
    return jnp.pad(x, pad)


def _pick_th(H, W, target_rows=2048):
    """Largest divisor TH of H with TH*W <= target_rows (prefer >= 2 row blocks)."""
    divs = [d for d in range(1, H + 1) if H % d == 0 and d * W <= target_rows]
    if not divs:
        return 1
    th = max(divs)
    if th == H and len(divs) > 1:
        th = sorted(divs)[-2]  # keep >= 2 row blocks so the pipeline/stats path is exercised
    return th


def _conv_stats_kernel(x_ref, w_ref, raw_ref, stats_ref, *, TH, W):
    """Pass 1: 3x3 conv as 9 accumulated MXU matmuls + BN partial statistics.

    x_ref:     (H+2, W+2, Cinp) bf16   whole padded image, resident across hb
    w_ref:     (9, Cinp, Coutp) bf16   taps ordered (dh, dw), resident
    raw_ref:   (TH*W, Coutp)    f32    pre-BN conv output tile
    stats_ref: (2, Coutp)       f32    per-image running [sum; sum_of_squares]
    """
    hb = pl.program_id(1)

    @pl.when(hb == 0)
    def _():  # new image -> reset the per-image stats accumulator
        stats_ref[...] = jnp.zeros_like(stats_ref)

    h0 = hb * TH
    cinp = x_ref.shape[-1]

    acc = None
    for dh in range(3):
        # (TH, W+2, Cinp) window of the resident padded image (halo handled here,
        # so no im2col / duplicated HBM traffic is needed).
        x_dh = x_ref[pl.ds(h0 + dh, TH), :, :]
        for dw in range(3):
            xs = x_dh[:, dw:dw + W, :].reshape(TH * W, cinp)  # bf16 operand
            part = jnp.dot(xs, w_ref[3 * dh + dw],
                           preferred_element_type=jnp.float32)  # f32 accumulation
            acc = part if acc is None else acc + part

    raw_ref[...] = acc
    # Cross-tile BatchNorm reduction (per channel).
    stats_ref[0:1, :] += jnp.sum(acc, axis=0, keepdims=True)
    stats_ref[1:2, :] += jnp.sum(acc * acc, axis=0, keepdims=True)


def _bn_relu_kernel(raw_ref, scale_ref, shift_ref, o_ref):
    """Pass 2: y = relu(raw * scale + shift); scale/shift fold BN gamma/beta."""
    y = raw_ref[...] * scale_ref[...] + shift_ref[...]
    o_ref[...] = jnp.maximum(y, 0.0).astype(o_ref.dtype)


def conv2d_block(x, w_oihw, gamma, beta, eps=1e-5):
    """One Conv2DBlock on a channel-padded NHWC bf16 activation.

    x: (N, H, W, Cinp) bf16  ->  (N, H, W, Coutp) bf16
    """
    N, H, W, Cinp = x.shape
    Cout, Cin = int(w_oihw.shape[0]), int(w_oihw.shape[1])
    Coutp = _round_up(Cout, LANE)
    assert Cinp == _round_up(Cin, LANE), "activation channel padding mismatch"

    # Weights: OIHW -> (dh, dw, ci, co), zero-pad channels, -> (9, Cinp, Coutp) bf16.
    wk = jnp.transpose(w_oihw, (2, 3, 1, 0)).astype(jnp.float32)
    wk = jnp.pad(wk, ((0, 0), (0, 0), (0, Cinp - Cin), (0, Coutp - Cout)))
    wk = wk.reshape(9, Cinp, Coutp).astype(jnp.bfloat16)

    # Spatial zero padding (padding=1).  Stays NHWC / bf16; no im2col copy.
    xp = jnp.pad(x, ((0, 0), (1, 1), (1, 1), (0, 0)))

    TH = _pick_th(H, W)
    HB = H // TH
    M = N * H * W
    TM = TH * W

    flops = 2 * M * 9 * Cinp * Coutp
    bytes_accessed = (xp.size * 2 + wk.size * 2 + M * Coutp * 4 + N * 2 * Coutp * 4)

    raw, stats = pl.pallas_call(
        functools.partial(_conv_stats_kernel, TH=TH, W=W),
        out_shape=(
            jax.ShapeDtypeStruct((N * HB, TM, Coutp), jnp.float32),  # pre-BN conv tiles
            jax.ShapeDtypeStruct((N, 2, Coutp), jnp.float32),        # per-image sum / sumsq
        ),
        grid=(N, HB),
        in_specs=[
            # Whole padded image, resident across the hb axis (re-fetched per image only).
            pl.BlockSpec((None, H + 2, W + 2, Cinp), lambda n, hb: (n, 0, 0, 0)),
            # All 9 taps, resident for the whole grid.
            pl.BlockSpec((9, Cinp, Coutp), lambda n, hb: (0, 0, 0)),
        ],
        out_specs=(
            pl.BlockSpec((None, TM, Coutp), lambda n, hb: (n * HB + hb, 0, 0)),
            pl.BlockSpec((None, 2, Coutp), lambda n, hb: (n, 0, 0)),  # accumulator
        ),
        compiler_params=pltpu.CompilerParams(
            dimension_semantics=("parallel", "arbitrary"),  # images across cores (v7x)
            vmem_limit_bytes=32 * 1024 * 1024,
        ),
        cost_estimate=pl.CostEstimate(flops=flops, transcendentals=0,
                                      bytes_accessed=bytes_accessed),
    )(xp, wk)

    # Tiny (N, 2, Coutp) reduction + BN affine folding: pure XLA glue.
    tot = jnp.sum(stats, axis=0)                       # (2, Coutp)
    mean = tot[0] / M
    var = jnp.maximum(tot[1] / M - mean * mean, 0.0)   # biased variance (BN training mode)
    gamma_p = jnp.pad(gamma.astype(jnp.float32), (0, Coutp - Cout))
    beta_p = jnp.pad(beta.astype(jnp.float32), (0, Coutp - Cout))
    g_inv = gamma_p * jax.lax.rsqrt(var + eps)
    scale = g_inv.reshape(1, Coutp)
    shift = (beta_p - mean * g_inv).reshape(1, Coutp)

    # Pass 2: tiled, fully parallel normalize + affine + ReLU.
    raw2d = raw.reshape(M, Coutp)                      # layout-preserving view
    act = pl.pallas_call(
        _bn_relu_kernel,
        out_shape=jax.ShapeDtypeStruct((M, Coutp), jnp.bfloat16),
        grid=(M // TM,),
        in_specs=[
            pl.BlockSpec((TM, Coutp), lambda i: (i, 0)),
            pl.BlockSpec((1, Coutp), lambda i: (0, 0)),
            pl.BlockSpec((1, Coutp), lambda i: (0, 0)),
        ],
        out_specs=pl.BlockSpec((TM, Coutp), lambda i: (i, 0)),
        compiler_params=pltpu.CompilerParams(
            dimension_semantics=("parallel",),
            vmem_limit_bytes=32 * 1024 * 1024,
        ),
        cost_estimate=pl.CostEstimate(flops=2 * M * Coutp, transcendentals=0,
                                      bytes_accessed=M * Coutp * 6),
    )(raw2d, scale, shift)
    return act.reshape(N, H, W, Coutp)


def double_2d_conv(x_nchw, params, eps=1e-5):
    """Double2DConv.forward: Conv2DBlock(in->out) then Conv2DBlock(out->out)."""
    Cout = int(params["w2"].shape[0])
    # Single NCHW -> NHWC transpose; NHWC (channel-padded, bf16) kept between blocks.
    x = jnp.transpose(x_nchw, (0, 2, 3, 1)).astype(jnp.bfloat16)
    x = _pad_channels(x, LANE)
    x = conv2d_block(x, params["w1"], params["g1"], params["b1"], eps)
    x = conv2d_block(x, params["w2"], params["g2"], params["b2"], eps)
    x = x[..., :Cout].astype(jnp.float32)
    return jnp.transpose(x, (0, 3, 1, 2))  # NHWC -> NCHW once, at the very end


def init_params(key, in_dim, out_dim):
    """Deterministic synthetic init matching the PyTorch parameter shapes."""
    k1, k2 = jax.random.split(key)

    def conv_w(k, o, i):
        bound = 1.0 / jnp.sqrt(jnp.float32(i * 9))
        return jax.random.uniform(k, (o, i, 3, 3), jnp.float32, -bound, bound)

    return {
        "w1": conv_w(k1, out_dim, in_dim),         # Conv2d(in, out, 3, pad=1, bias=False)
        "g1": jnp.ones((out_dim,), jnp.float32),   # BatchNorm2d weight
        "b1": jnp.zeros((out_dim,), jnp.float32),  # BatchNorm2d bias
        "w2": conv_w(k2, out_dim, out_dim),
        "g2": jnp.ones((out_dim,), jnp.float32),
        "b2": jnp.zeros((out_dim,), jnp.float32),
    }


def _reference_block(x, w, g, b, eps=1e-5):
    """Pure-JAX f32 reference: conv3x3(pad=1) -> BN(training stats) -> ReLU."""
    y = jax.lax.conv_general_dilated(
        x, w, window_strides=(1, 1), padding=((1, 1), (1, 1)),
        dimension_numbers=("NCHW", "OIHW", "NCHW"),
        precision=jax.lax.Precision.HIGHEST)
    mean = jnp.mean(y, axis=(0, 2, 3), keepdims=True)
    var = jnp.mean(jnp.square(y - mean), axis=(0, 2, 3), keepdims=True)
    y = (y - mean) * jax.lax.rsqrt(var + eps)
    y = y * g.reshape(1, -1, 1, 1) + b.reshape(1, -1, 1, 1)
    return jnp.maximum(y, 0.0)


def reference_double_conv(x, params, eps=1e-5):
    x = _reference_block(x, params["w1"], params["g1"], params["b1"], eps)
    x = _reference_block(x, params["w2"], params["g2"], params["b2"], eps)
    return x


if __name__ == "__main__":
    key = jax.random.PRNGKey(0)
    kx, kp = jax.random.split(key)

    N, Cin, H, W = 2, 4, 16, 16
    Cout = 8

    x = jax.random.normal(kx, (N, Cin, H, W), jnp.float32)
    params = init_params(kp, Cin, Cout)

    y = jax.jit(double_2d_conv)(x, params)
    y = jax.block_until_ready(y)

    assert y.shape == (N, Cout, H, W)
    assert bool(jnp.all(y >= 0.0))  # ReLU output is non-negative

    # Self-check against a pure-JAX f32 reference (bf16 operands -> loose tol).
    y_ref = reference_double_conv(x, params)
    err = float(jnp.max(jnp.abs(y - y_ref)))
    assert err < 0.15, f"max abs err vs reference: {err}"

    print("KERNEL_OK")
</pallas_src>

<mosaic_0001>
module attributes {stable_mosaic.version = 11 : i64} {
  func.func @_conv_stats_kernel(%arg0: i32, %arg1: i32, %arg2: memref<1x18x18x128xbf16, #tpu.memory_space<vmem>>, %arg3: memref<9x128x128xbf16, #tpu.memory_space<vmem>>, %arg4: memref<1x128x128xf32, #tpu.memory_space<vmem>>, %arg5: memref<1x2x128xf32, #tpu.memory_space<vmem>>) attributes {dimension_semantics = [#tpu.dimension_semantics<parallel>, #tpu.dimension_semantics<arbitrary>], iteration_bounds = array<i64: 2, 2>, scalar_prefetch = 0 : i64, scratch_operands = 0 : i64, tpu.core_type = #tpu.core_type<tc>, window_params = [{transform_indices = @transform_0, window_bounds = array<i64: 1, 18, 18, 128>}, {pipeline_mode = #tpu.pipeline_mode<synchronous>, transform_indices = @transform_1, window_bounds = array<i64: 9, 128, 128>}, {transform_indices = @transform_2, window_bounds = array<i64: 1, 128, 128>}, {transform_indices = @transform_3, window_bounds = array<i64: 1, 2, 128>}]} {
    %c0_i32 = arith.constant 0 : i32
    %0 = arith.cmpi eq, %arg1, %c0_i32 : i32
    %1 = arith.extui %0 : i1 to i32
    %c0_i32_0 = arith.constant 0 : i32
    %2 = arith.cmpi ne, %1, %c0_i32_0 : i32
    scf.if %2 {
      %cst_54 = arith.constant 0.000000e+00 : f32
      %89 = vector.broadcast %cst_54 : f32 to vector<2x128xf32>
      %c0_55 = arith.constant 0 : index
      %c0_56 = arith.constant 0 : index
      %c0_57 = arith.constant 0 : index
      %90 = vector.load %arg5[%c0_55, %c0_56, %c0_57] : memref<1x2x128xf32, #tpu.memory_space<vmem>>, vector<1x2x128xf32>
      %91 = vector.shape_cast %90 : vector<1x2x128xf32> to vector<2x128xf32>
      %92 = vector.shape_cast %89 : vector<2x128xf32> to vector<1x2x128xf32>
      tpu.vector_store %arg5[%c0_55, %c0_56, %c0_57], %92 {strides = array<i32>} : memref<1x2x128xf32, #tpu.memory_space<vmem>>, vector<1x2x128xf32>,
    } else {
    }
    %c8_i32 = arith.constant 8 : i32
    %3 = arith.muli %arg1, %c8_i32 : i32
    %c0_i32_1 = arith.constant 0 : i32
    %4 = arith.addi %3, %c0_i32_1 : i32
    %c0 = arith.constant 0 : index
    %5 = arith.index_cast %4 : i32 to index
    %c0_2 = arith.constant 0 : index
    %c0_3 = arith.constant 0 : index
    %6 = vector.load %arg2[%c0, %5, %c0_2, %c0_3] : memref<1x18x18x128xbf16, #tpu.memory_space<vmem>>, vector<1x8x18x128xbf16>
    %7 = vector.shape_cast %6 : vector<1x8x18x128xbf16> to vector<8x18x128xbf16>
    %8 = vector.extract_strided_slice %7 {offsets = [0, 0, 0], sizes = [8, 16, 128], strides = [1, 1, 1]} : vector<8x18x128xbf16> to vector<8x16x128xbf16>
    %9 = vector.shape_cast %8 : vector<8x16x128xbf16> to vector<128x128xbf16>
    %c0_4 = arith.constant 0 : index
    %c0_5 = arith.constant 0 : index
    %c0_6 = arith.constant 0 : index
    %10 = vector.load %arg3[%c0_4, %c0_5, %c0_6] : memref<9x128x128xbf16, #tpu.memory_space<vmem>>, vector<1x128x128xbf16>
    %11 = vector.shape_cast %10 : vector<1x128x128xbf16> to vector<128x128xbf16>
    %cst = arith.constant dense<0.000000e+00> : vector<128x128xf32>
    %12 = tpu.matmul %9, %11, %cst {dimension_numbers = #tpu.dot_dimension_numbers<[1], [0], [0], [1], [0, 0, 1, 1], [], []>} : vector<128x128xbf16>, vector<128x128xbf16>, vector<128x128xf32> -> vector<128x128xf32>
    %13 = vector.extract_strided_slice %7 {offsets = [0, 1, 0], sizes = [8, 16, 128], strides = [1, 1, 1]} : vector<8x18x128xbf16> to vector<8x16x128xbf16>
    %14 = vector.shape_cast %13 : vector<8x16x128xbf16> to vector<128x128xbf16>
    %c1 = arith.constant 1 : index
    %c0_7 = arith.constant 0 : index
    %c0_8 = arith.constant 0 : index
    %15 = vector.load %arg3[%c1, %c0_7, %c0_8] : memref<9x128x128xbf16, #tpu.memory_space<vmem>>, vector<1x128x128xbf16>
    %16 = vector.shape_cast %15 : vector<1x128x128xbf16> to vector<128x128xbf16>
    %cst_9 = arith.constant dense<0.000000e+00> : vector<128x128xf32>
    %17 = tpu.matmul %14, %16, %cst_9 {dimension_numbers = #tpu.dot_dimension_numbers<[1], [0], [0], [1], [0, 0, 1, 1], [], []>} : vector<128x128xbf16>, vector<128x128xbf16>, vector<128x128xf32> -> vector<128x128xf32>
    %18 = arith.addf %12, %17 : vector<128x128xf32>
    %19 = vector.extract_strided_slice %7 {offsets = [0, 2, 0], sizes = [8, 16, 128], strides = [1, 1, 1]} : vector<8x18x128xbf16> to vector<8x16x128xbf16>
    %20 = vector.shape_cast %19 : vector<8x16x128xbf16> to vector<128x128xbf16>
    %c2 = arith.constant 2 : index
    %c0_10 = arith.constant 0 : index
    %c0_11 = arith.constant 0 : index
    %21 = vector.load %arg3[%c2, %c0_10, %c0_11] : memref<9x128x128xbf16, #tpu.memory_space<vmem>>, vector<1x128x128xbf16>
    %22 = vector.shape_cast %21 : vector<1x128x128xbf16> to vector<128x128xbf16>
    %cst_12 = arith.constant dense<0.000000e+00> : vector<128x128xf32>
    %23 = tpu.matmul %20, %22, %cst_12 {dimension_numbers = #tpu.dot_dimension_numbers<[1], [0], [0], [1], [0, 0, 1, 1], [], []>} : vector<128x128xbf16>, vector<128x128xbf16>, vector<128x128xf32> -> vector<128x128xf32>
    %24 = arith.addf %18, %23 : vector<128x128xf32>
    %c1_i32 = arith.constant 1 : i32
    %25 = arith.addi %3, %c1_i32 : i32
    %c0_13 = arith.constant 0 : index
    %26 = arith.index_cast %25 : i32 to index
    %c0_14 = arith.constant 0 : index
    %c0_15 = arith.constant 0 : index
    %27 = vector.load %arg2[%c0_13, %26, %c0_14, %c0_15] : memref<1x18x18x128xbf16, #tpu.memory_space<vmem>>, vector<1x8x18x128xbf16>
    %28 = vector.shape_cast %27 : vector<1x8x18x128xbf16> to vector<8x18x128xbf16>
    %29 = vector.extract_strided_slice %28 {offsets = [0, 0, 0], sizes = [8, 16, 128], strides = [1, 1, 1]} : vector<8x18x128xbf16> to vector<8x16x128xbf16>
    %30 = vector.shape_cast %29 : vector<8x16x128xbf16> to vector<128x128xbf16>
    %c3 = arith.constant 3 : index
    %c0_16 = arith.constant 0 : index
    %c0_17 = arith.constant 0 : index
    %31 = vector.load %arg3[%c3, %c0_16, %c0_17] : memref<9x128x128xbf16, #tpu.memory_space<vmem>>, vector<1x128x128xbf16>
    %32 = vector.shape_cast %31 : vector<1x128x128xbf16> to vector<128x128xbf16>
    %cst_18 = arith.constant dense<0.000000e+00> : vector<128x128xf32>
    %33 = tpu.matmul %30, %32, %cst_18 {dimension_numbers = #tpu.dot_dimension_numbers<[1], [0], [0], [1], [0, 0, 1, 1], [], []>} : vector<128x128xbf16>, vector<128x128xbf16>, vector<128x128xf32> -> vector<128x128xf32>
    %34 = arith.addf %24, %33 : vector<128x128xf32>
    %35 = vector.extract_strided_slice %28 {offsets = [0, 1, 0], sizes = [8, 16, 128], strides = [1, 1, 1]} : vector<8x18x128xbf16> to vector<8x16x128xbf16>
    %36 = vector.shape_cast %35 : vector<8x16x128xbf16> to vector<128x128xbf16>
    %c4 = arith.constant 4 : index
    %c0_19 = arith.constant 0 : index
    %c0_20 = arith.constant 0 : index
    %37 = vector.load %arg3[%c4, %c0_19, %c0_20] : memref<9x128x128xbf16, #tpu.memory_space<vmem>>, vector<1x128x128xbf16>
    %38 = vector.shape_cast %37 : vector<1x128x128xbf16> to vector<128x128xbf16>
    %cst_21 = arith.constant dense<0.000000e+00> : vector<128x128xf32>
    %39 = tpu.matmul %36, %38, %cst_21 {dimension_numbers = #tpu.dot_dimension_numbers<[1], [0], [0], [1], [0, 0, 1, 1], [], []>} : vector<128x128xbf16>, vector<128x128xbf16>, vector<128x128xf32> -> vector<128x128xf32>
    %40 = arith.addf %34, %39 : vector<128x128xf32>
    %41 = vector.extract_strided_slice %28 {offsets = [0, 2, 0], sizes = [8, 16, 128], strides = [1, 1, 1]} : vector<8x18x128xbf16> to vector<8x16x128xbf16>
    %42 = vector.shape_cast %41 : vector<8x16x128xbf16> to vector<128x128xbf16>
    %c5 = arith.constant 5 : index
    %c0_22 = arith.constant 0 : index
    %c0_23 = arith.constant 0 : index
    %43 = vector.load %arg3[%c5, %c0_22, %c0_23] : memref<9x128x128xbf16, #tpu.memory_space<vmem>>, vector<1x128x128xbf16>
    %44 = vector.shape_cast %43 : vector<1x128x128xbf16> to vector<128x128xbf16>
    %cst_24 = arith.constant dense<0.000000e+00> : vector<128x128xf32>
    %45 = tpu.matmul %42, %44, %cst_24 {dimension_numbers = #tpu.dot_dimension_numbers<[1], [0], [0], [1], [0, 0, 1, 1], [], []>} : vector<128x128xbf16>, vector<128x128xbf16>, vector<128x128xf32> -> vector<128x128xf32>
    %46 = arith.addf %40, %45 : vector<128x128xf32>
    %c2_i32 = arith.constant 2 : i32
    %47 = arith.addi %3, %c2_i32 : i32
    %c0_25 = arith.constant 0 : index
    %48 = arith.index_cast %47 : i32 to index
    %c0_26 = arith.constant 0 : index
    %c0_27 = arith.constant 0 : index
    %49 = vector.load %arg2[%c0_25, %48, %c0_26, %c0_27] : memref<1x18x18x128xbf16, #tpu.memory_space<vmem>>, vector<1x8x18x128xbf16>
    %50 = vector.shape_cast %49 : vector<1x8x18x128xbf16> to vector<8x18x128xbf16>
    %51 = vector.extract_strided_slice %50 {offsets = [0, 0, 0], sizes = [8, 16, 128], strides = [1, 1, 1]} : vector<8x18x128xbf16> to vector<8x16x128xbf16>
    %52 = vector.shape_cast %51 : vector<8x16x128xbf16> to vector<128x128xbf16>
    %c6 = arith.constant 6 : index
    %c0_28 = arith.constant 0 : index
    %c0_29 = arith.constant 0 : index
    %53 = vector.load %arg3[%c6, %c0_28, %c0_29] : memref<9x128x128xbf16, #tpu.memory_space<vmem>>, vector<1x128x128xbf16>
    %54 = vector.shape_cast %53 : vector<1x128x128xbf16> to vector<128x128xbf16>
    %cst_30 = arith.constant dense<0.000000e+00> : vector<128x128xf32>
    %55 = tpu.matmul %52, %54, %cst_30 {dimension_numbers = #tpu.dot_dimension_numbers<[1], [0], [0], [1], [0, 0, 1, 1], [], []>} : vector<128x128xbf16>, vector<128x128xbf16>, vector<128x128xf32> -> vector<128x128xf32>
    %56 = arith.addf %46, %55 : vector<128x128xf32>
    %57 = vector.extract_strided_slice %50 {offsets = [0, 1, 0], sizes = [8, 16, 128], strides = [1, 1, 1]} : vector<8x18x128xbf16> to vector<8x16x128xbf16>
    %58 = vector.shape_cast %57 : vector<8x16x128xbf16> to vector<128x128xbf16>
    %c7 = arith.constant 7 : index
    %c0_31 = arith.constant 0 : index
    %c0_32 = arith.constant 0 : index
    %59 = vector.load %arg3[%c7, %c0_31, %c0_32] : memref<9x128x128xbf16, #tpu.memory_space<vmem>>, vector<1x128x128xbf16>
    %60 = vector.shape_cast %59 : vector<1x128x128xbf16> to vector<128x128xbf16>
    %cst_33 = arith.constant dense<0.000000e+00> : vector<128x128xf32>
    %61 = tpu.matmul %58, %60, %cst_33 {dimension_numbers = #tpu.dot_dimension_numbers<[1], [0], [0], [1], [0, 0, 1, 1], [], []>} : vector<128x128xbf16>, vector<128x128xbf16>, vector<128x128xf32> -> vector<128x128xf32>
    %62 = arith.addf %56, %61 : vector<128x128xf32>
    %63 = vector.extract_strided_slice %50 {offsets = [0, 2, 0], sizes = [8, 16, 128], strides = [1, 1, 1]} : vector<8x18x128xbf16> to vector<8x16x128xbf16>
    %64 = vector.shape_cast %63 : vector<8x16x128xbf16> to vector<128x128xbf16>
    %c8 = arith.constant 8 : index
    %c0_34 = arith.constant 0 : index
    %c0_35 = arith.constant 0 : index
    %65 = vector.load %arg3[%c8, %c0_34, %c0_35] : memref<9x128x128xbf16, #tpu.memory_space<vmem>>, vector<1x128x128xbf16>
    %66 = vector.shape_cast %65 : vector<1x128x128xbf16> to vector<128x128xbf16>
    %cst_36 = arith.constant dense<0.000000e+00> : vector<128x128xf32>
    %67 = tpu.matmul %64, %66, %cst_36 {dimension_numbers = #tpu.dot_dimension_numbers<[1], [0], [0], [1], [0, 0, 1, 1], [], []>} : vector<128x128xbf16>, vector<128x128xbf16>, vector<128x128xf32> -> vector<128x128xf32>
    %68 = arith.addf %62, %67 : vector<128x128xf32>
    %c0_37 = arith.constant 0 : index
    %c0_38 = arith.constant 0 : index
    %c0_39 = arith.constant 0 : index
    %69 = vector.load %arg4[%c0_37, %c0_38, %c0_39] : memref<1x128x128xf32, #tpu.memory_space<vmem>>, vector<1x128x128xf32>
    %70 = vector.shape_cast %69 : vector<1x128x128xf32> to vector<128x128xf32>
    %71 = vector.shape_cast %68 : vector<128x128xf32> to vector<1x128x128xf32>
    tpu.vector_store %arg4[%c0_37, %c0_38, %c0_39], %71 {strides = array<i32>} : memref<1x128x128xf32, #tpu.memory_space<vmem>>, vector<1x128x128xf32>,
    %c0_40 = arith.constant 0 : index
    %c0_41 = arith.constant 0 : index
    %c0_42 = arith.constant 0 : index
    %72 = vector.load %arg5[%c0_40, %c0_41, %c0_42] : memref<1x2x128xf32, #tpu.memory_space<vmem>>, vector<1x1x128xf32>
    %73 = vector.shape_cast %72 : vector<1x1x128xf32> to vector<1x128xf32>
    %cst_43 = arith.constant dense<0.000000e+00> : vector<128xf32>
    %74 = vector.multi_reduction <add>, %68, %cst_43 [0] : vector<128x128xf32> to vector<128xf32>
    %75 = vector.shape_cast %74 : vector<128xf32> to vector<1x128xf32>
    %76 = arith.addf %73, %75 : vector<1x128xf32>
    %c0_44 = arith.constant 0 : index
    %c0_45 = arith.constant 0 : index
    %c0_46 = arith.constant 0 : index
    %77 = vector.load %arg5[%c0_44, %c0_45, %c0_46] : memref<1x2x128xf32, #tpu.memory_space<vmem>>, vector<1x1x128xf32>
    %78 = vector.shape_cast %77 : vector<1x1x128xf32> to vector<1x128xf32>
    %79 = vector.shape_cast %76 : vector<1x128xf32> to vector<1x1x128xf32>
    tpu.vector_store %arg5[%c0_44, %c0_45, %c0_46], %79 {strides = array<i32>} : memref<1x2x128xf32, #tpu.memory_space<vmem>>, vector<1x1x128xf32>,
    %c0_47 = arith.constant 0 : index
    %c1_48 = arith.constant 1 : index
    %c0_49 = arith.constant 0 : index
    %80 = vector.load %arg5[%c0_47, %c1_48, %c0_49] : memref<1x2x128xf32, #tpu.memory_space<vmem>>, vector<1x1x128xf32>
    %81 = vector.shape_cast %80 : vector<1x1x128xf32> to vector<1x128xf32>
    %82 = arith.mulf %68, %68 : vector<128x128xf32>
    %cst_50 = arith.constant dense<0.000000e+00> : vector<128xf32>
    %83 = vector.multi_reduction <add>, %82, %cst_50 [0] : vector<128x128xf32> to vector<128xf32>
    %84 = vector.shape_cast %83 : vector<128xf32> to vector<1x128xf32>
    %85 = arith.addf %81, %84 : vector<1x128xf32>
    %c0_51 = arith.constant 0 : index
    %c1_52 = arith.constant 1 : index
    %c0_53 = arith.constant 0 : index
    %86 = vector.load %arg5[%c0_51, %c1_52, %c0_53] : memref<1x2x128xf32, #tpu.memory_space<vmem>>, vector<1x1x128xf32>
    %87 = vector.shape_cast %86 : vector<1x1x128xf32> to vector<1x128xf32>
    %88 = vector.shape_cast %85 : vector<1x128xf32> to vector<1x1x128xf32>
    tpu.vector_store %arg5[%c0_51, %c1_52, %c0_53], %88 {strides = array<i32>} : memref<1x2x128xf32, #tpu.memory_space<vmem>>, vector<1x1x128xf32>,
    return
  }
  func.func @transform_0(%arg0: i32, %arg1: i32) -> (i32, i32, i32, i32) {
    %c0_i32 = arith.constant 0 : i32
    %c0_i32_0 = arith.constant 0 : i32
    %c0_i32_1 = arith.constant 0 : i32
    %c0_i32_2 = arith.constant 0 : i32
    return %arg0, %c0_i32, %c0_i32_0, %c0_i32_1 : i32, i32, i32, i32
  }
  func.func @transform_1(%arg0: i32, %arg1: i32) -> (i32, i32, i32) {
    %c0_i32 = arith.constant 0 : i32
    %c0_i32_0 = arith.constant 0 : i32
    %c0_i32_1 = arith.constant 0 : i32
    %c0_i32_2 = arith.constant 0 : i32
    return %c0_i32, %c0_i32_0, %c0_i32_1 : i32, i32, i32
  }
  func.func @transform_2(%arg0: i32, %arg1: i32) -> (i32, i32, i32) {
    %c2_i32 = arith.constant 2 : i32
    %0 = arith.muli %arg0, %c2_i32 : i32
    %1 = arith.addi %0, %arg1 : i32
    %c0_i32 = arith.constant 0 : i32
    %c0_i32_0 = arith.constant 0 : i32
    %c0_i32_1 = arith.constant 0 : i32
    return %1, %c0_i32, %c0_i32_0 : i32, i32, i32
  }
  func.func @transform_3(%arg0: i32, %arg1: i32) -> (i32, i32, i32) {
    %c0_i32 = arith.constant 0 : i32
    %c0_i32_0 = arith.constant 0 : i32
    %c0_i32_1 = arith.constant 0 : i32
    return %arg0, %c0_i32, %c0_i32_0 : i32, i32, i32
  }
}

module attributes {stable_mosaic.version = 11 : i64} {
  func.func @_bn_relu_kernel(%arg0: i32, %arg1: memref<128x128xf32, #tpu.memory_space<vmem>>, %arg2: memref<1x128xf32, #tpu.memory_space<vmem>>, %arg3: memref<1x128xf32, #tpu.memory_space<vmem>>, %arg4: memref<128x128xbf16, #tpu.memory_space<vmem>>) attributes {dimension_semantics = [#tpu.dimension_semantics<parallel>], iteration_bounds = array<i64: 4>, scalar_prefetch = 0 : i64, scratch_operands = 0 : i64, tpu.core_type = #tpu.core_type<tc>, window_params = [{transform_indices = @transform_0, window_bounds = array<i64: 128, 128>}, {pipeline_mode = #tpu.pipeline_mode<synchronous>, transform_indices = @transform_1, window_bounds = array<i64: 1, 128>}, {pipeline_mode = #tpu.pipeline_mode<synchronous>, transform_indices = @transform_2, window_bounds = array<i64: 1, 128>}, {transform_indices = @transform_3, window_bounds = array<i64: 128, 128>}]} {
    %c0 = arith.constant 0 : index
    %c0_0 = arith.constant 0 : index
    %0 = vector.load %arg1[%c0, %c0_0] : memref<128x128xf32, #tpu.memory_space<vmem>>, vector<128x128xf32>
    %c0_1 = arith.constant 0 : index
    %c0_2 = arith.constant 0 : index
    %1 = vector.load %arg2[%c0_1, %c0_2] : memref<1x128xf32, #tpu.memory_space<vmem>>, vector<1x128xf32>
    %2 = vector.broadcast %1 : vector<1x128xf32> to vector<128x128xf32>
    %3 = arith.mulf %0, %2 : vector<128x128xf32>
    %c0_3 = arith.constant 0 : index
    %c0_4 = arith.constant 0 : index
    %4 = vector.load %arg3[%c0_3, %c0_4] : memref<1x128xf32, #tpu.memory_space<vmem>>, vector<1x128xf32>
    %5 = vector.broadcast %4 : vector<1x128xf32> to vector<128x128xf32>
    %6 = arith.addf %3, %5 : vector<128x128xf32>
    %cst = arith.constant 0.000000e+00 : f32
    %7 = vector.broadcast %cst : f32 to vector<128x128xf32>
    %8 = arith.maximumf %6, %7 : vector<128x128xf32>
    %9 = arith.truncf %8 : vector<128x128xf32> to vector<128x128xbf16>
    %c0_5 = arith.constant 0 : index
    %c0_6 = arith.constant 0 : index
    %10 = vector.load %arg4[%c0_5, %c0_6] : memref<128x128xbf16, #tpu.memory_space<vmem>>, vector<128x128xbf16>
    tpu.vector_store %arg4[%c0_5, %c0_6], %9 {strides = array<i32>} : memref<128x128xbf16, #tpu.memory_space<vmem>>, vector<128x128xbf16>,
    return
  }
  func.func @transform_0(%arg0: i32) -> (i32, i32) {
    %c0_i32 = arith.constant 0 : i32
    %c0_i32_0 = arith.constant 0 : i32
    return %arg0, %c0_i32 : i32, i32
  }
  func.func @transform_1(%arg0: i32) -> (i32, i32) {
    %c0_i32 = arith.constant 0 : i32
    %c0_i32_0 = arith.constant 0 : i32
    %c0_i32_1 = arith.constant 0 : i32
    return %c0_i32, %c0_i32_0 : i32, i32
  }
  func.func @transform_2(%arg0: i32) -> (i32, i32) {
    %c0_i32 = arith.constant 0 : i32
    %c0_i32_0 = arith.constant 0 : i32
    %c0_i32_1 = arith.constant 0 : i32
    return %c0_i32, %c0_i32_0 : i32, i32
  }
  func.func @transform_3(%arg0: i32) -> (i32, i32) {
    %c0_i32 = arith.constant 0 : i32
    %c0_i32_0 = arith.constant 0 : i32
    return %arg0, %c0_i32 : i32, i32
  }
}

</mosaic_0001>

<llo_original>
// kernel: double_2d_conv.5
$region0: #{double_2d_conv.5}
  #allocation0 [shape = 'u32[]', space=smem, size = 0x4, offset = 0x4, fixed_abs, tag = 'smem constant byte address 0x4 - core index']
  #allocation1 [shape = 'u32[144,128]{1,0:T(1,128)}', space=vmem, size = 0x12000, scoped, tag = 'internal scratch']
  %s0 = inlined_call_operand.vmem [shape: f32[512,128], index: 0, kind: input, shape index: {}]
  %s1 = inlined_call_operand.vmem [shape: f32[1,128], index: 1, kind: input, shape index: {}]
  %s2 = inlined_call_operand.vmem [shape: f32[1,128], index: 2, kind: input, shape index: {}]
  %s3 = inlined_call_operand.vmem [shape: bf16[512,128], index: 3, kind: output, shape index: {}]
  %s4 = sld [smem:[#allocation0]]
  $region45: #{double_2d_conv.5} parent=0
    _
  %s6 = ssub.s32 1, %s4
  %s7 = scalar_select 0, %s6, %s4
  loop: start=0, step=1, limit=6
  $region2: #{double_2d_conv.5} parent=0 // loop_pre_header
    _
  $region3: #{double_2d_conv.5} parent=0 // loop_header
    %s9 = sphi 0, %s13
    %p10 = scmp.ge.s32.totalorder %s9, 6
    %s19 = sphi 0, %s21
    %s22 = sphi 0, %s19
    %s23 = sphi 0, %s22
    %s39 = sphi 0, %s23
    %s43 = sphi 0, %s43
    %s45 = sphi 0, %s43
    %s46 = sphi 0, %s45
    %s60 = sphi 0, %s46
    %s64 = sphi 0, %s64
    %s66 = sphi 0, %s64
    %s67 = sphi 0, %s66
    %s81 = sphi 0, %s67
    %s87 = sphi 0, %s89
    %s90 = sphi 0, %s87
    %s91 = sphi 0, %s90
    %s107 = sphi 0, %s91
  $region4: #{double_2d_conv.5} parent=0 // loop_header_branch
    %12 = sbr.rel (%p10) target = $region8
  $region5: #{double_2d_conv.5} parent=0 // loop_body
    %s14 = ssub.s32 %s9, 1
    %s15 = ssub.s32 %s9, 2
    %s16 = sadd.s32 %s9, 1
    %s17 = ssub.s32 %s9, %s16
    %p18 = scmp.eq.s32.totalorder %s17, 0
    %s20 = sadd.s32 %s19, 1
    %s21 = scalar_select %p18, %s19, %s20
    %p24 = pneg %p18
    %p25 = scmp.eq.s32.totalorder %s9, 3
    %p26 = por %p24, %p25
    %p27 = scmp.ne.s32.totalorder %s19, %s22
    %p28 = scmp.eq.s32.totalorder %s9, 0
    %p29 = por %p27, %p28
    %p30 = scmp.ne.s32.totalorder %s19, %s22
    %p31 = scmp.eq.s32.totalorder %s14, 3
    %p32 = por %p30, %p31
    %p33 = scmp.ne.s32.totalorder %s22, %s23
    %p34 = scmp.eq.s32.totalorder %s14, 0
    %p35 = por %p33, %p34
    %p36 = scmp.ne.s32.totalorder %s22, %s23
    %p37 = scmp.eq.s32.totalorder %s15, 3
    %p38 = por %p36, %p37
    %p40 = scmp.ne.s32.totalorder %s23, %s39
    %p41 = scmp.eq.s32.totalorder %s15, 0
    %p42 = por %p40, %p41
    %s44 = sadd.s32 %s43, 1
    %p47 = scmp.eq.s32.totalorder %s9, 3
    %p48 = scmp.ne.s32.totalorder %s43, %s45
    %p49 = scmp.eq.s32.totalorder %s9, 0
    %p50 = por %p48, %p49
    %p51 = scmp.ne.s32.totalorder %s43, %s45
    %p52 = scmp.eq.s32.totalorder %s14, 3
    %p53 = por %p51, %p52
    %p54 = scmp.ne.s32.totalorder %s45, %s46
    %p55 = scmp.eq.s32.totalorder %s14, 0
    %p56 = por %p54, %p55
    %p57 = scmp.ne.s32.totalorder %s45, %s46
    %p58 = scmp.eq.s32.totalorder %s15, 3
    %p59 = por %p57, %p58
    %p61 = scmp.ne.s32.totalorder %s46, %s60
    %p62 = scmp.eq.s32.totalorder %s15, 0
    %p63 = por %p61, %p62
    %s65 = sadd.s32 %s64, 1
    %p68 = scmp.eq.s32.totalorder %s9, 3
    %p69 = scmp.ne.s32.totalorder %s64, %s66
    %p70 = scmp.eq.s32.totalorder %s9, 0
    %p71 = por %p69, %p70
    %p72 = scmp.ne.s32.totalorder %s64, %s66
    %p73 = scmp.eq.s32.totalorder %s14, 3
    %p74 = por %p72, %p73
    %p75 = scmp.ne.s32.totalorder %s66, %s67
    %p76 = scmp.eq.s32.totalorder %s14, 0
    %p77 = por %p75, %p76
    %p78 = scmp.ne.s32.totalorder %s66, %s67
    %p79 = scmp.eq.s32.totalorder %s15, 3
    %p80 = por %p78, %p79
    %p82 = scmp.ne.s32.totalorder %s67, %s81
    %p83 = scmp.eq.s32.totalorder %s15, 0
    %p84 = por %p82, %p83
    %s85 = ssub.s32 %s9, %s16
    %p86 = scmp.eq.s32.totalorder %s85, 0
    %s88 = sadd.s32 %s87, 1
    %s89 = scalar_select %p86, %s87, %s88
    %p92 = pneg %p86
    %p93 = scmp.eq.s32.totalorder %s9, 3
    %p94 = por %p92, %p93
    %p95 = scmp.ne.s32.totalorder %s87, %s90
    %p96 = scmp.eq.s32.totalorder %s9, 0
    %p97 = por %p95, %p96
    %p98 = scmp.ne.s32.totalorder %s87, %s90
    %p99 = scmp.eq.s32.totalorder %s14, 3
    %p100 = por %p98, %p99
    %p101 = scmp.ne.s32.totalorder %s90, %s91
    %p102 = scmp.eq.s32.totalorder %s14, 0
    %p103 = por %p101, %p102
    %p104 = scmp.ne.s32.totalorder %s90, %s91
    %p105 = scmp.eq.s32.totalorder %s15, 3
    %p106 = por %p104, %p105
    %p108 = scmp.ne.s32.totalorder %s91, %s107
    %p109 = scmp.eq.s32.totalorder %s15, 0
    %p110 = por %p108, %p109
    %p111 = scmp.le.s32.totalorder 1, %s9
    %p112 = scmp.lt.s32.totalorder %s9, 5
    %p113 = pnand %p111, %p112
    %p114 = pneg %p113
    // Predicated region
    $region9: #{double_2d_conv.5} parent=5 // pred_check
      _
    $region10: #{double_2d_conv.5} parent=5 // pred_check_branch
      %116 = sbr.rel (%p113) target = $region12
    $region11: #{double_2d_conv.5} parent=5 // pred_region
      %s117 = ssub.s32 %s9, 1
      // Predicated region
      $region13: #{double_2d_conv.5} parent=11 // pred_check
        %p118 = pneg %p56
      $region14: #{double_2d_conv.5} parent=11 // pred_check_branch
        %120 = sbr.rel (%p118) target = $region16
      $region15: #{double_2d_conv.5} parent=11 // pred_region
        _
      $region16: #{double_2d_conv.5} parent=11 // pred_fallthru
        _
      // Predicated region
      $region17: #{double_2d_conv.5} parent=11 // pred_check
        %p121 = pneg %p77
      $region18: #{double_2d_conv.5} parent=11 // pred_check_branch
        %123 = sbr.rel (%p121) target = $region20
      $region19: #{double_2d_conv.5} parent=11 // pred_region
        _
      $region20: #{double_2d_conv.5} parent=11 // pred_fallthru
        _
    $region12: #{double_2d_conv.5} parent=5 // pred_fallthru
      _
    %p124 = scmp.lt.s32.totalorder %s9, 4
    // Predicated region
    $region21: #{double_2d_conv.5} parent=5 // pred_check
      %p125 = pneg %p124
    $region22: #{double_2d_conv.5} parent=5 // pred_check_branch
      %127 = sbr.rel (%p125) target = $region24
    $region23: #{double_2d_conv.5} parent=5 // pred_region
      // Predicated region
      $region25: #{double_2d_conv.5} parent=23 // pred_check
        %p128 = pneg %p29
      $region26: #{double_2d_conv.5} parent=23 // pred_check_branch
        %130 = sbr.rel (%p128) target = $region28
      $region27: #{double_2d_conv.5} parent=23 // pred_region
        %s131 = smul.u32 16, %s9
        %p132 = scmp.lt.s32.totalorder %s131, 63
        %s133 = scalar_select %p132, %s131, 63
        %s134 = smul.addr %s133, 8
        %s135 = scalar_lea.vmem %s0, %s134
        %s136 = smul.u32 16, %s9
      $region28: #{double_2d_conv.5} parent=23 // pred_fallthru
        _
    $region24: #{double_2d_conv.5} parent=5 // pred_fallthru
      _
    %p137 = scmp.le.s32.totalorder 1, %s9
    %p138 = scmp.lt.s32.totalorder %s9, 5
    %p139 = pnand %p137, %p138
    %p140 = pneg %p139
    // Predicated region
    $region29: #{double_2d_conv.5} parent=5 // pred_check
      _
    $region30: #{double_2d_conv.5} parent=5 // pred_check_branch
      %142 = sbr.rel (%p139) target = $region32
    $region31: #{double_2d_conv.5} parent=5 // pred_region
      %s143 = ssub.s32 %s9, 1
      %s144 = smul.u32 16, %s14
      %p145 = scmp.lt.s32.totalorder %s144, 63
      %s146 = scalar_select %p145, %s144, 63
      %s147 = smul.addr %s146, 8
      %s148 = scalar_lea.vmem %s0, %s147
      %p149 = pneg %p35
      %p150 = pneg %p32
      %p151 = pneg %p56
      %p152 = pneg %p53
      %p153 = pneg %p77
      %p154 = pneg %p74
      %p155 = pneg %p103
      %p156 = pneg %p100
      %s157 = smul.u32 16, %s14
      %p158 = scmp.lt.s32.totalorder %s157, 63
      %s159 = scalar_select %p158, %s157, 63
      %s160 = smul.addr %s159, 4
      %s161 = scalar_lea.vmem %s3, %s160
      %s162 = smul.u32 16, %s14
      %p163 = scmp.lt.s32.totalorder %s162, 63
      %s164 = scalar_select %p163, %s162, 63
      %s165 = smul.addr %s164, 8
      %s166 = scalar_lea.vmem %s0, %s165
      %s167 = smul.u32 16, %s14
      %s168 = smul.u32 16, %s14
      %p169 = scmp.lt.s32.totalorder %s168, 63
      %s170 = scalar_select %p169, %s168, 63
      %s171 = smul.addr %s170, 4
      %s172 = scalar_lea.vmem %s3, %s171
      %s173 = smul.u32 16, %s14
      %v174 = vld [vmem:[%s166] sm:$0xff]
      %v175 = vld [vmem:[%s166 + $0x8] sm:$0xff]
      %v176 = vld [vmem:[%s166 + $0x10] sm:$0xff]
      %v177 = vld [vmem:[%s166 + $0x18] sm:$0xff]
      %v178 = vld [vmem:[%s166 + $0x20] sm:$0xff]
      %v179 = vld [vmem:[%s166 + $0x28] sm:$0xff]
      %v180 = vld [vmem:[%s166 + $0x30] sm:$0xff]
      %v181 = vld [vmem:[%s166 + $0x38] sm:$0xff]
      %v182 = vld [vmem:[%s166 + $0x40] sm:$0xff]
      %v183 = vld [vmem:[%s166 + $0x48] sm:$0xff]
      %v184 = vld [vmem:[%s166 + $0x50] sm:$0xff]
      %v185 = vld [vmem:[%s166 + $0x58] sm:$0xff]
      %v186 = vld [vmem:[%s166 + $0x60] sm:$0xff]
      %v187 = vld [vmem:[%s166 + $0x68] sm:$0xff]
      %v188 = vld [vmem:[%s166 + $0x70] sm:$0xff]
      %v189 = vld [vmem:[%s166 + $0x78] sm:$0xff]
      %v190 = vld [vmem:[%s1] sm:$0x1]
      %v192 = vlaneseq
      %v193 = vshrl.u32 %v192, 7
      %v194 = vsub.s32 0, %v193
      %v195 = vrot.slane %v190, %v194
      %v197 = vmul.f32 %v174, %v195
      %v198 = vmul.f32 %v175, %v195
      %v199 = vmul.f32 %v176, %v195
      %v200 = vmul.f32 %v177, %v195
      %v201 = vmul.f32 %v178, %v195
      %v202 = vmul.f32 %v179, %v195
      %v203 = vmul.f32 %v180, %v195
      %v204 = vmul.f32 %v181, %v195
      %v205 = vmul.f32 %v182, %v195
      %v206 = vmul.f32 %v183, %v195
      %v207 = vmul.f32 %v184, %v195
      %v208 = vmul.f32 %v185, %v195
      %v209 = vmul.f32 %v186, %v195
      %v210 = vmul.f32 %v187, %v195
      %v211 = vmul.f32 %v188, %v195
      %v212 = vmul.f32 %v189, %v195
      %v213 = vld [vmem:[%s2] sm:$0x1]
      %v215 = vlaneseq
      %v216 = vshrl.u32 %v215, 7
      %v217 = vsub.s32 0, %v216
      %v218 = vrot.slane %v213, %v217
      %v220 = vadd.f32 %v197, %v218
      %v221 = vadd.f32 %v198, %v218
      %v222 = vadd.f32 %v199, %v218
      %v223 = vadd.f32 %v200, %v218
      %v224 = vadd.f32 %v201, %v218
      %v225 = vadd.f32 %v202, %v218
      %v226 = vadd.f32 %v203, %v218
      %v227 = vadd.f32 %v204, %v218
      %v228 = vadd.f32 %v205, %v218
      %v229 = vadd.f32 %v206, %v218
      %v230 = vadd.f32 %v207, %v218
      %v231 = vadd.f32 %v208, %v218
      %v232 = vadd.f32 %v209, %v218
      %v233 = vadd.f32 %v210, %v218
      %v234 = vadd.f32 %v211, %v218
      %v235 = vadd.f32 %v212, %v218
      %v236 = vmax.f32 %v220, 0.0
      %v237 = vmax.f32 %v221, 0.0
      %v238 = vmax.f32 %v222, 0.0
      %v239 = vmax.f32 %v223, 0.0
      %v240 = vmax.f32 %v224, 0.0
      %v241 = vmax.f32 %v225, 0.0
      %v242 = vmax.f32 %v226, 0.0
      %v243 = vmax.f32 %v227, 0.0
      %v244 = vmax.f32 %v228, 0.0
      %v245 = vmax.f32 %v229, 0.0
      %v246 = vmax.f32 %v230, 0.0
      %v247 = vmax.f32 %v231, 0.0
      %v248 = vmax.f32 %v232, 0.0
      %v249 = vmax.f32 %v233, 0.0
      %v250 = vmax.f32 %v234, 0.0
      %v251 = vmax.f32 %v235, 0.0
      %v252 = vpack.c.bf16 %v237, %v236
      %v253 = vpack.c.bf16 %v239, %v238
      %v254 = vpack.c.bf16 %v241, %v240
      %v255 = vpack.c.bf16 %v243, %v242
      %v256 = vpack.c.bf16 %v245, %v244
      %v257 = vpack.c.bf16 %v247, %v246
      %v258 = vpack.c.bf16 %v249, %v248
      %v259 = vpack.c.bf16 %v251, %v250
      %v268 = vunpack.c.l.b16 %v252
      %v269 = vunpack.c.h.b16 %v252
      %v270 = vunpack.c.l.b16 %v253
      %v271 = vunpack.c.h.b16 %v253
      %v272 = vunpack.c.l.b16 %v254
      %v273 = vunpack.c.h.b16 %v254
      %v274 = vunpack.c.l.b16 %v255
      %v275 = vunpack.c.h.b16 %v255
      %v276 = vunpack.c.l.b16 %v256
      %v277 = vunpack.c.h.b16 %v256
      %v278 = vunpack.c.l.b16 %v257
      %v279 = vunpack.c.h.b16 %v257
      %v280 = vunpack.c.l.b16 %v258
      %v281 = vunpack.c.h.b16 %v258
      %v282 = vunpack.c.l.b16 %v259
      %v283 = vunpack.c.h.b16 %v259
      %v284 = vpack.c.b16 %v268, %v268
      %v285 = vpack.c.b16 %v269, %v269
      %v286 = vpack.c.b16 %v270, %v270
      %v287 = vpack.c.b16 %v271, %v271
      %v288 = vpack.c.b16 %v272, %v272
      %v289 = vpack.c.b16 %v273, %v273
      %v290 = vpack.c.b16 %v274, %v274
      %v291 = vpack.c.b16 %v275, %v275
      %v292 = vpack.c.b16 %v276, %v276
      %v293 = vpack.c.b16 %v277, %v277
      %v294 = vpack.c.b16 %v278, %v278
      %v295 = vpack.c.b16 %v279, %v279
      %v296 = vpack.c.b16 %v280, %v280
      %v297 = vpack.c.b16 %v281, %v281
      %v298 = vpack.c.b16 %v282, %v282
      %v299 = vpack.c.b16 %v283, %v283
      %316 = vst [vmem:[%s172] sm:$0xf] %v284
      %317 = vst [vmem:[%s172 + $0x4] sm:$0xf] %v285
      %318 = vst [vmem:[%s172 + $0x8] sm:$0xf] %v286
      %319 = vst [vmem:[%s172 + $0xc] sm:$0xf] %v287
      %320 = vst [vmem:[%s172 + $0x10] sm:$0xf] %v288
      %321 = vst [vmem:[%s172 + $0x14] sm:$0xf] %v289
      %322 = vst [vmem:[%s172 + $0x18] sm:$0xf] %v290
      %323 = vst [vmem:[%s172 + $0x1c] sm:$0xf] %v291
      %324 = vst [vmem:[%s172 + $0x20] sm:$0xf] %v292
      %325 = vst [vmem:[%s172 + $0x24] sm:$0xf] %v293
      %326 = vst [vmem:[%s172 + $0x28] sm:$0xf] %v294
      %327 = vst [vmem:[%s172 + $0x2c] sm:$0xf] %v295
      %328 = vst [vmem:[%s172 + $0x30] sm:$0xf] %v296
      %329 = vst [vmem:[%s172 + $0x34] sm:$0xf] %v297
      %330 = vst [vmem:[%s172 + $0x38] sm:$0xf] %v298
      %331 = vst [vmem:[%s172 + $0x3c] sm:$0xf] %v299
      %s332 = smul.u32 16, %s14
      %p333 = scmp.lt.s32.totalorder %s332, 63
      %s334 = scalar_select %p333, %s332, 63
      %s335 = smul.addr %s334, 4
      %s336 = scalar_lea.vmem %s3, %s335
      // Predicated region
      $region33: #{double_2d_conv.5} parent=31 // pred_check
        %p337 = pneg %p100
      $region34: #{double_2d_conv.5} parent=31 // pred_check_branch
        %339 = sbr.rel (%p337) target = $region36
      $region35: #{double_2d_conv.5} parent=31 // pred_region
        %s340 = smul.u32 16, %s14
      $region36: #{double_2d_conv.5} parent=31 // pred_fallthru
        _
    $region32: #{double_2d_conv.5} parent=5 // pred_fallthru
      _
    %p341 = scmp.le.s32.totalorder 2, %s9
    // Predicated region
    $region37: #{double_2d_conv.5} parent=5 // pred_check
      %p342 = pneg %p341
    $region38: #{double_2d_conv.5} parent=5 // pred_check_branch
      %344 = sbr.rel (%p342) target = $region40
    $region39: #{double_2d_conv.5} parent=5 // pred_region
      %s345 = ssub.s32 %s9, 2
      // Predicated region
      $region41: #{double_2d_conv.5} parent=39 // pred_check
        %p346 = pneg %p106
      $region42: #{double_2d_conv.5} parent=39 // pred_check_branch
        %348 = sbr.rel (%p346) target = $region44
      $region43: #{double_2d_conv.5} parent=39 // pred_region
        %s349 = smul.u32 16, %s15
        %p350 = scmp.lt.s32.totalorder %s349, 63
        %s351 = scalar_select %p350, %s349, 63
        %s352 = smul.addr %s351, 4
        %s353 = scalar_lea.vmem %s3, %s352
      $region44: #{double_2d_conv.5} parent=39 // pred_fallthru
        _
    $region40: #{double_2d_conv.5} parent=5 // pred_fallthru
      _
  $region6: #{double_2d_conv.5} parent=0 // loop_footer
    %s13 = sadd.s32 1, %s9
  $region7: #{double_2d_conv.5} parent=0 // loop_footer_branch
    %8 = sbr.rel target = $region3
  $region8: #{double_2d_conv.5} parent=0 // loop_exit
    _

// kernel: double_2d_conv.4
$region0: #{double_2d_conv.4}
  #allocation0 [shape = 'u32[]', space=smem, size = 0x4, offset = 0x4, fixed_abs, tag = 'smem constant byte address 0x4 - core index']
  #allocation1 [shape = 'u32[144,128]{1,0:T(1,128)}', space=vmem, size = 0x12000, scoped, tag = 'internal scratch']
  %s0 = inlined_call_operand.vmem [shape: bf16[2,18,18,128], index: 0, kind: input, shape index: {}]
  %s1 = inlined_call_operand.vmem [shape: bf16[9,128,128], index: 1, kind: input, shape index: {}]
  %s2 = inlined_call_operand.vmem [shape: f32[4,128,128], index: 2, kind: output, shape index: {0}]
  %s3 = inlined_call_operand.vmem [shape: f32[2,2,128], index: 3, kind: output, shape index: {1}]
  %4 = xla_tuple %s2, %s3
  %s5 = sld [smem:[#allocation0]]
  $region53: #{double_2d_conv.4} parent=0
    _
  %s7 = ssub.s32 1, %s5
  %s8 = scalar_select 0, %s7, %s5
  loop: start=0, step=1, limit=6
  $region2: #{double_2d_conv.4} parent=0 // loop_pre_header
    _
  $region3: #{double_2d_conv.4} parent=0 // loop_header
    %s10 = sphi 0, %s14
    %p11 = scmp.ge.s32.totalorder %s10, 6
    %s17 = sphi 0, %s29
    %s18 = sphi 0, %s25
    %s19 = sphi 0, %s17
    %s20 = sphi 0, %s18
    %s21 = sphi 0, %s19
    %s22 = sphi 0, %s20
    %s32 = sphi 0, %s34
    %s35 = sphi 0, %s32
    %s36 = sphi 0, %s35
    %s52 = sphi 0, %s36
    %s56 = sphi 0, %s56
    %s58 = sphi 0, %s56
    %s59 = sphi 0, %s58
    %s73 = sphi 0, %s59
    %s83 = sphi 0, %s85
    %s86 = sphi 0, %s83
    %s87 = sphi 0, %s86
    %s103 = sphi 0, %s87
    %s109 = sphi 0, %s111
    %s112 = sphi 0, %s109
    %s113 = sphi 0, %s112
    %s129 = sphi 0, %s113
  $region4: #{double_2d_conv.4} parent=0 // loop_header_branch
    %13 = sbr.rel (%p11) target = $region8
  $region5: #{double_2d_conv.4} parent=0 // loop_body
    %s15 = ssub.s32 %s10, 1
    %s16 = ssub.s32 %s10, 2
    %s23 = sadd.s32 1, %s18
    %p24 = scmp.ge.s32.totalorder %s23, 2
    %s25 = scalar_select %p24, 0, %s23
    %s26 = sadd.s32 1, %s17
    %s27 = scalar_select %p24, %s26, %s17
    %p28 = scmp.ge.s32.totalorder %s27, 2
    %s29 = scalar_select %p28, 0, %s27
    %s30 = ssub.s32 %s17, %s29
    %p31 = scmp.eq.s32.totalorder %s30, 0
    %s33 = sadd.s32 %s32, 1
    %s34 = scalar_select %p31, %s32, %s33
    %p37 = pneg %p31
    %p38 = scmp.eq.s32.totalorder %s10, 3
    %p39 = por %p37, %p38
    %p40 = scmp.ne.s32.totalorder %s32, %s35
    %p41 = scmp.eq.s32.totalorder %s10, 0
    %p42 = por %p40, %p41
    %p43 = scmp.ne.s32.totalorder %s32, %s35
    %p44 = scmp.eq.s32.totalorder %s15, 3
    %p45 = por %p43, %p44
    %p46 = scmp.ne.s32.totalorder %s35, %s36
    %p47 = scmp.eq.s32.totalorder %s15, 0
    %p48 = por %p46, %p47
    %p49 = scmp.ne.s32.totalorder %s35, %s36
    %p50 = scmp.eq.s32.totalorder %s16, 3
    %p51 = por %p49, %p50
    %p53 = scmp.ne.s32.totalorder %s36, %s52
    %p54 = scmp.eq.s32.totalorder %s16, 0
    %p55 = por %p53, %p54
    %s57 = sadd.s32 %s56, 1
    %p60 = scmp.eq.s32.totalorder %s10, 3
    %p61 = scmp.ne.s32.totalorder %s56, %s58
    %p62 = scmp.eq.s32.totalorder %s10, 0
    %p63 = por %p61, %p62
    %p64 = scmp.ne.s32.totalorder %s56, %s58
    %p65 = scmp.eq.s32.totalorder %s15, 3
    %p66 = por %p64, %p65
    %p67 = scmp.ne.s32.totalorder %s58, %s59
    %p68 = scmp.eq.s32.totalorder %s15, 0
    %p69 = por %p67, %p68
    %p70 = scmp.ne.s32.totalorder %s58, %s59
    %p71 = scmp.eq.s32.totalorder %s16, 3
    %p72 = por %p70, %p71
    %p74 = scmp.ne.s32.totalorder %s59, %s73
    %p75 = scmp.eq.s32.totalorder %s16, 0
    %p76 = por %p74, %p75
    %s77 = smul.u32 %s17, 2
    %s78 = sadd.s32 %s77, %s18
    %s79 = smul.u32 %s29, 2
    %s80 = sadd.s32 %s79, %s25
    %s81 = ssub.s32 %s78, %s80
    %p82 = scmp.eq.s32.totalorder %s81, 0
    %s84 = sadd.s32 %s83, 1
    %s85 = scalar_select %p82, %s83, %s84
    %p88 = pneg %p82
    %p89 = scmp.eq.s32.totalorder %s10, 3
    %p90 = por %p88, %p89
    %p91 = scmp.ne.s32.totalorder %s83, %s86
    %p92 = scmp.eq.s32.totalorder %s10, 0
    %p93 = por %p91, %p92
    %p94 = scmp.ne.s32.totalorder %s83, %s86
    %p95 = scmp.eq.s32.totalorder %s15, 3
    %p96 = por %p94, %p95
    %p97 = scmp.ne.s32.totalorder %s86, %s87
    %p98 = scmp.eq.s32.totalorder %s15, 0
    %p99 = por %p97, %p98
    %p100 = scmp.ne.s32.totalorder %s86, %s87
    %p101 = scmp.eq.s32.totalorder %s16, 3
    %p102 = por %p100, %p101
    %p104 = scmp.ne.s32.totalorder %s87, %s103
    %p105 = scmp.eq.s32.totalorder %s16, 0
    %p106 = por %p104, %p105
    %s107 = ssub.s32 %s17, %s29
    %p108 = scmp.eq.s32.totalorder %s107, 0
    %s110 = sadd.s32 %s109, 1
    %s111 = scalar_select %p108, %s109, %s110
    %p114 = pneg %p108
    %p115 = scmp.eq.s32.totalorder %s10, 3
    %p116 = por %p114, %p115
    %p117 = scmp.ne.s32.totalorder %s109, %s112
    %p118 = scmp.eq.s32.totalorder %s10, 0
    %p119 = por %p117, %p118
    %p120 = scmp.ne.s32.totalorder %s109, %s112
    %p121 = scmp.eq.s32.totalorder %s15, 3
    %p122 = por %p120, %p121
    %p123 = scmp.ne.s32.totalorder %s112, %s113
    %p124 = scmp.eq.s32.totalorder %s15, 0
    %p125 = por %p123, %p124
    %p126 = scmp.ne.s32.totalorder %s112, %s113
    %p127 = scmp.eq.s32.totalorder %s16, 3
    %p128 = por %p126, %p127
    %p130 = scmp.ne.s32.totalorder %s113, %s129
    %p131 = scmp.eq.s32.totalorder %s16, 0
    %p132 = por %p130, %p131
    %p133 = scmp.le.s32.totalorder 1, %s10
    %p134 = scmp.lt.s32.totalorder %s10, 5
    %p135 = pnand %p133, %p134
    %p136 = pneg %p135
    // Predicated region
    $region9: #{double_2d_conv.4} parent=5 // pred_check
      _
    $region10: #{double_2d_conv.4} parent=5 // pred_check_branch
      %138 = sbr.rel (%p135) target = $region12
    $region11: #{double_2d_conv.4} parent=5 // pred_region
      %s139 = ssub.s32 %s10, 1
      // Predicated region
      $region13: #{double_2d_conv.4} parent=11 // pred_check
        %p140 = pneg %p69
      $region14: #{double_2d_conv.4} parent=11 // pred_check_branch
        %142 = sbr.rel (%p140) target = $region16
      $region15: #{double_2d_conv.4} parent=11 // pred_region
        _
      $region16: #{double_2d_conv.4} parent=11 // pred_fallthru
        _
    $region12: #{double_2d_conv.4} parent=5 // pred_fallthru
      _
    %p143 = scmp.lt.s32.totalorder %s10, 4
    // Predicated region
    $region17: #{double_2d_conv.4} parent=5 // pred_check
      %p144 = pneg %p143
    $region18: #{double_2d_conv.4} parent=5 // pred_check_branch
      %146 = sbr.rel (%p144) target = $region20
    $region19: #{double_2d_conv.4} parent=5 // pred_region
      // Predicated region
      $region21: #{double_2d_conv.4} parent=19 // pred_check
        %p147 = pneg %p42
      $region22: #{double_2d_conv.4} parent=19 // pred_check_branch
        %149 = sbr.rel (%p147) target = $region24
      $region23: #{double_2d_conv.4} parent=19 // pred_region
        %p150 = scmp.lt.s32.totalorder %s17, 1
        %s151 = scalar_select %p150, %s17, 1
        %s152 = smul.addr %s151, 54
        %s153 = smul.addr %s152, 4
        %s154 = scalar_lea.vmem %s0, %s153
      $region24: #{double_2d_conv.4} parent=19 // pred_fallthru
        _
    $region20: #{double_2d_conv.4} parent=5 // pred_fallthru
      _
    %p155 = scmp.le.s32.totalorder 1, %s10
    %p156 = scmp.lt.s32.totalorder %s10, 5
    %p157 = pnand %p155, %p156
    %p158 = pneg %p157
    // Predicated region
    $region25: #{double_2d_conv.4} parent=5 // pred_check
      _
    $region26: #{double_2d_conv.4} parent=5 // pred_check_branch
      %160 = sbr.rel (%p157) target = $region28
    $region27: #{double_2d_conv.4} parent=5 // pred_region
      %s161 = ssub.s32 %s10, 1
      %p162 = scmp.lt.s32.totalorder %s19, 1
      %s163 = scalar_select %p162, %s19, 1
      %s164 = smul.addr %s163, 54
      %s165 = smul.addr %s164, 4
      %s166 = scalar_lea.vmem %s0, %s165
      %p167 = pneg %p48
      %p168 = pneg %p45
      %p169 = pneg %p69
      %p170 = pneg %p66
      %p171 = pneg %p99
      %p172 = pneg %p96
      %s173 = smul.u32 %s19, 2
      %s174 = sadd.s32 %s173, %s20
      %p175 = scmp.lt.s32.totalorder %s174, 3
      %s176 = scalar_select %p175, %s174, 3
      %s177 = smul.addr %s176, 16
      %s178 = smul.addr %s177, 8
      %s179 = scalar_lea.vmem %s2, %s178
      %p180 = pneg %p125
      %p181 = pneg %p122
      %p182 = scmp.lt.s32.totalorder %s19, 1
      %s183 = scalar_select %p182, %s19, 1
      %s184 = smul.addr %s183, 2
      %s185 = scalar_lea.vmem %s3, %s184
      %p186 = scmp.lt.s32.totalorder %s19, 1
      %s187 = scalar_select %p186, %s19, 1
      %s188 = smul.addr %s187, 54
      %s189 = smul.addr %s188, 4
      %s190 = scalar_lea.vmem %s0, %s189
      %s191 = smul.u32 %s19, 2
      %s192 = sadd.s32 %s191, %s20
      %p193 = scmp.lt.s32.totalorder %s192, 3
      %s194 = scalar_select %p193, %s192, 3
      %s195 = smul.addr %s194, 16
      %s196 = smul.addr %s195, 8
      %s197 = scalar_lea.vmem %s2, %s196
      %s198 = smul.u32 %s19, 2
      %s199 = sadd.s32 %s198, %s20
      %p200 = scmp.lt.s32.totalorder %s19, 1
      %s201 = scalar_select %p200, %s19, 1
      %s202 = smul.addr %s201, 2
      %s203 = scalar_lea.vmem %s3, %s202
      %p205 = scmp.eq.s32.totalorder %s20, 0
      // Predicated region
      $region29: #{double_2d_conv.4} parent=27 // pred_check
        %p206 = pneg %p205
      $region30: #{double_2d_conv.4} parent=27 // pred_check_branch
        %208 = sbr.rel (%p206) target = $region32
      $region31: #{double_2d_conv.4} parent=27 // pred_region
        %209 = vst [vmem:[%s203] sm:$0x3] 0.0
      $region32: #{double_2d_conv.4} parent=27 // pred_fallthru
        _
      %s210 = smul.u32 %s20, 8
      %s211 = smul.u32 %s210, 3
      %s212 = smul.addr %s211, 4
      %s213 = scalar_lea.vmem %s190, %s212
      %v214 = vld [vmem:[%s213] sm:$0xf]
      %v215 = vld [vmem:[%s213 + $0x4] sm:$0xf]
      %v216 = vld [vmem:[%s213 + $0x8] sm:$0x1]
      %v217 = vld [vmem:[%s213 + $0xc] sm:$0xf]
      %v218 = vld [vmem:[%s213 + $0x10] sm:$0xf]
      %v219 = vld [vmem:[%s213 + $0x14] sm:$0x1]
      %v220 = vld [vmem:[%s213 + $0x18] sm:$0xf]
      %v221 = vld [vmem:[%s213 + $0x1c] sm:$0xf]
      %v222 = vld [vmem:[%s213 + $0x20] sm:$0x1]
      %v223 = vld [vmem:[%s213 + $0x24] sm:$0xf]
      %v224 = vld [vmem:[%s213 + $0x28] sm:$0xf]
      %v225 = vld [vmem:[%s213 + $0x2c] sm:$0x1]
      %v226 = vld [vmem:[%s213 + $0x30] sm:$0xf]
      %v227 = vld [vmem:[%s213 + $0x34] sm:$0xf]
      %v228 = vld [vmem:[%s213 + $0x38] sm:$0x1]
      %v229 = vld [vmem:[%s213 + $0x3c] sm:$0xf]
      %v230 = vld [vmem:[%s213 + $0x40] sm:$0xf]
      %v231 = vld [vmem:[%s213 + $0x44] sm:$0x1]
      %v232 = vld [vmem:[%s213 + $0x48] sm:$0xf]
      %v233 = vld [vmem:[%s213 + $0x4c] sm:$0xf]
      %v234 = vld [vmem:[%s213 + $0x50] sm:$0x1]
      %v235 = vld [vmem:[%s213 + $0x54] sm:$0xf]
      %v236 = vld [vmem:[%s213 + $0x58] sm:$0xf]
      %v237 = vld [vmem:[%s213 + $0x5c] sm:$0x1]
      %v238 = vld [vmem:[%s1] sm:$0xf]
      %v239 = vld [vmem:[%s1 + $0x4] sm:$0xf]
      %v240 = vld [vmem:[%s1 + $0x8] sm:$0xf]
      %v241 = vld [vmem:[%s1 + $0xc] sm:$0xf]
      %v242 = vld [vmem:[%s1 + $0x10] sm:$0xf]
      %v243 = vld [vmem:[%s1 + $0x14] sm:$0xf]
      %v244 = vld [vmem:[%s1 + $0x18] sm:$0xf]
      %v245 = vld [vmem:[%s1 + $0x1c] sm:$0xf]
      %v246 = vld [vmem:[%s1 + $0x20] sm:$0xf]
      %v247 = vld [vmem:[%s1 + $0x24] sm:$0xf]
      %v248 = vld [vmem:[%s1 + $0x28] sm:$0xf]
      %v249 = vld [vmem:[%s1 + $0x2c] sm:$0xf]
      %v250 = vld [vmem:[%s1 + $0x30] sm:$0xf]
      %v251 = vld [vmem:[%s1 + $0x34] sm:$0xf]
      %v252 = vld [vmem:[%s1 + $0x38] sm:$0xf]
      %v253 = vld [vmem:[%s1 + $0x3c] sm:$0xf]
      %vm254 = vsmask.f32 3328
      %vm255 = vsmask.f32 7440
      %vm256 = vmor %vm254, %vm255
      %v258 = vshrl.u32 %v214, 16
      %v260 = vrot.slane %v258, 4
      %v261 = vshll.u32 %v214, 16
      %v263 = vrot.slane %v261, 5
      %v264 = vor.u32 %v260, %v263
      %v265 = vrot.slane %v264, 4
      %v267 = vshll.u32 %v215, 16
      %v269 = vrot.slane %v267, 5
      %v270 = vsel %vm256, %v265, %v269
      %v271 = vshrl.u32 %v215, 16
      %v273 = vrot.slane %v271, 4
      %v274 = vor.u32 %v273, %v269
      %v275 = vrot.slane %v274, 4
      %v277 = vshll.u32 %v216, 16
      %v279 = vrot.slane %v277, 5
      %v280 = vsel %vm256, %v275, %v279
      %v282 = vshrl.u32 %v217, 16
      %v284 = vrot.slane %v282, 4
      %v285 = vshll.u32 %v217, 16
      %v287 = vrot.slane %v285, 5
      %v288 = vor.u32 %v284, %v287
      %v289 = vrot.slane %v288, 4
      %v291 = vshll.u32 %v218, 16
      %v293 = vrot.slane %v291, 5
      %v294 = vsel %vm256, %v289, %v293
      %v295 = vshrl.u32 %v218, 16
      %v297 = vrot.slane %v295, 4
      %v298 = vor.u32 %v297, %v293
      %v299 = vrot.slane %v298, 4
      %v301 = vshll.u32 %v219, 16
      %v303 = vrot.slane %v301, 5
      %v304 = vsel %vm256, %v299, %v303
      %v306 = vshrl.u32 %v220, 16
      %v308 = vrot.slane %v306, 4
      %v309 = vshll.u32 %v220, 16
      %v311 = vrot.slane %v309, 5
      %v312 = vor.u32 %v308, %v311
      %v313 = vrot.slane %v312, 4
      %v315 = vshll.u32 %v221, 16
      %v317 = vrot.slane %v315, 5
      %v318 = vsel %vm256, %v313, %v317
      %v319 = vshrl.u32 %v221, 16
      %v321 = vrot.slane %v319, 4
      %v322 = vor.u32 %v321, %v317
      %v323 = vrot.slane %v322, 4
      %v325 = vshll.u32 %v222, 16
      %v327 = vrot.slane %v325, 5
      %v328 = vsel %vm256, %v323, %v327
      %v330 = vshrl.u32 %v223, 16
      %v332 = vrot.slane %v330, 4
      %v333 = vshll.u32 %v223, 16
      %v335 = vrot.slane %v333, 5
      %v336 = vor.u32 %v332, %v335
      %v337 = vrot.slane %v336, 4
      %v339 = vshll.u32 %v224, 16
      %v341 = vrot.slane %v339, 5
      %v342 = vsel %vm256, %v337, %v341
      %v343 = vshrl.u32 %v224, 16
      %v345 = vrot.slane %v343, 4
      %v346 = vor.u32 %v345, %v341
      %v347 = vrot.slane %v346, 4
      %v349 = vshll.u32 %v225, 16
      %v351 = vrot.slane %v349, 5
      %v352 = vsel %vm256, %v347, %v351
      %v354 = vshrl.u32 %v226, 16
      %v356 = vrot.slane %v354, 4
      %v357 = vshll.u32 %v226, 16
      %v359 = vrot.slane %v357, 5
      %v360 = vor.u32 %v356, %v359
      %v361 = vrot.slane %v360, 4
      %v363 = vshll.u32 %v227, 16
      %v365 = vrot.slane %v363, 5
      %v366 = vsel %vm256, %v361, %v365
      %v367 = vshrl.u32 %v227, 16
      %v369 = vrot.slane %v367, 4
      %v370 = vor.u32 %v369, %v365
      %v371 = vrot.slane %v370, 4
      %v373 = vshll.u32 %v228, 16
      %v375 = vrot.slane %v373, 5
      %v376 = vsel %vm256, %v371, %v375
      %v378 = vshrl.u32 %v229, 16
      %v380 = vrot.slane %v378, 4
      %v381 = vshll.u32 %v229, 16
      %v383 = vrot.slane %v381, 5
      %v384 = vor.u32 %v380, %v383
      %v385 = vrot.slane %v384, 4
      %v387 = vshll.u32 %v230, 16
      %v389 = vrot.slane %v387, 5
      %v390 = vsel %vm256, %v385, %v389
      %v391 = vshrl.u32 %v230, 16
      %v393 = vrot.slane %v391, 4
      %v394 = vor.u32 %v393, %v389
      %v395 = vrot.slane %v394, 4
      %v397 = vshll.u32 %v231, 16
      %v399 = vrot.slane %v397, 5
      %v400 = vsel %vm256, %v395, %v399
      %v402 = vshrl.u32 %v232, 16
      %v404 = vrot.slane %v402, 4
      %v405 = vshll.u32 %v232, 16
      %v407 = vrot.slane %v405, 5
      %v408 = vor.u32 %v404, %v407
      %v409 = vrot.slane %v408, 4
      %v411 = vshll.u32 %v233, 16
      %v413 = vrot.slane %v411, 5
      %v414 = vsel %vm256, %v409, %v413
      %v415 = vshrl.u32 %v233, 16
      %v417 = vrot.slane %v415, 4
      %v418 = vor.u32 %v417, %v413
      %v419 = vrot.slane %v418, 4
      %v421 = vshll.u32 %v234, 16
      %v423 = vrot.slane %v421, 5
      %v424 = vsel %vm256, %v419, %v423
      %v426 = vshrl.u32 %v235, 16
      %v428 = vrot.slane %v426, 4
      %v429 = vshll.u32 %v235, 16
      %v431 = vrot.slane %v429, 5
      %v432 = vor.u32 %v428, %v431
      %v433 = vrot.slane %v432, 4
      %v435 = vshll.u32 %v236, 16
      %v437 = vrot.slane %v435, 5
      %v438 = vsel %vm256, %v433, %v437
      %v439 = vshrl.u32 %v236, 16
      %v441 = vrot.slane %v439, 4
      %v442 = vor.u32 %v441, %v437
      %v443 = vrot.slane %v442, 4
      %v445 = vshll.u32 %v237, 16
      %v447 = vrot.slane %v445, 5
      %v448 = vsel %vm256, %v443, %v447
      %s449 = scalar_lea.vmem %s1, 64
      %v450 = vld [vmem:[%s449] sm:$0xf]
      %v451 = vld [vmem:[%s449 + $0x4] sm:$0xf]
      %v452 = vld [vmem:[%s449 + $0x8] sm:$0xf]
      %v453 = vld [vmem:[%s449 + $0xc] sm:$0xf]
      %v454 = vld [vmem:[%s449 + $0x10] sm:$0xf]
      %v455 = vld [vmem:[%s449 + $0x14] sm:$0xf]
      %v456 = vld [vmem:[%s449 + $0x18] sm:$0xf]
      %v457 = vld [vmem:[%s449 + $0x1c] sm:$0xf]
      %v458 = vld [vmem:[%s449 + $0x20] sm:$0xf]
      %v459 = vld [vmem:[%s449 + $0x24] sm:$0xf]
      %v460 = vld [vmem:[%s449 + $0x28] sm:$0xf]
      %v461 = vld [vmem:[%s449 + $0x2c] sm:$0xf]
      %v462 = vld [vmem:[%s449 + $0x30] sm:$0xf]
      %v463 = vld [vmem:[%s449 + $0x34] sm:$0xf]
      %v464 = vld [vmem:[%s449 + $0x38] sm:$0xf]
      %v465 = vld [vmem:[%s449 + $0x3c] sm:$0xf]
      %v466 = vunpack.c.l.b16 %v270
      %v467 = vunpack.c.l.b16 %v280
      %v468 = vunpack.c.l.b16 %v294
      %v469 = vunpack.c.l.b16 %v304
      %v470 = vunpack.c.l.b16 %v318
      %v471 = vunpack.c.l.b16 %v328
      %v472 = vunpack.c.l.b16 %v342
      %v473 = vunpack.c.l.b16 %v352
      %v474 = vunpack.c.l.b16 %v366
      %v475 = vunpack.c.l.b16 %v376
      %v476 = vunpack.c.l.b16 %v390
      %v477 = vunpack.c.l.b16 %v400
      %v478 = vunpack.c.l.b16 %v414
      %v479 = vunpack.c.l.b16 %v424
      %v480 = vunpack.c.l.b16 %v438
      %v481 = vunpack.c.l.b16 %v448
      %v482 = vpack.c.b16 %v467, %v466
      %v483 = vpack.c.b16 %v469, %v468
      %v484 = vpack.c.b16 %v471, %v470
      %v485 = vpack.c.b16 %v473, %v472
      %v486 = vpack.c.b16 %v475, %v474
      %v487 = vpack.c.b16 %v477, %v476
      %v488 = vpack.c.b16 %v479, %v478
      %v489 = vpack.c.b16 %v481, %v480
      %v514 = vunpack.c.l.b16 %v450
      %v515 = vunpack.c.l.b16 %v451
      %v516 = vunpack.c.l.b16 %v452
      %v517 = vunpack.c.l.b16 %v453
      %v518 = vunpack.c.l.b16 %v454
      %v519 = vunpack.c.l.b16 %v455
      %v520 = vunpack.c.l.b16 %v456
      %v521 = vunpack.c.l.b16 %v457
      %v522 = vunpack.c.l.b16 %v458
      %v523 = vunpack.c.l.b16 %v459
      %v524 = vunpack.c.l.b16 %v460
      %v525 = vunpack.c.l.b16 %v461
      %v526 = vunpack.c.l.b16 %v462
      %v527 = vunpack.c.l.b16 %v463
      %v528 = vunpack.c.l.b16 %v464
      %v529 = vunpack.c.l.b16 %v465
      %v530 = vpack.c.b16 %v515, %v514
      %v531 = vpack.c.b16 %v517, %v516
      %v532 = vpack.c.b16 %v519, %v518
      %v533 = vpack.c.b16 %v521, %v520
      %v534 = vpack.c.b16 %v523, %v522
      %v535 = vpack.c.b16 %v525, %v524
      %v536 = vpack.c.b16 %v527, %v526
      %v537 = vpack.c.b16 %v529, %v528
      %546 = vmatprep.subr.bf16.mxu0 0
      %547 = vmatpush1.bf16.msra.mxu0 %v530
      %548 = vmatprep.subr.bf16.mxu0 0
      %549 = vmatpush1.bf16.msra.mxu0 %v531
      %550 = vmatprep.subr.bf16.mxu0 0
      %551 = vmatpush1.bf16.msra.mxu0 %v532
      %552 = vmatprep.subr.bf16.mxu0 0
      %553 = vmatpush1.bf16.msra.mxu0 %v533
      %554 = vmatprep.subr.bf16.mxu0 0
      %555 = vmatpush1.bf16.msra.mxu0 %v534
      %556 = vmatprep.subr.bf16.mxu0 0
      %557 = vmatpush1.bf16.msra.mxu0 %v535
      %558 = vmatprep.subr.bf16.mxu0 0
      %559 = vmatpush1.bf16.msra.mxu0 %v536
      %560 = vmatprep.subr.bf16.mxu0 0
      %561 = vmatpush1.bf16.msra.mxu0 %v537
      %562 = vmatprep.subr.bf16.mxu0 0
      %563 = vmatpush1.bf16.msra.mxu0 0
      %564 = vmatprep.subr.bf16.mxu0 0
      %565 = vmatpush1.bf16.msra.mxu0 0
      %566 = vmatprep.subr.bf16.mxu0 0
      %567 = vmatpush1.bf16.msra.mxu0 0
      %568 = vmatprep.subr.bf16.mxu0 0
      %569 = vmatpush1.bf16.msra.mxu0 0
      %570 = vmatprep.subr.bf16.mxu0 0
      %571 = vmatpush1.bf16.msra.mxu0 0
      %572 = vmatprep.subr.bf16.mxu0 0
      %573 = vmatpush1.bf16.msra.mxu0 0
      %574 = vmatprep.subr.bf16.mxu0 0
      %575 = vmatpush1.bf16.msra.mxu0 0
      %576 = vmatprep.subr.bf16.mxu0 0
      %577 = vmatpush1.bf16.msra.mxu0 0
      %578 = vmatprep.mubr.bf16.mxu0 0
      %579 = vmatmul.mubr.bf16.gmra.mrb[0].mxu0 %v482
      %v580 = vpop.f32.mrb[0].mxu0
      %v581 = vadd.f32 0.0, %v580
      %v582 = vpop.f32.mrb[0].mxu0
      %v583 = vpop.f32.mrb[0].mxu0
      %v584 = vadd.f32 0.0, %v583
      %v585 = vpop.f32.mrb[0].mxu0
      %586 = vmatprep.mubr.bf16.mxu0 0
      %587 = vmatmul.mubr.bf16.gmra.mrb[0].mxu0 %v483
      %v588 = vpop.f32.mrb[0].mxu0
      %v589 = vadd.f32 0.0, %v588
      %v590 = vpop.f32.mrb[0].mxu0
      %v591 = vpop.f32.mrb[0].mxu0
      %v592 = vadd.f32 0.0, %v591
      %v593 = vpop.f32.mrb[0].mxu0
      %594 = vmatprep.mubr.bf16.mxu0 0
      %595 = vmatmul.mubr.bf16.gmra.mrb[0].mxu0 %v484
      %v596 = vpop.f32.mrb[0].mxu0
      %v597 = vadd.f32 0.0, %v596
      %v598 = vpop.f32.mrb[0].mxu0
      %v599 = vpop.f32.mrb[0].mxu0
      %v600 = vadd.f32 0.0, %v599
      %v601 = vpop.f32.mrb[0].mxu0
      %602 = vmatprep.mubr.bf16.mxu0 0
      %603 = vmatmul.mubr.bf16.gmra.mrb[0].mxu0 %v485
      %v604 = vpop.f32.mrb[0].mxu0
      %v605 = vadd.f32 0.0, %v604
      %v606 = vpop.f32.mrb[0].mxu0
      %v607 = vpop.f32.mrb[0].mxu0
      %v608 = vadd.f32 0.0, %v607
      %v609 = vpop.f32.mrb[0].mxu0
      %610 = vmatprep.mubr.bf16.mxu0 0
      %611 = vmatmul.mubr.bf16.gmra.mrb[0].mxu0 %v486
      %v612 = vpop.f32.mrb[0].mxu0
      %v613 = vadd.f32 0.0, %v612
      %v614 = vpop.f32.mrb[0].mxu0
      %v615 = vpop.f32.mrb[0].mxu0
      %v616 = vadd.f32 0.0, %v615
      %v617 = vpop.f32.mrb[0].mxu0
      %618 = vmatprep.mubr.bf16.mxu0 0
      %619 = vmatmul.mubr.bf16.gmra.mrb[0].mxu0 %v487
      %v620 = vpop.f32.mrb[0].mxu0
      %v621 = vadd.f32 0.0, %v620
      %v622 = vpop.f32.mrb[0].mxu0
      %v623 = vpop.f32.mrb[0].mxu0
      %v624 = vadd.f32 0.0, %v623
      %v625 = vpop.f32.mrb[0].mxu0
      %626 = vmatprep.mubr.bf16.mxu0 0
      %627 = vmatmul.mubr.bf16.gmra.mrb[0].mxu0 %v488
      %v628 = vpop.f32.mrb[0].mxu0
      %v629 = vadd.f32 0.0, %v628
      %v630 = vpop.f32.mrb[0].mxu0
      %v631 = vpop.f32.mrb[0].mxu0
      %v632 = vadd.f32 0.0, %v631
      %v633 = vpop.f32.mrb[0].mxu0
      %634 = vmatprep.mubr.bf16.mxu0 0
      %635 = vmatmul.mubr.bf16.gmra.mrb[0].mxu0 %v489
      %v636 = vpop.f32.mrb[0].mxu0
      %v637 = vadd.f32 0.0, %v636
      %v638 = vpop.f32.mrb[0].mxu0
      %v639 = vpop.f32.mrb[0].mxu0
      %v640 = vadd.f32 0.0, %v639
      %v641 = vpop.f32.mrb[0].mxu0
      %642 = vdwg.mxu0
      %v659 = vunpack.c.l.b16 %v214
      %v660 = vunpack.c.l.b16 %v215
      %v661 = vunpack.c.l.b16 %v217
      %v662 = vunpack.c.l.b16 %v218
      %v663 = vunpack.c.l.b16 %v220
      %v664 = vunpack.c.l.b16 %v221
      %v665 = vunpack.c.l.b16 %v223
      %v666 = vunpack.c.l.b16 %v224
      %v667 = vunpack.c.l.b16 %v226
      %v668 = vunpack.c.l.b16 %v227
      %v669 = vunpack.c.l.b16 %v229
      %v670 = vunpack.c.l.b16 %v230
      %v671 = vunpack.c.l.b16 %v232
      %v672 = vunpack.c.l.b16 %v233
      %v673 = vunpack.c.l.b16 %v235
      %v674 = vunpack.c.l.b16 %v236
      %v675 = vpack.c.b16 %v660, %v659
      %v676 = vpack.c.b16 %v662, %v661
      %v677 = vpack.c.b16 %v664, %v663
      %v678 = vpack.c.b16 %v666, %v665
      %v679 = vpack.c.b16 %v668, %v667
      %v680 = vpack.c.b16 %v670, %v669
      %v681 = vpack.c.b16 %v672, %v671
      %v682 = vpack.c.b16 %v674, %v673
      %v707 = vunpack.c.l.b16 %v238
      %v708 = vunpack.c.l.b16 %v239
      %v709 = vunpack.c.l.b16 %v240
      %v710 = vunpack.c.l.b16 %v241
      %v711 = vunpack.c.l.b16 %v242
      %v712 = vunpack.c.l.b16 %v243
      %v713 = vunpack.c.l.b16 %v244
      %v714 = vunpack.c.l.b16 %v245
      %v715 = vunpack.c.l.b16 %v246
      %v716 = vunpack.c.l.b16 %v247
      %v717 = vunpack.c.l.b16 %v248
      %v718 = vunpack.c.l.b16 %v249
      %v719 = vunpack.c.l.b16 %v250
      %v720 = vunpack.c.l.b16 %v251
      %v721 = vunpack.c.l.b16 %v252
      %v722 = vunpack.c.l.b16 %v253
      %v723 = vpack.c.b16 %v708, %v707
      %v724 = vpack.c.b16 %v710, %v709
      %v725 = vpack.c.b16 %v712, %v711
      %v726 = vpack.c.b16 %v714, %v713
      %v727 = vpack.c.b16 %v716, %v715
      %v728 = vpack.c.b16 %v718, %v717
      %v729 = vpack.c.b16 %v720, %v719
      %v730 = vpack.c.b16 %v722, %v721
      %739 = vmatprep.subr.bf16.mxu0 0
      %740 = vmatpush1.bf16.msra.mxu0 %v723
      %741 = vmatprep.subr.bf16.mxu0 0
      %742 = vmatpush1.bf16.msra.mxu0 %v724
      %743 = vmatprep.subr.bf16.mxu0 0
      %744 = vmatpush1.bf16.msra.mxu0 %v725
      %745 = vmatprep.subr.bf16.mxu0 0
      %746 = vmatpush1.bf16.msra.mxu0 %v726
      %747 = vmatprep.subr.bf16.mxu0 0
      %748 = vmatpush1.bf16.msra.mxu0 %v727
      %749 = vmatprep.subr.bf16.mxu0 0
      %750 = vmatpush1.bf16.msra.mxu0 %v728
      %751 = vmatprep.subr.bf16.mxu0 0
      %752 = vmatpush1.bf16.msra.mxu0 %v729
      %753 = vmatprep.subr.bf16.mxu0 0
      %754 = vmatpush1.bf16.msra.mxu0 %v730
      %755 = vmatprep.subr.bf16.mxu0 0
      %756 = vmatpush1.bf16.msra.mxu0 0
      %757 = vmatprep.subr.bf16.mxu0 0
      %758 = vmatpush1.bf16.msra.mxu0 0
      %759 = vmatprep.subr.bf16.mxu0 0
      %760 = vmatpush1.bf16.msra.mxu0 0
      %761 = vmatprep.subr.bf16.mxu0 0
      %762 = vmatpush1.bf16.msra.mxu0 0
      %763 = vmatprep.subr.bf16.mxu0 0
      %764 = vmatpush1.bf16.msra.mxu0 0
      %765 = vmatprep.subr.bf16.mxu0 0
      %766 = vmatpush1.bf16.msra.mxu0 0
      %767 = vmatprep.subr.bf16.mxu0 0
      %768 = vmatpush1.bf16.msra.mxu0 0
      %769 = vmatprep.subr.bf16.mxu0 0
      %770 = vmatpush1.bf16.msra.mxu0 0
      %771 = vmatprep.mubr.bf16.mxu0 0
      %772 = vmatmul.mubr.bf16.gmra.mrb[0].mxu0 %v675
      %v773 = vpop.f32.mrb[0].mxu0
      %v774 = vadd.f32 %v581, %v773
      %v775 = vpop.f32.mrb[0].mxu0
      %v776 = vpop.f32.mrb[0].mxu0
      %v777 = vadd.f32 %v584, %v776
      %v778 = vpop.f32.mrb[0].mxu0
      %779 = vmatprep.mubr.bf16.mxu0 0
      %780 = vmatmul.mubr.bf16.gmra.mrb[0].mxu0 %v676
      %v781 = vpop.f32.mrb[0].mxu0
      %v782 = vadd.f32 %v589, %v781
      %v783 = vpop.f32.mrb[0].mxu0
      %v784 = vpop.f32.mrb[0].mxu0
      %v785 = vadd.f32 %v592, %v784
      %v786 = vpop.f32.mrb[0].mxu0
      %787 = vmatprep.mubr.bf16.mxu0 0
      %788 = vmatmul.mubr.bf16.gmra.mrb[0].mxu0 %v677
      %v789 = vpop.f32.mrb[0].mxu0
      %v790 = vadd.f32 %v597, %v789
      %v791 = vpop.f32.mrb[0].mxu0
      %v792 = vpop.f32.mrb[0].mxu0
      %v793 = vadd.f32 %v600, %v792
      %v794 = vpop.f32.mrb[0].mxu0
      %795 = vmatprep.mubr.bf16.mxu0 0
      %796 = vmatmul.mubr.bf16.gmra.mrb[0].mxu0 %v678
      %v797 = vpop.f32.mrb[0].mxu0
      %v798 = vadd.f32 %v605, %v797
      %v799 = vpop.f32.mrb[0].mxu0
      %v800 = vpop.f32.mrb[0].mxu0
      %v801 = vadd.f32 %v608, %v800
      %v802 = vpop.f32.mrb[0].mxu0
      %803 = vmatprep.mubr.bf16.mxu0 0
      %804 = vmatmul.mubr.bf16.gmra.mrb[0].mxu0 %v679
      %v805 = vpop.f32.mrb[0].mxu0
      %v806 = vadd.f32 %v613, %v805
      %v807 = vpop.f32.mrb[0].mxu0
      %v808 = vpop.f32.mrb[0].mxu0
      %v809 = vadd.f32 %v616, %v808
      %v810 = vpop.f32.mrb[0].mxu0
      %811 = vmatprep.mubr.bf16.mxu0 0
      %812 = vmatmul.mubr.bf16.gmra.mrb[0].mxu0 %v680
      %v813 = vpop.f32.mrb[0].mxu0
      %v814 = vadd.f32 %v621, %v813
      %v815 = vpop.f32.mrb[0].mxu0
      %v816 = vpop.f32.mrb[0].mxu0
      %v817 = vadd.f32 %v624, %v816
      %v818 = vpop.f32.mrb[0].mxu0
      %819 = vmatprep.mubr.bf16.mxu0 0
      %820 = vmatmul.mubr.bf16.gmra.mrb[0].mxu0 %v681
      %v821 = vpop.f32.mrb[0].mxu0
      %v822 = vadd.f32 %v629, %v821
      %v823 = vpop.f32.mrb[0].mxu0
      %v824 = vpop.f32.mrb[0].mxu0
      %v825 = vadd.f32 %v632, %v824
      %v826 = vpop.f32.mrb[0].mxu0
      %827 = vmatprep.mubr.bf16.mxu0 0
      %828 = vmatmul.mubr.bf16.gmra.mrb[0].mxu0 %v682
      %v829 = vpop.f32.mrb[0].mxu0
      %v830 = vadd.f32 %v637, %v829
      %v831 = vpop.f32.mrb[0].mxu0
      %v832 = vpop.f32.mrb[0].mxu0
      %v833 = vadd.f32 %v640, %v832
      %v834 = vpop.f32.mrb[0].mxu0
      %835 = vdwg.mxu0
      %vm844 = vcmask 1042432
      %vm845 = vcmask 1046532
      %vm846 = vmor %vm844, %vm845
      %v847 = vrot.slane %v214, 5
      %v848 = vrot.slane %v847, 4
      %v849 = vrot.slane %v215, 5
      %v850 = vsel %vm846, %v848, %v849
      %v851 = vrot.slane %v849, 4
      %v852 = vrot.slane %v216, 5
      %v853 = vsel %vm846, %v851, %v852
      %v854 = vrot.slane %v217, 5
      %v855 = vrot.slane %v854, 4
      %v856 = vrot.slane %v218, 5
      %v857 = vsel %vm846, %v855, %v856
      %v858 = vrot.slane %v856, 4
      %v859 = vrot.slane %v219, 5
      %v860 = vsel %vm846, %v858, %v859
      %v861 = vrot.slane %v220, 5
      %v862 = vrot.slane %v861, 4
      %v863 = vrot.slane %v221, 5
      %v864 = vsel %vm846, %v862, %v863
      %v865 = vrot.slane %v863, 4
      %v866 = vrot.slane %v222, 5
      %v867 = vsel %vm846, %v865, %v866
      %v868 = vrot.slane %v223, 5
      %v869 = vrot.slane %v868, 4
      %v870 = vrot.slane %v224, 5
      %v871 = vsel %vm846, %v869, %v870
      %v872 = vrot.slane %v870, 4
      %v873 = vrot.slane %v225, 5
      %v874 = vsel %vm846, %v872, %v873
      %v875 = vrot.slane %v226, 5
      %v876 = vrot.slane %v875, 4
      %v877 = vrot.slane %v227, 5
      %v878 = vsel %vm846, %v876, %v877
      %v879 = vrot.slane %v877, 4
      %v880 = vrot.slane %v228, 5
      %v881 = vsel %vm846, %v879, %v880
      %v882 = vrot.slane %v229, 5
      %v883 = vrot.slane %v882, 4
      %v884 = vrot.slane %v230, 5
      %v885 = vsel %vm846, %v883, %v884
      %v886 = vrot.slane %v884, 4
      %v887 = vrot.slane %v231, 5
      %v888 = vsel %vm846, %v886, %v887
      %v889 = vrot.slane %v232, 5
      %v890 = vrot.slane %v889, 4
      %v891 = vrot.slane %v233, 5
      %v892 = vsel %vm846, %v890, %v891
      %v893 = vrot.slane %v891, 4
      %v894 = vrot.slane %v234, 5
      %v895 = vsel %vm846, %v893, %v894
      %v896 = vrot.slane %v235, 5
      %v897 = vrot.slane %v896, 4
      %v898 = vrot.slane %v236, 5
      %v899 = vsel %vm846, %v897, %v898
      %v900 = vrot.slane %v898, 4
      %v901 = vrot.slane %v237, 5
      %v902 = vsel %vm846, %v900, %v901
      %s903 = scalar_lea.vmem %s1, 128
      %v904 = vld [vmem:[%s903] sm:$0xf]
      %v905 = vld [vmem:[%s903 + $0x4] sm:$0xf]
      %v906 = vld [vmem:[%s903 + $0x8] sm:$0xf]
      %v907 = vld [vmem:[%s903 + $0xc] sm:$0xf]
      %v908 = vld [vmem:[%s903 + $0x10] sm:$0xf]
      %v909 = vld [vmem:[%s903 + $0x14] sm:$0xf]
      %v910 = vld [vmem:[%s903 + $0x18] sm:$0xf]
      %v911 = vld [vmem:[%s903 + $0x1c] sm:$0xf]
      %v912 = vld [vmem:[%s903 + $0x20] sm:$0xf]
      %v913 = vld [vmem:[%s903 + $0x24] sm:$0xf]
      %v914 = vld [vmem:[%s903 + $0x28] sm:$0xf]
      %v915 = vld [vmem:[%s903 + $0x2c] sm:$0xf]
      %v916 = vld [vmem:[%s903 + $0x30] sm:$0xf]
      %v917 = vld [vmem:[%s903 + $0x34] sm:$0xf]
      %v918 = vld [vmem:[%s903 + $0x38] sm:$0xf]
      %v919 = vld [vmem:[%s903 + $0x3c] sm:$0xf]
      %v920 = vunpack.c.l.b16 %v850
      %v921 = vunpack.c.l.b16 %v853
      %v922 = vunpack.c.l.b16 %v857
      %v923 = vunpack.c.l.b16 %v860
      %v924 = vunpack.c.l.b16 %v864
      %v925 = vunpack.c.l.b16 %v867
      %v926 = vunpack.c.l.b16 %v871
      %v927 = vunpack.c.l.b16 %v874
      %v928 = vunpack.c.l.b16 %v878
      %v929 = vunpack.c.l.b16 %v881
      %v930 = vunpack.c.l.b16 %v885
      %v931 = vunpack.c.l.b16 %v888
      %v932 = vunpack.c.l.b16 %v892
      %v933 = vunpack.c.l.b16 %v895
      %v934 = vunpack.c.l.b16 %v899
      %v935 = vunpack.c.l.b16 %v902
      %v936 = vpack.c.b16 %v921, %v920
      %v937 = vpack.c.b16 %v923, %v922
      %v938 = vpack.c.b16 %v925, %v924
      %v939 = vpack.c.b16 %v927, %v926
      %v940 = vpack.c.b16 %v929, %v928
      %v941 = vpack.c.b16 %v931, %v930
      %v942 = vpack.c.b16 %v933, %v932
      %v943 = vpack.c.b16 %v935, %v934
      %v968 = vunpack.c.l.b16 %v904
      %v969 = vunpack.c.l.b16 %v905
      %v970 = vunpack.c.l.b16 %v906
      %v971 = vunpack.c.l.b16 %v907
      %v972 = vunpack.c.l.b16 %v908
      %v973 = vunpack.c.l.b16 %v909
      %v974 = vunpack.c.l.b16 %v910
      %v975 = vunpack.c.l.b16 %v911
      %v976 = vunpack.c.l.b16 %v912
      %v977 = vunpack.c.l.b16 %v913
      %v978 = vunpack.c.l.b16 %v914
      %v979 = vunpack.c.l.b16 %v915
      %v980 = vunpack.c.l.b16 %v916
      %v981 = vunpack.c.l.b16 %v917
      %v982 = vunpack.c.l.b16 %v918
      %v983 = vunpack.c.l.b16 %v919
      %v984 = vpack.c.b16 %v969, %v968
      %v985 = vpack.c.b16 %v971, %v970
      %v986 = vpack.c.b16 %v973, %v972
      %v987 = vpack.c.b16 %v975, %v974
      %v988 = vpack.c.b16 %v977, %v976
      %v989 = vpack.c.b16 %v979, %v978
      %v990 = vpack.c.b16 %v981, %v980
      %v991 = vpack.c.b16 %v983, %v982
      %1000 = vmatprep.subr.bf16.mxu0 0
      %1001 = vmatpush1.bf16.msra.mxu0 %v984
      %1002 = vmatprep.subr.bf16.mxu0 0
      %1003 = vmatpush1.bf16.msra.mxu0 %v985
      %1004 = vmatprep.subr.bf16.mxu0 0
      %1005 = vmatpush1.bf16.msra.mxu0 %v986
      %1006 = vmatprep.subr.bf16.mxu0 0
      %1007 = vmatpush1.bf16.msra.mxu0 %v987
      %1008 = vmatprep.subr.bf16.mxu0 0
      %1009 = vmatpush1.bf16.msra.mxu0 %v988
      %1010 = vmatprep.subr.bf16.mxu0 0
      %1011 = vmatpush1.bf16.msra.mxu0 %v989
      %1012 = vmatprep.subr.bf16.mxu0 0
      %1013 = vmatpush1.bf16.msra.mxu0 %v990
      %1014 = vmatprep.subr.bf16.mxu0 0
      %1015 = vmatpush1.bf16.msra.mxu0 %v991
      %1016 = vmatprep.subr.bf16.mxu0 0
      %1017 = vmatpush1.bf16.msra.mxu0 0
      %1018 = vmatprep.subr.bf16.mxu0 0
      %1019 = vmatpush1.bf16.msra.mxu0 0
      %1020 = vmatprep.subr.bf16.mxu0 0
      %1021 = vmatpush1.bf16.msra.mxu0 0
      %1022 = vmatprep.subr.bf16.mxu0 0
      %1023 = vmatpush1.bf16.msra.mxu0 0
      %1024 = vmatprep.subr.bf16.mxu0 0
      %1025 = vmatpush1.bf16.msra.mxu0 0
      %1026 = vmatprep.subr.bf16.mxu0 0
      %1027 = vmatpush1.bf16.msra.mxu0 0
      %1028 = vmatprep.subr.bf16.mxu0 0
      %1029 = vmatpush1.bf16.msra.mxu0 0
      %1030 = vmatprep.subr.bf16.mxu0 0
      %1031 = vmatpush1.bf16.msra.mxu0 0
      %1032 = vmatprep.mubr.bf16.mxu0 0
      %1033 = vmatmul.mubr.bf16.gmra.mrb[0].mxu0 %v936
      %v1034 = vpop.f32.mrb[0].mxu0
      %v1035 = vadd.f32 0.0, %v1034
      %v1036 = vpop.f32.mrb[0].mxu0
      %v1037 = vpop.f32.mrb[0].mxu0
      %v1038 = vadd.f32 0.0, %v1037
      %v1039 = vpop.f32.mrb[0].mxu0
      %1040 = vmatprep.mubr.bf16.mxu0 0
      %1041 = vmatmul.mubr.bf16.gmra.mrb[0].mxu0 %v937
      %v1042 = vpop.f32.mrb[0].mxu0
      %v1043 = vadd.f32 0.0, %v1042
      %v1044 = vpop.f32.mrb[0].mxu0
      %v1045 = vpop.f32.mrb[0].mxu0
      %v1046 = vadd.f32 0.0, %v1045
      %v1047 = vpop.f32.mrb[0].mxu0
      %1048 = vmatprep.mubr.bf16.mxu0 0
      %1049 = vmatmul.mubr.bf16.gmra.mrb[0].mxu0 %v938
      %v1050 = vpop.f32.mrb[0].mxu0
      %v1051 = vadd.f32 0.0, %v1050
      %v1052 = vpop.f32.mrb[0].mxu0
      %v1053 = vpop.f32.mrb[0].mxu0
      %v1054 = vadd.f32 0.0, %v1053
      %v1055 = vpop.f32.mrb[0].mxu0
      %1056 = vmatprep.mubr.bf16.mxu0 0
      %1057 = vmatmul.mubr.bf16.gmra.mrb[0].mxu0 %v939
      %v1058 = vpop.f32.mrb[0].mxu0
      %v1059 = vadd.f32 0.0, %v1058
      %v1060 = vpop.f32.mrb[0].mxu0
      %v1061 = vpop.f32.mrb[0].mxu0
      %v1062 = vadd.f32 0.0, %v1061
      %v1063 = vpop.f32.mrb[0].mxu0
      %1064 = vmatprep.mubr.bf16.mxu0 0
      %1065 = vmatmul.mubr.bf16.gmra.mrb[0].mxu0 %v940
      %v1066 = vpop.f32.mrb[0].mxu0
      %v1067 = vadd.f32 0.0, %v1066
      %v1068 = vpop.f32.mrb[0].mxu0
      %v1069 = vpop.f32.mrb[0].mxu0
      %v1070 = vadd.f32 0.0, %v1069
      %v1071 = vpop.f32.mrb[0].mxu0
      %1072 = vmatprep.mubr.bf16.mxu0 0
      %1073 = vmatmul.mubr.bf16.gmra.mrb[0].mxu0 %v941
      %v1074 = vpop.f32.mrb[0].mxu0
      %v1075 = vadd.f32 0.0, %v1074
      %v1076 = vpop.f32.mrb[0].mxu0
      %v1077 = vpop.f32.mrb[0].mxu0
      %v1078 = vadd.f32 0.0, %v1077
      %v1079 = vpop.f32.mrb[0].mxu0
      %1080 = vmatprep.mubr.bf16.mxu0 0
      %1081 = vmatmul.mubr.bf16.gmra.mrb[0].mxu0 %v942
      %v1082 = vpop.f32.mrb[0].mxu0
      %v1083 = vadd.f32 0.0, %v1082
      %v1084 = vpop.f32.mrb[0].mxu0
      %v1085 = vpop.f32.mrb[0].mxu0
      %v1086 = vadd.f32 0.0, %v1085
      %v1087 = vpop.f32.mrb[0].mxu0
      %1088 = vmatprep.mubr.bf16.mxu0 0
      %1089 = vmatmul.mubr.bf16.gmra.mrb[0].mxu0 %v943
      %v1090 = vpop.f32.mrb[0].mxu0
      %v1091 = vadd.f32 0.0, %v1090
      %v1092 = vpop.f32.mrb[0].mxu0
      %v1093 = vpop.f32.mrb[0].mxu0
      %v1094 = vadd.f32 0.0, %v1093
      %v1095 = vpop.f32.mrb[0].mxu0
      %1096 = vdwg.mxu0
      %v1097 = vadd.f32 %v774, %v1035
      %v1098 = vadd.f32 %v777, %v1038
      %v1099 = vadd.f32 %v782, %v1043
      %v1100 = vadd.f32 %v785, %v1046
      %v1101 = vadd.f32 %v790, %v1051
      %v1102 = vadd.f32 %v793, %v1054
      %v1103 = vadd.f32 %v798, %v1059
      %v1104 = vadd.f32 %v801, %v1062
      %v1105 = vadd.f32 %v806, %v1067
      %v1106 = vadd.f32 %v809, %v1070
      %v1107 = vadd.f32 %v814, %v1075
      %v1108 = vadd.f32 %v817, %v1078
      %v1109 = vadd.f32 %v822, %v1083
      %v1110 = vadd.f32 %v825, %v1086
      %v1111 = vadd.f32 %v830, %v1091
      %v1112 = vadd.f32 %v833, %v1094
      %s1113 = sadd.s32 %s210, 1
      %s1114 = smul.u32 %s1113, 3
      %s1115 = smul.addr %s1114, 4
      %s1116 = scalar_lea.vmem %s190, %s1115
      %v1117 = vld [vmem:[%s1116] sm:$0xf]
      %v1118 = vld [vmem:[%s1116 + $0x4] sm:$0xf]
      %v1119 = vld [vmem:[%s1116 + $0x8] sm:$0x1]
      %v1120 = vld [vmem:[%s1116 + $0xc] sm:$0xf]
      %v1121 = vld [vmem:[%s1116 + $0x10] sm:$0xf]
      %v1122 = vld [vmem:[%s1116 + $0x14] sm:$0x1]
      %v1123 = vld [vmem:[%s1116 + $0x18] sm:$0xf]
      %v1124 = vld [vmem:[%s1116 + $0x1c] sm:$0xf]
      %v1125 = vld [vmem:[%s1116 + $0x20] sm:$0x1]
      %v1126 = vld [vmem:[%s1116 + $0x24] sm:$0xf]
      %v1127 = vld [vmem:[%s1116 + $0x28] sm:$0xf]
      %v1128 = vld [vmem:[%s1116 + $0x2c] sm:$0x1]
      %v1129 = vld [vmem:[%s1116 + $0x30] sm:$0xf]
      %v1130 = vld [vmem:[%s1116 + $0x34] sm:$0xf]
      %v1131 = vld [vmem:[%s1116 + $0x38] sm:$0x1]
      %v1132 = vld [vmem:[%s1116 + $0x3c] sm:$0xf]
      %v1133 = vld [vmem:[%s1116 + $0x40] sm:$0xf]
      %v1134 = vld [vmem:[%s1116 + $0x44] sm:$0x1]
      %v1135 = vld [vmem:[%s1116 + $0x48] sm:$0xf]
      %v1136 = vld [vmem:[%s1116 + $0x4c] sm:$0xf]
      %v1137 = vld [vmem:[%s1116 + $0x50] sm:$0x1]
      %v1138 = vld [vmem:[%s1116 + $0x54] sm:$0xf]
      %v1139 = vld [vmem:[%s1116 + $0x58] sm:$0xf]
      %v1140 = vld [vmem:[%s1116 + $0x5c] sm:$0x1]
      %s1141 = scalar_lea.vmem %s1, 192
      %v1142 = vld [vmem:[%s1141] sm:$0xf]
      %v1143 = vld [vmem:[%s1141 + $0x4] sm:$0xf]
      %v1144 = vld [vmem:[%s1141 + $0x8] sm:$0xf]
      %v1145 = vld [vmem:[%s1141 + $0xc] sm:$0xf]
      %v1146 = vld [vmem:[%s1141 + $0x10] sm:$0xf]
      %v1147 = vld [vmem:[%s1141 + $0x14] sm:$0xf]
      %v1148 = vld [vmem:[%s1141 + $0x18] sm:$0xf]
      %v1149 = vld [vmem:[%s1141 + $0x1c] sm:$0xf]
      %v1150 = vld [vmem:[%s1141 + $0x20] sm:$0xf]
      %v1151 = vld [vmem:[%s1141 + $0x24] sm:$0xf]
      %v1152 = vld [vmem:[%s1141 + $0x28] sm:$0xf]
      %v1153 = vld [vmem:[%s1141 + $0x2c] sm:$0xf]
      %v1154 = vld [vmem:[%s1141 + $0x30] sm:$0xf]
      %v1155 = vld [vmem:[%s1141 + $0x34] sm:$0xf]
      %v1156 = vld [vmem:[%s1141 + $0x38] sm:$0xf]
      %v1157 = vld [vmem:[%s1141 + $0x3c] sm:$0xf]
      %v1174 = vunpack.c.l.b16 %v1117
      %v1175 = vunpack.c.l.b16 %v1118
      %v1176 = vunpack.c.l.b16 %v1120
      %v1177 = vunpack.c.l.b16 %v1121
      %v1178 = vunpack.c.l.b16 %v1123
      %v1179 = vunpack.c.l.b16 %v1124
      %v1180 = vunpack.c.l.b16 %v1126
      %v1181 = vunpack.c.l.b16 %v1127
      %v1182 = vunpack.c.l.b16 %v1129
      %v1183 = vunpack.c.l.b16 %v1130
      %v1184 = vunpack.c.l.b16 %v1132
      %v1185 = vunpack.c.l.b16 %v1133
      %v1186 = vunpack.c.l.b16 %v1135
      %v1187 = vunpack.c.l.b16 %v1136
      %v1188 = vunpack.c.l.b16 %v1138
      %v1189 = vunpack.c.l.b16 %v1139
      %v1190 = vpack.c.b16 %v1175, %v1174
      %v1191 = vpack.c.b16 %v1177, %v1176
      %v1192 = vpack.c.b16 %v1179, %v1178
      %v1193 = vpack.c.b16 %v1181, %v1180
      %v1194 = vpack.c.b16 %v1183, %v1182
      %v1195 = vpack.c.b16 %v1185, %v1184
      %v1196 = vpack.c.b16 %v1187, %v1186
      %v1197 = vpack.c.b16 %v1189, %v1188
      %v1222 = vunpack.c.l.b16 %v1142
      %v1223 = vunpack.c.l.b16 %v1143
      %v1224 = vunpack.c.l.b16 %v1144
      %v1225 = vunpack.c.l.b16 %v1145
      %v1226 = vunpack.c.l.b16 %v1146
      %v1227 = vunpack.c.l.b16 %v1147
      %v1228 = vunpack.c.l.b16 %v1148
      %v1229 = vunpack.c.l.b16 %v1149
      %v1230 = vunpack.c.l.b16 %v1150
      %v1231 = vunpack.c.l.b16 %v1151
      %v1232 = vunpack.c.l.b16 %v1152
      %v1233 = vunpack.c.l.b16 %v1153
      %v1234 = vunpack.c.l.b16 %v1154
      %v1235 = vunpack.c.l.b16 %v1155
      %v1236 = vunpack.c.l.b16 %v1156
      %v1237 = vunpack.c.l.b16 %v1157
      %v1238 = vpack.c.b16 %v1223, %v1222
      %v1239 = vpack.c.b16 %v1225, %v1224
      %v1240 = vpack.c.b16 %v1227, %v1226
      %v1241 = vpack.c.b16 %v1229, %v1228
      %v1242 = vpack.c.b16 %v1231, %v1230
      %v1243 = vpack.c.b16 %v1233, %v1232
      %v1244 = vpack.c.b16 %v1235, %v1234
      %v1245 = vpack.c.b16 %v1237, %v1236
      %1254 = vmatprep.subr.bf16.mxu0 0
      %1255 = vmatpush1.bf16.msra.mxu0 %v1238
      %1256 = vmatprep.subr.bf16.mxu0 0
      %1257 = vmatpush1.bf16.msra.mxu0 %v1239
      %1258 = vmatprep.subr.bf16.mxu0 0
      %1259 = vmatpush1.bf16.msra.mxu0 %v1240
      %1260 = vmatprep.subr.bf16.mxu0 0
      %1261 = vmatpush1.bf16.msra.mxu0 %v1241
      %1262 = vmatprep.subr.bf16.mxu0 0
      %1263 = vmatpush1.bf16.msra.mxu0 %v1242
      %1264 = vmatprep.subr.bf16.mxu0 0
      %1265 = vmatpush1.bf16.msra.mxu0 %v1243
      %1266 = vmatprep.subr.bf16.mxu0 0
      %1267 = vmatpush1.bf16.msra.mxu0 %v1244
      %1268 = vmatprep.subr.bf16.mxu0 0
      %1269 = vmatpush1.bf16.msra.mxu0 %v1245
      %1270 = vmatprep.subr.bf16.mxu0 0
      %1271 = vmatpush1.bf16.msra.mxu0 0
      %1272 = vmatprep.subr.bf16.mxu0 0
      %1273 = vmatpush1.bf16.msra.mxu0 0
      %1274 = vmatprep.subr.bf16.mxu0 0
      %1275 = vmatpush1.bf16.msra.mxu0 0
      %1276 = vmatprep.subr.bf16.mxu0 0
      %1277 = vmatpush1.bf16.msra.mxu0 0
      %1278 = vmatprep.subr.bf16.mxu0 0
      %1279 = vmatpush1.bf16.msra.mxu0 0
      %1280 = vmatprep.subr.bf16.mxu0 0
      %1281 = vmatpush1.bf16.msra.mxu0 0
      %1282 = vmatprep.subr.bf16.mxu0 0
      %1283 = vmatpush1.bf16.msra.mxu0 0
      %1284 = vmatprep.subr.bf16.mxu0 0
      %1285 = vmatpush1.bf16.msra.mxu0 0
      %1286 = vmatprep.mubr.bf16.mxu0 0
      %1287 = vmatmul.mubr.bf16.gmra.mrb[0].mxu0 %v1190
      %v1288 = vpop.f32.mrb[0].mxu0
      %v1289 = vadd.f32 0.0, %v1288
      %v1290 = vpop.f32.mrb[0].mxu0
      %v1291 = vpop.f32.mrb[0].mxu0
      %v1292 = vadd.f32 0.0, %v1291
      %v1293 = vpop.f32.mrb[0].mxu0
      %1294 = vmatprep.mubr.bf16.mxu0 0
      %1295 = vmatmul.mubr.bf16.gmra.mrb[0].mxu0 %v1191
      %v1296 = vpop.f32.mrb[0].mxu0
      %v1297 = vadd.f32 0.0, %v1296
      %v1298 = vpop.f32.mrb[0].mxu0
      %v1299 = vpop.f32.mrb[0].mxu0
      %v1300 = vadd.f32 0.0, %v1299
      %v1301 = vpop.f32.mrb[0].mxu0
      %1302 = vmatprep.mubr.bf16.mxu0 0
      %1303 = vmatmul.mubr.bf16.gmra.mrb[0].mxu0 %v1192
      %v1304 = vpop.f32.mrb[0].mxu0
      %v1305 = vadd.f32 0.0, %v1304
      %v1306 = vpop.f32.mrb[0].mxu0
      %v1307 = vpop.f32.mrb[0].mxu0
      %v1308 = vadd.f32 0.0, %v1307
      %v1309 = vpop.f32.mrb[0].mxu0
      %1310 = vmatprep.mubr.bf16.mxu0 0
      %1311 = vmatmul.mubr.bf16.gmra.mrb[0].mxu0 %v1193
      %v1312 = vpop.f32.mrb[0].mxu0
      %v1313 = vadd.f32 0.0, %v1312
      %v1314 = vpop.f32.mrb[0].mxu0
      %v1315 = vpop.f32.mrb[0].mxu0
      %v1316 = vadd.f32 0.0, %v1315
      %v1317 = vpop.f32.mrb[0].mxu0
      %1318 = vmatprep.mubr.bf16.mxu0 0
      %1319 = vmatmul.mubr.bf16.gmra.mrb[0].mxu0 %v1194
      %v1320 = vpop.f32.mrb[0].mxu0
      %v1321 = vadd.f32 0.0, %v1320
      %v1322 = vpop.f32.mrb[0].mxu0
      %v1323 = vpop.f32.mrb[0].mxu0
      %v1324 = vadd.f32 0.0, %v1323
      %v1325 = vpop.f32.mrb[0].mxu0
      %1326 = vmatprep.mubr.bf16.mxu0 0
      %1327 = vmatmul.mubr.bf16.gmra.mrb[0].mxu0 %v1195
      %v1328 = vpop.f32.mrb[0].mxu0
      %v1329 = vadd.f32 0.0, %v1328
      %v1330 = vpop.f32.mrb[0].mxu0
      %v1331 = vpop.f32.mrb[0].mxu0
      %v1332 = vadd.f32 0.0, %v1331
      %v1333 = vpop.f32.mrb[0].mxu0
      %1334 = vmatprep.mubr.bf16.mxu0 0
      %1335 = vmatmul.mubr.bf16.gmra.mrb[0].mxu0 %v1196
      %v1336 = vpop.f32.mrb[0].mxu0
      %v1337 = vadd.f32 0.0, %v1336
      %v1338 = vpop.f32.mrb[0].mxu0
      %v1339 = vpop.f32.mrb[0].mxu0
      %v1340 = vadd.f32 0.0, %v1339
      %v1341 = vpop.f32.mrb[0].mxu0
      %1342 = vmatprep.mubr.bf16.mxu0 0
      %1343 = vmatmul.mubr.bf16.gmra.mrb[0].mxu0 %v1197
      %v1344 = vpop.f32.mrb[0].mxu0
      %v1345 = vadd.f32 0.0, %v1344
      %v1346 = vpop.f32.mrb[0].mxu0
      %v1347 = vpop.f32.mrb[0].mxu0
      %v1348 = vadd.f32 0.0, %v1347
      %v1349 = vpop.f32.mrb[0].mxu0
      %1350 = vdwg.mxu0
      %v1351 = vadd.f32 %v1097, %v1289
      %v1352 = vadd.f32 %v1098, %v1292
      %v1353 = vadd.f32 %v1099, %v1297
      %v1354 = vadd.f32 %v1100, %v1300
      %v1355 = vadd.f32 %v1101, %v1305
      %v1356 = vadd.f32 %v1102, %v1308
      %v1357 = vadd.f32 %v1103, %v1313
      %v1358 = vadd.f32 %v1104, %v1316
      %v1359 = vadd.f32 %v1105, %v1321
      %v1360 = vadd.f32 %v1106, %v1324
      %v1361 = vadd.f32 %v1107, %v1329
      %v1362 = vadd.f32 %v1108, %v1332
      %v1363 = vadd.f32 %v1109, %v1337
      %v1364 = vadd.f32 %v1110, %v1340
      %v1365 = vadd.f32 %v1111, %v1345
      %v1366 = vadd.f32 %v1112, %v1348
      %v1368 = vshrl.u32 %v1117, 16
      %v1370 = vrot.slane %v1368, 4
      %v1371 = vshll.u32 %v1117, 16
      %v1373 = vrot.slane %v1371, 5
      %v1374 = vor.u32 %v1370, %v1373
      %v1375 = vrot.slane %v1374, 4
      %v1377 = vshll.u32 %v1118, 16
      %v1379 = vrot.slane %v1377, 5
      %v1380 = vsel %vm256, %v1375, %v1379
      %v1381 = vshrl.u32 %v1118, 16
      %v1383 = vrot.slane %v1381, 4
      %v1384 = vor.u32 %v1383, %v1379
      %v1385 = vrot.slane %v1384, 4
      %v1387 = vshll.u32 %v1119, 16
      %v1389 = vrot.slane %v1387, 5
      %v1390 = vsel %vm256, %v1385, %v1389
      %v1392 = vshrl.u32 %v1120, 16
      %v1394 = vrot.slane %v1392, 4
      %v1395 = vshll.u32 %v1120, 16
      %v1397 = vrot.slane %v1395, 5
      %v1398 = vor.u32 %v1394, %v1397
      %v1399 = vrot.slane %v1398, 4
      %v1401 = vshll.u32 %v1121, 16
      %v1403 = vrot.slane %v1401, 5
      %v1404 = vsel %vm256, %v1399, %v1403
      %v1405 = vshrl.u32 %v1121, 16
      %v1407 = vrot.slane %v1405, 4
      %v1408 = vor.u32 %v1407, %v1403
      %v1409 = vrot.slane %v1408, 4
      %v1411 = vshll.u32 %v1122, 16
      %v1413 = vrot.slane %v1411, 5
      %v1414 = vsel %vm256, %v1409, %v1413
      %v1416 = vshrl.u32 %v1123, 16
      %v1418 = vrot.slane %v1416, 4
      %v1419 = vshll.u32 %v1123, 16
      %v1421 = vrot.slane %v1419, 5
      %v1422 = vor.u32 %v1418, %v1421
      %v1423 = vrot.slane %v1422, 4
      %v1425 = vshll.u32 %v1124, 16
      %v1427 = vrot.slane %v1425, 5
      %v1428 = vsel %vm256, %v1423, %v1427
      %v1429 = vshrl.u32 %v1124, 16
      %v1431 = vrot.slane %v1429, 4
      %v1432 = vor.u32 %v1431, %v1427
      %v1433 = vrot.slane %v1432, 4
      %v1435 = vshll.u32 %v1125, 16
      %v1437 = vrot.slane %v1435, 5
      %v1438 = vsel %vm256, %v1433, %v1437
      %v1440 = vshrl.u32 %v1126, 16
      %v1442 = vrot.slane %v1440, 4
      %v1443 = vshll.u32 %v1126, 16
      %v1445 = vrot.slane %v1443, 5
      %v1446 = vor.u32 %v1442, %v1445
      %v1447 = vrot.slane %v1446, 4
      %v1449 = vshll.u32 %v1127, 16
      %v1451 = vrot.slane %v1449, 5
      %v1452 = vsel %vm256, %v1447, %v1451
      %v1453 = vshrl.u32 %v1127, 16
      %v1455 = vrot.slane %v1453, 4
      %v1456 = vor.u32 %v1455, %v1451
      %v1457 = vrot.slane %v1456, 4
      %v1459 = vshll.u32 %v1128, 16
      %v1461 = vrot.slane %v1459, 5
      %v1462 = vsel %vm256, %v1457, %v1461
      %v1464 = vshrl.u32 %v1129, 16
      %v1466 = vrot.slane %v1464, 4
      %v1467 = vshll.u32 %v1129, 16
      %v1469 = vrot.slane %v1467, 5
      %v1470 = vor.u32 %v1466, %v1469
      %v1471 = vrot.slane %v1470, 4
      %v1473 = vshll.u32 %v1130, 16
      %v1475 = vrot.slane %v1473, 5
      %v1476 = vsel %vm256, %v1471, %v1475
      %v1477 = vshrl.u32 %v1130, 16
      %v1479 = vrot.slane %v1477, 4
      %v1480 = vor.u32 %v1479, %v1475
      %v1481 = vrot.slane %v1480, 4
      %v1483 = vshll.u32 %v1131, 16
      %v1485 = vrot.slane %v1483, 5
      %v1486 = vsel %vm256, %v1481, %v1485
      %v1488 = vshrl.u32 %v1132, 16
      %v1490 = vrot.slane %v1488, 4
      %v1491 = vshll.u32 %v1132, 16
      %v1493 = vrot.slane %v1491, 5
      %v1494 = vor.u32 %v1490, %v1493
      %v1495 = vrot.slane %v1494, 4
      %v1497 = vshll.u32 %v1133, 16
      %v1499 = vrot.slane %v1497, 5
      %v1500 = vsel %vm256, %v1495, %v1499
      %v1501 = vshrl.u32 %v1133, 16
      %v1503 = vrot.slane %v1501, 4
      %v1504 = vor.u32 %v1503, %v1499
      %v1505 = vrot.slane %v1504, 4
      %v1507 = vshll.u32 %v1134, 16
      %v1509 = vrot.slane %v1507, 5
      %v1510 = vsel %vm256, %v1505, %v1509
      %v1512 = vshrl.u32 %v1135, 16
      %v1514 = vrot.slane %v1512, 4
      %v1515 = vshll.u32 %v1135, 16
      %v1517 = vrot.slane %v1515, 5
      %v1518 = vor.u32 %v1514, %v1517
      %v1519 = vrot.slane %v1518, 4
      %v1521 = vshll.u32 %v1136, 16
      %v1523 = vrot.slane %v1521, 5
      %v1524 = vsel %vm256, %v1519, %v1523
      %v1525 = vshrl.u32 %v1136, 16
      %v1527 = vrot.slane %v1525, 4
      %v1528 = vor.u32 %v1527, %v1523
      %v1529 = vrot.slane %v1528, 4
      %v1531 = vshll.u32 %v1137, 16
      %v1533 = vrot.slane %v1531, 5
      %v1534 = vsel %vm256, %v1529, %v1533
      %v1536 = vshrl.u32 %v1138, 16
      %v1538 = vrot.slane %v1536, 4
      %v1539 = vshll.u32 %v1138, 16
      %v1541 = vrot.slane %v1539, 5
      %v1542 = vor.u32 %v1538, %v1541
      %v1543 = vrot.slane %v1542, 4
      %v1545 = vshll.u32 %v1139, 16
      %v1547 = vrot.slane %v1545, 5
      %v1548 = vsel %vm256, %v1543, %v1547
      %v1549 = vshrl.u32 %v1139, 16
      %v1551 = vrot.slane %v1549, 4
      %v1552 = vor.u32 %v1551, %v1547
      %v1553 = vrot.slane %v1552, 4
      %v1555 = vshll.u32 %v1140, 16
      %v1557 = vrot.slane %v1555, 5
      %v1558 = vsel %vm256, %v1553, %v1557
      %s1559 = scalar_lea.vmem %s1, 256
      %v1560 = vld [vmem:[%s1559] sm:$0xf]
      %v1561 = vld [vmem:[%s1559 + $0x4] sm:$0xf]
      %v1562 = vld [vmem:[%s1559 + $0x8] sm:$0xf]
      %v1563 = vld [vmem:[%s1559 + $0xc] sm:$0xf]
      %v1564 = vld [vmem:[%s1559 + $0x10] sm:$0xf]
      %v1565 = vld [vmem:[%s1559 + $0x14] sm:$0xf]
      %v1566 = vld [vmem:[%s1559 + $0x18] sm:$0xf]
      %v1567 = vld [vmem:[%s1559 + $0x1c] sm:$0xf]
      %v1568 = vld [vmem:[%s1559 + $0x20] sm:$0xf]
      %v1569 = vld [vmem:[%s1559 + $0x24] sm:$0xf]
      %v1570 = vld [vmem:[%s1559 + $0x28] sm:$0xf]
      %v1571 = vld [vmem:[%s1559 + $0x2c] sm:$0xf]
      %v1572 = vld [vmem:[%s1559 + $0x30] sm:$0xf]
      %v1573 = vld [vmem:[%s1559 + $0x34] sm:$0xf]
      %v1574 = vld [vmem:[%s1559 + $0x38] sm:$0xf]
      %v1575 = vld [vmem:[%s1559 + $0x3c] sm:$0xf]
      %v1576 = vunpack.c.l.b16 %v1380
      %v1577 = vunpack.c.l.b16 %v1390
      %v1578 = vunpack.c.l.b16 %v1404
      %v1579 = vunpack.c.l.b16 %v1414
      %v1580 = vunpack.c.l.b16 %v1428
      %v1581 = vunpack.c.l.b16 %v1438
      %v1582 = vunpack.c.l.b16 %v1452
      %v1583 = vunpack.c.l.b16 %v1462
      %v1584 = vunpack.c.l.b16 %v1476
      %v1585 = vunpack.c.l.b16 %v1486
      %v1586 = vunpack.c.l.b16 %v1500
      %v1587 = vunpack.c.l.b16 %v1510
      %v1588 = vunpack.c.l.b16 %v1524
      %v1589 = vunpack.c.l.b16 %v1534
      %v1590 = vunpack.c.l.b16 %v1548
      %v1591 = vunpack.c.l.b16 %v1558
      %v1592 = vpack.c.b16 %v1577, %v1576
      %v1593 = vpack.c.b16 %v1579, %v1578
      %v1594 = vpack.c.b16 %v1581, %v1580
      %v1595 = vpack.c.b16 %v1583, %v1582
      %v1596 = vpack.c.b16 %v1585, %v1584
      %v1597 = vpack.c.b16 %v1587, %v1586
      %v1598 = vpack.c.b16 %v1589, %v1588
      %v1599 = vpack.c.b16 %v1591, %v1590
      %v1624 = vunpack.c.l.b16 %v1560
      %v1625 = vunpack.c.l.b16 %v1561
      %v1626 = vunpack.c.l.b16 %v1562
      %v1627 = vunpack.c.l.b16 %v1563
      %v1628 = vunpack.c.l.b16 %v1564
      %v1629 = vunpack.c.l.b16 %v1565
      %v1630 = vunpack.c.l.b16 %v1566
      %v1631 = vunpack.c.l.b16 %v1567
      %v1632 = vunpack.c.l.b16 %v1568
      %v1633 = vunpack.c.l.b16 %v1569
      %v1634 = vunpack.c.l.b16 %v1570
      %v1635 = vunpack.c.l.b16 %v1571
      %v1636 = vunpack.c.l.b16 %v1572
      %v1637 = vunpack.c.l.b16 %v1573
      %v1638 = vunpack.c.l.b16 %v1574
      %v1639 = vunpack.c.l.b16 %v1575
      %v1640 = vpack.c.b16 %v1625, %v1624
      %v1641 = vpack.c.b16 %v1627, %v1626
      %v1642 = vpack.c.b16 %v1629, %v1628
      %v1643 = vpack.c.b16 %v1631, %v1630
      %v1644 = vpack.c.b16 %v1633, %v1632
      %v1645 = vpack.c.b16 %v1635, %v1634
      %v1646 = vpack.c.b16 %v1637, %v1636
      %v1647 = vpack.c.b16 %v1639, %v1638
      %1656 = vmatprep.subr.bf16.mxu0 0
      %1657 = vmatpush1.bf16.msra.mxu0 %v1640
      %1658 = vmatprep.subr.bf16.mxu0 0
      %1659 = vmatpush1.bf16.msra.mxu0 %v1641
      %1660 = vmatprep.subr.bf16.mxu0 0
      %1661 = vmatpush1.bf16.msra.mxu0 %v1642
      %1662 = vmatprep.subr.bf16.mxu0 0
      %1663 = vmatpush1.bf16.msra.mxu0 %v1643
      %1664 = vmatprep.subr.bf16.mxu0 0
      %1665 = vmatpush1.bf16.msra.mxu0 %v1644
      %1666 = vmatprep.subr.bf16.mxu0 0
      %1667 = vmatpush1.bf16.msra.mxu0 %v1645
      %1668 = vmatprep.subr.bf16.mxu0 0
      %1669 = vmatpush1.bf16.msra.mxu0 %v1646
      %1670 = vmatprep.subr.bf16.mxu0 0
      %1671 = vmatpush1.bf16.msra.mxu0 %v1647
      %1672 = vmatprep.subr.bf16.mxu0 0
      %1673 = vmatpush1.bf16.msra.mxu0 0
      %1674 = vmatprep.subr.bf16.mxu0 0
      %1675 = vmatpush1.bf16.msra.mxu0 0
      %1676 = vmatprep.subr.bf16.mxu0 0
      %1677 = vmatpush1.bf16.msra.mxu0 0
      %1678 = vmatprep.subr.bf16.mxu0 0
      %1679 = vmatpush1.bf16.msra.mxu0 0
      %1680 = vmatprep.subr.bf16.mxu0 0
      %1681 = vmatpush1.bf16.msra.mxu0 0
      %1682 = vmatprep.subr.bf16.mxu0 0
      %1683 = vmatpush1.bf16.msra.mxu0 0
      %1684 = vmatprep.subr.bf16.mxu0 0
      %1685 = vmatpush1.bf16.msra.mxu0 0
      %1686 = vmatprep.subr.bf16.mxu0 0
      %1687 = vmatpush1.bf16.msra.mxu0 0
      %1688 = vmatprep.mubr.bf16.mxu0 0
      %1689 = vmatmul.mubr.bf16.gmra.mrb[0].mxu0 %v1592
      %v1690 = vpop.f32.mrb[0].mxu0
      %v1691 = vadd.f32 0.0, %v1690
      %v1692 = vpop.f32.mrb[0].mxu0
      %v1693 = vpop.f32.mrb[0].mxu0
      %v1694 = vadd.f32 0.0, %v1693
      %v1695 = vpop.f32.mrb[0].mxu0
      %1696 = vmatprep.mubr.bf16.mxu0 0
      %1697 = vmatmul.mubr.bf16.gmra.mrb[0].mxu0 %v1593
      %v1698 = vpop.f32.mrb[0].mxu0
      %v1699 = vadd.f32 0.0, %v1698
      %v1700 = vpop.f32.mrb[0].mxu0
      %v1701 = vpop.f32.mrb[0].mxu0
      %v1702 = vadd.f32 0.0, %v1701
      %v1703 = vpop.f32.mrb[0].mxu0
      %1704 = vmatprep.mubr.bf16.mxu0 0
      %1705 = vmatmul.mubr.bf16.gmra.mrb[0].mxu0 %v1594
      %v1706 = vpop.f32.mrb[0].mxu0
      %v1707 = vadd.f32 0.0, %v1706
      %v1708 = vpop.f32.mrb[0].mxu0
      %v1709 = vpop.f32.mrb[0].mxu0
      %v1710 = vadd.f32 0.0, %v1709
      %v1711 = vpop.f32.mrb[0].mxu0
      %1712 = vmatprep.mubr.bf16.mxu0 0
      %1713 = vmatmul.mubr.bf16.gmra.mrb[0].mxu0 %v1595
      %v1714 = vpop.f32.mrb[0].mxu0
      %v1715 = vadd.f32 0.0, %v1714
      %v1716 = vpop.f32.mrb[0].mxu0
      %v1717 = vpop.f32.mrb[0].mxu0
      %v1718 = vadd.f32 0.0, %v1717
      %v1719 = vpop.f32.mrb[0].mxu0
      %1720 = vmatprep.mubr.bf16.mxu0 0
      %1721 = vmatmul.mubr.bf16.gmra.mrb[0].mxu0 %v1596
      %v1722 = vpop.f32.mrb[0].mxu0
      %v1723 = vadd.f32 0.0, %v1722
      %v1724 = vpop.f32.mrb[0].mxu0
      %v1725 = vpop.f32.mrb[0].mxu0
      %v1726 = vadd.f32 0.0, %v1725
      %v1727 = vpop.f32.mrb[0].mxu0
      %1728 = vmatprep.mubr.bf16.mxu0 0
      %1729 = vmatmul.mubr.bf16.gmra.mrb[0].mxu0 %v1597
      %v1730 = vpop.f32.mrb[0].mxu0
      %v1731 = vadd.f32 0.0, %v1730
      %v1732 = vpop.f32.mrb[0].mxu0
      %v1733 = vpop.f32.mrb[0].mxu0
      %v1734 = vadd.f32 0.0, %v1733
      %v1735 = vpop.f32.mrb[0].mxu0
      %1736 = vmatprep.mubr.bf16.mxu0 0
      %1737 = vmatmul.mubr.bf16.gmra.mrb[0].mxu0 %v1598
      %v1738 = vpop.f32.mrb[0].mxu0
      %v1739 = vadd.f32 0.0, %v1738
      %v1740 = vpop.f32.mrb[0].mxu0
      %v1741 = vpop.f32.mrb[0].mxu0
      %v1742 = vadd.f32 0.0, %v1741
      %v1743 = vpop.f32.mrb[0].mxu0
      %1744 = vmatprep.mubr.bf16.mxu0 0
      %1745 = vmatmul.mubr.bf16.gmra.mrb[0].mxu0 %v1599
      %v1746 = vpop.f32.mrb[0].mxu0
      %v1747 = vadd.f32 0.0, %v1746
      %v1748 = vpop.f32.mrb[0].mxu0
      %v1749 = vpop.f32.mrb[0].mxu0
      %v1750 = vadd.f32 0.0, %v1749
      %v1751 = vpop.f32.mrb[0].mxu0
      %1752 = vdwg.mxu0
      %v1753 = vadd.f32 %v1351, %v1691
      %v1754 = vadd.f32 %v1352, %v1694
      %v1755 = vadd.f32 %v1353, %v1699
      %v1756 = vadd.f32 %v1354, %v1702
      %v1757 = vadd.f32 %v1355, %v1707
      %v1758 = vadd.f32 %v1356, %v1710
      %v1759 = vadd.f32 %v1357, %v1715
      %v1760 = vadd.f32 %v1358, %v1718
      %v1761 = vadd.f32 %v1359, %v1723
      %v1762 = vadd.f32 %v1360, %v1726
      %v1763 = vadd.f32 %v1361, %v1731
      %v1764 = vadd.f32 %v1362, %v1734
      %v1765 = vadd.f32 %v1363, %v1739
      %v1766 = vadd.f32 %v1364, %v1742
      %v1767 = vadd.f32 %v1365, %v1747
      %v1768 = vadd.f32 %v1366, %v1750
      %v1777 = vrot.slane %v1117, 5
      %v1778 = vrot.slane %v1777, 4
      %v1779 = vrot.slane %v1118, 5
      %v1780 = vsel %vm846, %v1778, %v1779
      %v1781 = vrot.slane %v1779, 4
      %v1782 = vrot.slane %v1119, 5
      %v1783 = vsel %vm846, %v1781, %v1782
      %v1784 = vrot.slane %v1120, 5
      %v1785 = vrot.slane %v1784, 4
      %v1786 = vrot.slane %v1121, 5
      %v1787 = vsel %vm846, %v1785, %v1786
      %v1788 = vrot.slane %v1786, 4
      %v1789 = vrot.slane %v1122, 5
      %v1790 = vsel %vm846, %v1788, %v1789
      %v1791 = vrot.slane %v1123, 5
      %v1792 = vrot.slane %v1791, 4
      %v1793 = vrot.slane %v1124, 5
      %v1794 = vsel %vm846, %v1792, %v1793
      %v1795 = vrot.slane %v1793, 4
      %v1796 = vrot.slane %v1125, 5
      %v1797 = vsel %vm846, %v1795, %v1796
      %v1798 = vrot.slane %v1126, 5
      %v1799 = vrot.slane %v1798, 4
      %v1800 = vrot.slane %v1127, 5
      %v1801 = vsel %vm846, %v1799, %v1800
      %v1802 = vrot.slane %v1800, 4
      %v1803 = vrot.slane %v1128, 5
      %v1804 = vsel %vm846, %v1802, %v1803
      %v1805 = vrot.slane %v1129, 5
      %v1806 = vrot.slane %v1805, 4
      %v1807 = vrot.slane %v1130, 5
      %v1808 = vsel %vm846, %v1806, %v1807
      %v1809 = vrot.slane %v1807, 4
      %v1810 = vrot.slane %v1131, 5
      %v1811 = vsel %vm846, %v1809, %v1810
      %v1812 = vrot.slane %v1132, 5
      %v1813 = vrot.slane %v1812, 4
      %v1814 = vrot.slane %v1133, 5
      %v1815 = vsel %vm846, %v1813, %v1814
      %v1816 = vrot.slane %v1814, 4
      %v1817 = vrot.slane %v1134, 5
      %v1818 = vsel %vm846, %v1816, %v1817
      %v1819 = vrot.slane %v1135, 5
      %v1820 = vrot.slane %v1819, 4
      %v1821 = vrot.slane %v1136, 5
      %v1822 = vsel %vm846, %v1820, %v1821
      %v1823 = vrot.slane %v1821, 4
      %v1824 = vrot.slane %v1137, 5
      %v1825 = vsel %vm846, %v1823, %v1824
      %v1826 = vrot.slane %v1138, 5
      %v1827 = vrot.slane %v1826, 4
      %v1828 = vrot.slane %v1139, 5
      %v1829 = vsel %vm846, %v1827, %v1828
      %v1830 = vrot.slane %v1828, 4
      %v1831 = vrot.slane %v1140, 5
      %v1832 = vsel %vm846, %v1830, %v1831
      %s1833 = scalar_lea.vmem %s1, 320
      %v1834 = vld [vmem:[%s1833] sm:$0xf]
      %v1835 = vld [vmem:[%s1833 + $0x4] sm:$0xf]
      %v1836 = vld [vmem:[%s1833 + $0x8] sm:$0xf]
      %v1837 = vld [vmem:[%s1833 + $0xc] sm:$0xf]
      %v1838 = vld [vmem:[%s1833 + $0x10] sm:$0xf]
      %v1839 = vld [vmem:[%s1833 + $0x14] sm:$0xf]
      %v1840 = vld [vmem:[%s1833 + $0x18] sm:$0xf]
      %v1841 = vld [vmem:[%s1833 + $0x1c] sm:$0xf]
      %v1842 = vld [vmem:[%s1833 + $0x20] sm:$0xf]
      %v1843 = vld [vmem:[%s1833 + $0x24] sm:$0xf]
      %v1844 = vld [vmem:[%s1833 + $0x28] sm:$0xf]
      %v1845 = vld [vmem:[%s1833 + $0x2c] sm:$0xf]
      %v1846 = vld [vmem:[%s1833 + $0x30] sm:$0xf]
      %v1847 = vld [vmem:[%s1833 + $0x34] sm:$0xf]
      %v1848 = vld [vmem:[%s1833 + $0x38] sm:$0xf]
      %v1849 = vld [vmem:[%s1833 + $0x3c] sm:$0xf]
      %v1850 = vunpack.c.l.b16 %v1780
      %v1851 = vunpack.c.l.b16 %v1783
      %v1852 = vunpack.c.l.b16 %v1787
      %v1853 = vunpack.c.l.b16 %v1790
      %v1854 = vunpack.c.l.b16 %v1794
      %v1855 = vunpack.c.l.b16 %v1797
      %v1856 = vunpack.c.l.b16 %v1801
      %v1857 = vunpack.c.l.b16 %v1804
      %v1858 = vunpack.c.l.b16 %v1808
      %v1859 = vunpack.c.l.b16 %v1811
      %v1860 = vunpack.c.l.b16 %v1815
      %v1861 = vunpack.c.l.b16 %v1818
      %v1862 = vunpack.c.l.b16 %v1822
      %v1863 = vunpack.c.l.b16 %v1825
      %v1864 = vunpack.c.l.b16 %v1829
      %v1865 = vunpack.c.l.b16 %v1832
      %v1866 = vpack.c.b16 %v1851, %v1850
      %v1867 = vpack.c.b16 %v1853, %v1852
      %v1868 = vpack.c.b16 %v1855, %v1854
      %v1869 = vpack.c.b16 %v1857, %v1856
      %v1870 = vpack.c.b16 %v1859, %v1858
      %v1871 = vpack.c.b16 %v1861, %v1860
      %v1872 = vpack.c.b16 %v1863, %v1862
      %v1873 = vpack.c.b16 %v1865, %v1864
      %v1898 = vunpack.c.l.b16 %v1834
      %v1899 = vunpack.c.l.b16 %v1835
      %v1900 = vunpack.c.l.b16 %v1836
      %v1901 = vunpack.c.l.b16 %v1837
      %v1902 = vunpack.c.l.b16 %v1838
      %v1903 = vunpack.c.l.b16 %v1839
      %v1904 = vunpack.c.l.b16 %v1840
      %v1905 = vunpack.c.l.b16 %v1841
      %v1906 = vunpack.c.l.b16 %v1842
      %v1907 = vunpack.c.l.b16 %v1843
      %v1908 = vunpack.c.l.b16 %v1844
      %v1909 = vunpack.c.l.b16 %v1845
      %v1910 = vunpack.c.l.b16 %v1846
      %v1911 = vunpack.c.l.b16 %v1847
      %v1912 = vunpack.c.l.b16 %v1848
      %v1913 = vunpack.c.l.b16 %v1849
      %v1914 = vpack.c.b16 %v1899, %v1898
      %v1915 = vpack.c.b16 %v1901, %v1900
      %v1916 = vpack.c.b16 %v1903, %v1902
      %v1917 = vpack.c.b16 %v1905, %v1904
      %v1918 = vpack.c.b16 %v1907, %v1906
      %v1919 = vpack.c.b16 %v1909, %v1908
      %v1920 = vpack.c.b16 %v1911, %v1910
      %v1921 = vpack.c.b16 %v1913, %v1912
      %1930 = vmatprep.subr.bf16.mxu0 0
      %1931 = vmatpush1.bf16.msra.mxu0 %v1914
      %1932 = vmatprep.subr.bf16.mxu0 0
      %1933 = vmatpush1.bf16.msra.mxu0 %v1915
      %1934 = vmatprep.subr.bf16.mxu0 0
      %1935 = vmatpush1.bf16.msra.mxu0 %v1916
      %1936 = vmatprep.subr.bf16.mxu0 0
      %1937 = vmatpush1.bf16.msra.mxu0 %v1917
      %1938 = vmatprep.subr.bf16.mxu0 0
      %1939 = vmatpush1.bf16.msra.mxu0 %v1918
      %1940 = vmatprep.subr.bf16.mxu0 0
      %1941 = vmatpush1.bf16.msra.mxu0 %v1919
      %1942 = vmatprep.subr.bf16.mxu0 0
      %1943 = vmatpush1.bf16.msra.mxu0 %v1920
      %1944 = vmatprep.subr.bf16.mxu0 0
      %1945 = vmatpush1.bf16.msra.mxu0 %v1921
      %1946 = vmatprep.subr.bf16.mxu0 0
      %1947 = vmatpush1.bf16.msra.mxu0 0
      %1948 = vmatprep.subr.bf16.mxu0 0
      %1949 = vmatpush1.bf16.msra.mxu0 0
      %1950 = vmatprep.subr.bf16.mxu0 0
      %1951 = vmatpush1.bf16.msra.mxu0 0
      %1952 = vmatprep.subr.bf16.mxu0 0
      %1953 = vmatpush1.bf16.msra.mxu0 0
      %1954 = vmatprep.subr.bf16.mxu0 0
      %1955 = vmatpush1.bf16.msra.mxu0 0
      %1956 = vmatprep.subr.bf16.mxu0 0
      %1957 = vmatpush1.bf16.msra.mxu0 0
      %1958 = vmatprep.subr.bf16.mxu0 0
      %1959 = vmatpush1.bf16.msra.mxu0 0
      %1960 = vmatprep.subr.bf16.mxu0 0
      %1961 = vmatpush1.bf16.msra.mxu0 0
      %1962 = vmatprep.mubr.bf16.mxu0 0
      %1963 = vmatmul.mubr.bf16.gmra.mrb[0].mxu0 %v1866
      %v1964 = vpop.f32.mrb[0].mxu0
      %v1965 = vadd.f32 0.0, %v1964
      %v1966 = vpop.f32.mrb[0].mxu0
      %v1967 = vpop.f32.mrb[0].mxu0
      %v1968 = vadd.f32 0.0, %v1967
      %v1969 = vpop.f32.mrb[0].mxu0
      %1970 = vmatprep.mubr.bf16.mxu0 0
      %1971 = vmatmul.mubr.bf16.gmra.mrb[0].mxu0 %v1867
      %v1972 = vpop.f32.mrb[0].mxu0
      %v1973 = vadd.f32 0.0, %v1972
      %v1974 = vpop.f32.mrb[0].mxu0
      %v1975 = vpop.f32.mrb[0].mxu0
      %v1976 = vadd.f32 0.0, %v1975
      %v1977 = vpop.f32.mrb[0].mxu0
      %1978 = vmatprep.mubr.bf16.mxu0 0
      %1979 = vmatmul.mubr.bf16.gmra.mrb[0].mxu0 %v1868
      %v1980 = vpop.f32.mrb[0].mxu0
      %v1981 = vadd.f32 0.0, %v1980
      %v1982 = vpop.f32.mrb[0].mxu0
      %v1983 = vpop.f32.mrb[0].mxu0
      %v1984 = vadd.f32 0.0, %v1983
      %v1985 = vpop.f32.mrb[0].mxu0
      %1986 = vmatprep.mubr.bf16.mxu0 0
      %1987 = vmatmul.mubr.bf16.gmra.mrb[0].mxu0 %v1869
      %v1988 = vpop.f32.mrb[0].mxu0
      %v1989 = vadd.f32 0.0, %v1988
      %v1990 = vpop.f32.mrb[0].mxu0
      %v1991 = vpop.f32.mrb[0].mxu0
      %v1992 = vadd.f32 0.0, %v1991
      %v1993 = vpop.f32.mrb[0].mxu0
      %1994 = vmatprep.mubr.bf16.mxu0 0
      %1995 = vmatmul.mubr.bf16.gmra.mrb[0].mxu0 %v1870
      %v1996 = vpop.f32.mrb[0].mxu0
      %v1997 = vadd.f32 0.0, %v1996
      %v1998 = vpop.f32.mrb[0].mxu0
      %v1999 = vpop.f32.mrb[0].mxu0
      %v2000 = vadd.f32 0.0, %v1999
      %v2001 = vpop.f32.mrb[0].mxu0
      %2002 = vmatprep.mubr.bf16.mxu0 0
      %2003 = vmatmul.mubr.bf16.gmra.mrb[0].mxu0 %v1871
      %v2004 = vpop.f32.mrb[0].mxu0
      %v2005 = vadd.f32 0.0, %v2004
      %v2006 = vpop.f32.mrb[0].mxu0
      %v2007 = vpop.f32.mrb[0].mxu0
      %v2008 = vadd.f32 0.0, %v2007
      %v2009 = vpop.f32.mrb[0].mxu0
      %2010 = vmatprep.mubr.bf16.mxu0 0
      %2011 = vmatmul.mubr.bf16.gmra.mrb[0].mxu0 %v1872
      %v2012 = vpop.f32.mrb[0].mxu0
      %v2013 = vadd.f32 0.0, %v2012
      %v2014 = vpop.f32.mrb[0].mxu0
      %v2015 = vpop.f32.mrb[0].mxu0
      %v2016 = vadd.f32 0.0, %v2015
      %v2017 = vpop.f32.mrb[0].mxu0
      %2018 = vmatprep.mubr.bf16.mxu0 0
      %2019 = vmatmul.mubr.bf16.gmra.mrb[0].mxu0 %v1873
      %v2020 = vpop.f32.mrb[0].mxu0
      %v2021 = vadd.f32 0.0, %v2020
      %v2022 = vpop.f32.mrb[0].mxu0
      %v2023 = vpop.f32.mrb[0].mxu0
      %v2024 = vadd.f32 0.0, %v2023
      %v2025 = vpop.f32.mrb[0].mxu0
      %2026 = vdwg.mxu0
      %v2027 = vadd.f32 %v1753, %v1965
      %v2028 = vadd.f32 %v1754, %v1968
      %v2029 = vadd.f32 %v1755, %v1973
      %v2030 = vadd.f32 %v1756, %v1976
      %v2031 = vadd.f32 %v1757, %v1981
      %v2032 = vadd.f32 %v1758, %v1984
      %v2033 = vadd.f32 %v1759, %v1989
      %v2034 = vadd.f32 %v1760, %v1992
      %v2035 = vadd.f32 %v1761, %v1997
      %v2036 = vadd.f32 %v1762, %v2000
      %v2037 = vadd.f32 %v1763, %v2005
      %v2038 = vadd.f32 %v1764, %v2008
      %v2039 = vadd.f32 %v1765, %v2013
      %v2040 = vadd.f32 %v1766, %v2016
      %v2041 = vadd.f32 %v1767, %v2021
      %v2042 = vadd.f32 %v1768, %v2024
      %s2043 = sadd.s32 %s210, 2
      %s2044 = smul.u32 %s2043, 3
      %s2045 = smul.addr %s2044, 4
      %s2046 = scalar_lea.vmem %s190, %s2045
      %v2047 = vld [vmem:[%s2046] sm:$0xf]
      %v2048 = vld [vmem:[%s2046 + $0x4] sm:$0xf]
      %v2049 = vld [vmem:[%s2046 + $0x8] sm:$0x1]
      %v2050 = vld [vmem:[%s2046 + $0xc] sm:$0xf]
      %v2051 = vld [vmem:[%s2046 + $0x10] sm:$0xf]
      %v2052 = vld [vmem:[%s2046 + $0x14] sm:$0x1]
      %v2053 = vld [vmem:[%s2046 + $0x18] sm:$0xf]
      %v2054 = vld [vmem:[%s2046 + $0x1c] sm:$0xf]
      %v2055 = vld [vmem:[%s2046 + $0x20] sm:$0x1]
      %v2056 = vld [vmem:[%s2046 + $0x24] sm:$0xf]
      %v2057 = vld [vmem:[%s2046 + $0x28] sm:$0xf]
      %v2058 = vld [vmem:[%s2046 + $0x2c] sm:$0x1]
      %v2059 = vld [vmem:[%s2046 + $0x30] sm:$0xf]
      %v2060 = vld [vmem:[%s2046 + $0x34] sm:$0xf]
      %v2061 = vld [vmem:[%s2046 + $0x38] sm:$0x1]
      %v2062 = vld [vmem:[%s2046 + $0x3c] sm:$0xf]
      %v2063 = vld [vmem:[%s2046 + $0x40] sm:$0xf]
      %v2064 = vld [vmem:[%s2046 + $0x44] sm:$0x1]
      %v2065 = vld [vmem:[%s2046 + $0x48] sm:$0xf]
      %v2066 = vld [vmem:[%s2046 + $0x4c] sm:$0xf]
      %v2067 = vld [vmem:[%s2046 + $0x50] sm:$0x1]
      %v2068 = vld [vmem:[%s2046 + $0x54] sm:$0xf]
      %v2069 = vld [vmem:[%s2046 + $0x58] sm:$0xf]
      %v2070 = vld [vmem:[%s2046 + $0x5c] sm:$0x1]
      %s2071 = scalar_lea.vmem %s1, 384
      %v2072 = vld [vmem:[%s2071] sm:$0xf]
      %v2073 = vld [vmem:[%s2071 + $0x4] sm:$0xf]
      %v2074 = vld [vmem:[%s2071 + $0x8] sm:$0xf]
      %v2075 = vld [vmem:[%s2071 + $0xc] sm:$0xf]
      %v2076 = vld [vmem:[%s2071 + $0x10] sm:$0xf]
      %v2077 = vld [vmem:[%s2071 + $0x14] sm:$0xf]
      %v2078 = vld [vmem:[%s2071 + $0x18] sm:$0xf]
      %v2079 = vld [vmem:[%s2071 + $0x1c] sm:$0xf]
      %v2080 = vld [vmem:[%s2071 + $0x20] sm:$0xf]
      %v2081 = vld [vmem:[%s2071 + $0x24] sm:$0xf]
      %v2082 = vld [vmem:[%s2071 + $0x28] sm:$0xf]
      %v2083 = vld [vmem:[%s2071 + $0x2c] sm:$0xf]
      %v2084 = vld [vmem:[%s2071 + $0x30] sm:$0xf]
      %v2085 = vld [vmem:[%s2071 + $0x34] sm:$0xf]
      %v2086 = vld [vmem:[%s2071 + $0x38] sm:$0xf]
      %v2087 = vld [vmem:[%s2071 + $0x3c] sm:$0xf]
      %v2104 = vunpack.c.l.b16 %v2047
      %v2105 = vunpack.c.l.b16 %v2048
      %v2106 = vunpack.c.l.b16 %v2050
      %v2107 = vunpack.c.l.b16 %v2051
      %v2108 = vunpack.c.l.b16 %v2053
      %v2109 = vunpack.c.l.b16 %v2054
      %v2110 = vunpack.c.l.b16 %v2056
      %v2111 = vunpack.c.l.b16 %v2057
      %v2112 = vunpack.c.l.b16 %v2059
      %v2113 = vunpack.c.l.b16 %v2060
      %v2114 = vunpack.c.l.b16 %v2062
      %v2115 = vunpack.c.l.b16 %v2063
      %v2116 = vunpack.c.l.b16 %v2065
      %v2117 = vunpack.c.l.b16 %v2066
      %v2118 = vunpack.c.l.b16 %v2068
      %v2119 = vunpack.c.l.b16 %v2069
      %v2120 = vpack.c.b16 %v2105, %v2104
      %v2121 = vpack.c.b16 %v2107, %v2106
      %v2122 = vpack.c.b16 %v2109, %v2108
      %v2123 = vpack.c.b16 %v2111, %v2110
      %v2124 = vpack.c.b16 %v2113, %v2112
      %v2125 = vpack.c.b16 %v2115, %v2114
      %v2126 = vpack.c.b16 %v2117, %v2116
      %v2127 = vpack.c.b16 %v2119, %v2118
      %v2152 = vunpack.c.l.b16 %v2072
      %v2153 = vunpack.c.l.b16 %v2073
      %v2154 = vunpack.c.l.b16 %v2074
      %v2155 = vunpack.c.l.b16 %v2075
      %v2156 = vunpack.c.l.b16 %v2076
      %v2157 = vunpack.c.l.b16 %v2077
      %v2158 = vunpack.c.l.b16 %v2078
      %v2159 = vunpack.c.l.b16 %v2079
      %v2160 = vunpack.c.l.b16 %v2080
      %v2161 = vunpack.c.l.b16 %v2081
      %v2162 = vunpack.c.l.b16 %v2082
      %v2163 = vunpack.c.l.b16 %v2083
      %v2164 = vunpack.c.l.b16 %v2084
      %v2165 = vunpack.c.l.b16 %v2085
      %v2166 = vunpack.c.l.b16 %v2086
      %v2167 = vunpack.c.l.b16 %v2087
      %v2168 = vpack.c.b16 %v2153, %v2152
      %v2169 = vpack.c.b16 %v2155, %v2154
      %v2170 = vpack.c.b16 %v2157, %v2156
      %v2171 = vpack.c.b16 %v2159, %v2158
      %v2172 = vpack.c.b16 %v2161, %v2160
      %v2173 = vpack.c.b16 %v2163, %v2162
      %v2174 = vpack.c.b16 %v2165, %v2164
      %v2175 = vpack.c.b16 %v2167, %v2166
      %2184 = vmatprep.subr.bf16.mxu0 0
      %2185 = vmatpush1.bf16.msra.mxu0 %v2168
      %2186 = vmatprep.subr.bf16.mxu0 0
      %2187 = vmatpush1.bf16.msra.mxu0 %v2169
      %2188 = vmatprep.subr.bf16.mxu0 0
      %2189 = vmatpush1.bf16.msra.mxu0 %v2170
      %2190 = vmatprep.subr.bf16.mxu0 0
      %2191 = vmatpush1.bf16.msra.mxu0 %v2171
      %2192 = vmatprep.subr.bf16.mxu0 0
      %2193 = vmatpush1.bf16.msra.mxu0 %v2172
      %2194 = vmatprep.subr.bf16.mxu0 0
      %2195 = vmatpush1.bf16.msra.mxu0 %v2173
      %2196 = vmatprep.subr.bf16.mxu0 0
      %2197 = vmatpush1.bf16.msra.mxu0 %v2174
      %2198 = vmatprep.subr.bf16.mxu0 0
      %2199 = vmatpush1.bf16.msra.mxu0 %v2175
      %2200 = vmatprep.subr.bf16.mxu0 0
      %2201 = vmatpush1.bf16.msra.mxu0 0
      %2202 = vmatprep.subr.bf16.mxu0 0
      %2203 = vmatpush1.bf16.msra.mxu0 0
      %2204 = vmatprep.subr.bf16.mxu0 0
      %2205 = vmatpush1.bf16.msra.mxu0 0
      %2206 = vmatprep.subr.bf16.mxu0 0
      %2207 = vmatpush1.bf16.msra.mxu0 0
      %2208 = vmatprep.subr.bf16.mxu0 0
      %2209 = vmatpush1.bf16.msra.mxu0 0
      %2210 = vmatprep.subr.bf16.mxu0 0
      %2211 = vmatpush1.bf16.msra.mxu0 0
      %2212 = vmatprep.subr.bf16.mxu0 0
      %2213 = vmatpush1.bf16.msra.mxu0 0
      %2214 = vmatprep.subr.bf16.mxu0 0
      %2215 = vmatpush1.bf16.msra.mxu0 0
      %2216 = vmatprep.mubr.bf16.mxu0 0
      %2217 = vmatmul.mubr.bf16.gmra.mrb[0].mxu0 %v2120
      %v2218 = vpop.f32.mrb[0].mxu0
      %v2219 = vadd.f32 0.0, %v2218
      %v2220 = vpop.f32.mrb[0].mxu0
      %v2221 = vpop.f32.mrb[0].mxu0
      %v2222 = vadd.f32 0.0, %v2221
      %v2223 = vpop.f32.mrb[0].mxu0
      %2224 = vmatprep.mubr.bf16.mxu0 0
      %2225 = vmatmul.mubr.bf16.gmra.mrb[0].mxu0 %v2121
      %v2226 = vpop.f32.mrb[0].mxu0
      %v2227 = vadd.f32 0.0, %v2226
      %v2228 = vpop.f32.mrb[0].mxu0
      %v2229 = vpop.f32.mrb[0].mxu0
      %v2230 = vadd.f32 0.0, %v2229
      %v2231 = vpop.f32.mrb[0].mxu0
      %2232 = vmatprep.mubr.bf16.mxu0 0
      %2233 = vmatmul.mubr.bf16.gmra.mrb[0].mxu0 %v2122
      %v2234 = vpop.f32.mrb[0].mxu0
      %v2235 = vadd.f32 0.0, %v2234
      %v2236 = vpop.f32.mrb[0].mxu0
      %v2237 = vpop.f32.mrb[0].mxu0
      %v2238 = vadd.f32 0.0, %v2237
      %v2239 = vpop.f32.mrb[0].mxu0
      %2240 = vmatprep.mubr.bf16.mxu0 0
      %2241 = vmatmul.mubr.bf16.gmra.mrb[0].mxu0 %v2123
      %v2242 = vpop.f32.mrb[0].mxu0
      %v2243 = vadd.f32 0.0, %v2242
      %v2244 = vpop.f32.mrb[0].mxu0
      %v2245 = vpop.f32.mrb[0].mxu0
      %v2246 = vadd.f32 0.0, %v2245
      %v2247 = vpop.f32.mrb[0].mxu0
      %2248 = vmatprep.mubr.bf16.mxu0 0
      %2249 = vmatmul.mubr.bf16.gmra.mrb[0].mxu0 %v2124
      %v2250 = vpop.f32.mrb[0].mxu0
      %v2251 = vadd.f32 0.0, %v2250
      %v2252 = vpop.f32.mrb[0].mxu0
      %v2253 = vpop.f32.mrb[0].mxu0
      %v2254 = vadd.f32 0.0, %v2253
      %v2255 = vpop.f32.mrb[0].mxu0
      %2256 = vmatprep.mubr.bf16.mxu0 0
      %2257 = vmatmul.mubr.bf16.gmra.mrb[0].mxu0 %v2125
      %v2258 = vpop.f32.mrb[0].mxu0
      %v2259 = vadd.f32 0.0, %v2258
      %v2260 = vpop.f32.mrb[0].mxu0
      %v2261 = vpop.f32.mrb[0].mxu0
      %v2262 = vadd.f32 0.0, %v2261
      %v2263 = vpop.f32.mrb[0].mxu0
      %2264 = vmatprep.mubr.bf16.mxu0 0
      %2265 = vmatmul.mubr.bf16.gmra.mrb[0].mxu0 %v2126
      %v2266 = vpop.f32.mrb[0].mxu0
      %v2267 = vadd.f32 0.0, %v2266
      %v2268 = vpop.f32.mrb[0].mxu0
      %v2269 = vpop.f32.mrb[0].mxu0
      %v2270 = vadd.f32 0.0, %v2269
      %v2271 = vpop.f32.mrb[0].mxu0
      %2272 = vmatprep.mubr.bf16.mxu0 0
      %2273 = vmatmul.mubr.bf16.gmra.mrb[0].mxu0 %v2127
      %v2274 = vpop.f32.mrb[0].mxu0
      %v2275 = vadd.f32 0.0, %v2274
      %v2276 = vpop.f32.mrb[0].mxu0
      %v2277 = vpop.f32.mrb[0].mxu0
      %v2278 = vadd.f32 0.0, %v2277
      %v2279 = vpop.f32.mrb[0].mxu0
      %2280 = vdwg.mxu0
      %v2281 = vadd.f32 %v2027, %v2219
      %v2282 = vadd.f32 %v2028, %v2222
      %v2283 = vadd.f32 %v2029, %v2227
      %v2284 = vadd.f32 %v2030, %v2230
      %v2285 = vadd.f32 %v2031, %v2235
      %v2286 = vadd.f32 %v2032, %v2238
      %v2287 = vadd.f32 %v2033, %v2243
      %v2288 = vadd.f32 %v2034, %v2246
      %v2289 = vadd.f32 %v2035, %v2251
      %v2290 = vadd.f32 %v2036, %v2254
      %v2291 = vadd.f32 %v2037, %v2259
      %v2292 = vadd.f32 %v2038, %v2262
      %v2293 = vadd.f32 %v2039, %v2267
      %v2294 = vadd.f32 %v2040, %v2270
      %v2295 = vadd.f32 %v2041, %v2275
      %v2296 = vadd.f32 %v2042, %v2278
      %v2298 = vshrl.u32 %v2047, 16
      %v2300 = vrot.slane %v2298, 4
      %v2301 = vshll.u32 %v2047, 16
      %v2303 = vrot.slane %v2301, 5
      %v2304 = vor.u32 %v2300, %v2303
      %v2305 = vrot.slane %v2304, 4
      %v2307 = vshll.u32 %v2048, 16
      %v2309 = vrot.slane %v2307, 5
      %v2310 = vsel %vm256, %v2305, %v2309
      %v2311 = vshrl.u32 %v2048, 16
      %v2313 = vrot.slane %v2311, 4
      %v2314 = vor.u32 %v2313, %v2309
      %v2315 = vrot.slane %v2314, 4
      %v2317 = vshll.u32 %v2049, 16
      %v2319 = vrot.slane %v2317, 5
      %v2320 = vsel %vm256, %v2315, %v2319
      %v2322 = vshrl.u32 %v2050, 16
      %v2324 = vrot.slane %v2322, 4
      %v2325 = vshll.u32 %v2050, 16
      %v2327 = vrot.slane %v2325, 5
      %v2328 = vor.u32 %v2324, %v2327
      %v2329 = vrot.slane %v2328, 4
      %v2331 = vshll.u32 %v2051, 16
      %v2333 = vrot.slane %v2331, 5
      %v2334 = vsel %vm256, %v2329, %v2333
      %v2335 = vshrl.u32 %v2051, 16
      %v2337 = vrot.slane %v2335, 4
      %v2338 = vor.u32 %v2337, %v2333
      %v2339 = vrot.slane %v2338, 4
      %v2341 = vshll.u32 %v2052, 16
      %v2343 = vrot.slane %v2341, 5
      %v2344 = vsel %vm256, %v2339, %v2343
      %v2346 = vshrl.u32 %v2053, 16
      %v2348 = vrot.slane %v2346, 4
      %v2349 = vshll.u32 %v2053, 16
      %v2351 = vrot.slane %v2349, 5
      %v2352 = vor.u32 %v2348, %v2351
      %v2353 = vrot.slane %v2352, 4
      %v2355 = vshll.u32 %v2054, 16
      %v2357 = vrot.slane %v2355, 5
      %v2358 = vsel %vm256, %v2353, %v2357
      %v2359 = vshrl.u32 %v2054, 16
      %v2361 = vrot.slane %v2359, 4
      %v2362 = vor.u32 %v2361, %v2357
      %v2363 = vrot.slane %v2362, 4
      %v2365 = vshll.u32 %v2055, 16
      %v2367 = vrot.slane %v2365, 5
      %v2368 = vsel %vm256, %v2363, %v2367
      %v2370 = vshrl.u32 %v2056, 16
      %v2372 = vrot.slane %v2370, 4
      %v2373 = vshll.u32 %v2056, 16
      %v2375 = vrot.slane %v2373, 5
      %v2376 = vor.u32 %v2372, %v2375
      %v2377 = vrot.slane %v2376, 4
      %v2379 = vshll.u32 %v2057, 16
      %v2381 = vrot.slane %v2379, 5
      %v2382 = vsel %vm256, %v2377, %v2381
      %v2383 = vshrl.u32 %v2057, 16
      %v2385 = vrot.slane %v2383, 4
      %v2386 = vor.u32 %v2385, %v2381
      %v2387 = vrot.slane %v2386, 4
      %v2389 = vshll.u32 %v2058, 16
      %v2391 = vrot.slane %v2389, 5
      %v2392 = vsel %vm256, %v2387, %v2391
      %v2394 = vshrl.u32 %v2059, 16
      %v2396 = vrot.slane %v2394, 4
      %v2397 = vshll.u32 %v2059, 16
      %v2399 = vrot.slane %v2397, 5
      %v2400 = vor.u32 %v2396, %v2399
      %v2401 = vrot.slane %v2400, 4
      %v2403 = vshll.u32 %v2060, 16
      %v2405 = vrot.slane %v2403, 5
      %v2406 = vsel %vm256, %v2401, %v2405
      %v2407 = vshrl.u32 %v2060, 16
      %v2409 = vrot.slane %v2407, 4
      %v2410 = vor.u32 %v2409, %v2405
      %v2411 = vrot.slane %v2410, 4
      %v2413 = vshll.u32 %v2061, 16
      %v2415 = vrot.slane %v2413, 5
      %v2416 = vsel %vm256, %v2411, %v2415
      %v2418 = vshrl.u32 %v2062, 16
      %v2420 = vrot.slane %v2418, 4
      %v2421 = vshll.u32 %v2062, 16
      %v2423 = vrot.slane %v2421, 5
      %v2424 = vor.u32 %v2420, %v2423
      %v2425 = vrot.slane %v2424, 4
      %v2427 = vshll.u32 %v2063, 16
      %v2429 = vrot.slane %v2427, 5
      %v2430 = vsel %vm256, %v2425, %v2429
      %v2431 = vshrl.u32 %v2063, 16
      %v2433 = vrot.slane %v2431, 4
      %v2434 = vor.u32 %v2433, %v2429
      %v2435 = vrot.slane %v2434, 4
      %v2437 = vshll.u32 %v2064, 16
      %v2439 = vrot.slane %v2437, 5
      %v2440 = vsel %vm256, %v2435, %v2439
      %v2442 = vshrl.u32 %v2065, 16
      %v2444 = vrot.slane %v2442, 4
      %v2445 = vshll.u32 %v2065, 16
      %v2447 = vrot.slane %v2445, 5
      %v2448 = vor.u32 %v2444, %v2447
      %v2449 = vrot.slane %v2448, 4
      %v2451 = vshll.u32 %v2066, 16
      %v2453 = vrot.slane %v2451, 5
      %v2454 = vsel %vm256, %v2449, %v2453
      %v2455 = vshrl.u32 %v2066, 16
      %v2457 = vrot.slane %v2455, 4
      %v2458 = vor.u32 %v2457, %v2453
      %v2459 = vrot.slane %v2458, 4
      %v2461 = vshll.u32 %v2067, 16
      %v2463 = vrot.slane %v2461, 5
      %v2464 = vsel %vm256, %v2459, %v2463
      %v2466 = vshrl.u32 %v2068, 16
      %v2468 = vrot.slane %v2466, 4
      %v2469 = vshll.u32 %v2068, 16
      %v2471 = vrot.slane %v2469, 5
      %v2472 = vor.u32 %v2468, %v2471
      %v2473 = vrot.slane %v2472, 4
      %v2475 = vshll.u32 %v2069, 16
      %v2477 = vrot.slane %v2475, 5
      %v2478 = vsel %vm256, %v2473, %v2477
      %v2479 = vshrl.u32 %v2069, 16
      %v2481 = vrot.slane %v2479, 4
      %v2482 = vor.u32 %v2481, %v2477
      %v2483 = vrot.slane %v2482, 4
      %v2485 = vshll.u32 %v2070, 16
      %v2487 = vrot.slane %v2485, 5
      %v2488 = vsel %vm256, %v2483, %v2487
      %s2489 = scalar_lea.vmem %s1, 448
      %v2490 = vld [vmem:[%s2489] sm:$0xf]
      %v2491 = vld [vmem:[%s2489 + $0x4] sm:$0xf]
      %v2492 = vld [vmem:[%s2489 + $0x8] sm:$0xf]
      %v2493 = vld [vmem:[%s2489 + $0xc] sm:$0xf]
      %v2494 = vld [vmem:[%s2489 + $0x10] sm:$0xf]
      %v2495 = vld [vmem:[%s2489 + $0x14] sm:$0xf]
      %v2496 = vld [vmem:[%s2489 + $0x18] sm:$0xf]
      %v2497 = vld [vmem:[%s2489 + $0x1c] sm:$0xf]
      %v2498 = vld [vmem:[%s2489 + $0x20] sm:$0xf]
      %v2499 = vld [vmem:[%s2489 + $0x24] sm:$0xf]
      %v2500 = vld [vmem:[%s2489 + $0x28] sm:$0xf]
      %v2501 = vld [vmem:[%s2489 + $0x2c] sm:$0xf]
      %v2502 = vld [vmem:[%s2489 + $0x30] sm:$0xf]
      %v2503 = vld [vmem:[%s2489 + $0x34] sm:$0xf]
      %v2504 = vld [vmem:[%s2489 + $0x38] sm:$0xf]
      %v2505 = vld [vmem:[%s2489 + $0x3c] sm:$0xf]
      %v2506 = vunpack.c.l.b16 %v2310
      %v2507 = vunpack.c.l.b16 %v2320
      %v2508 = vunpack.c.l.b16 %v2334
      %v2509 = vunpack.c.l.b16 %v2344
      %v2510 = vunpack.c.l.b16 %v2358
      %v2511 = vunpack.c.l.b16 %v2368
      %v2512 = vunpack.c.l.b16 %v2382
      %v2513 = vunpack.c.l.b16 %v2392
      %v2514 = vunpack.c.l.b16 %v2406
      %v2515 = vunpack.c.l.b16 %v2416
      %v2516 = vunpack.c.l.b16 %v2430
      %v2517 = vunpack.c.l.b16 %v2440
      %v2518 = vunpack.c.l.b16 %v2454
      %v2519 = vunpack.c.l.b16 %v2464
      %v2520 = vunpack.c.l.b16 %v2478
      %v2521 = vunpack.c.l.b16 %v2488
      %v2522 = vpack.c.b16 %v2507, %v2506
      %v2523 = vpack.c.b16 %v2509, %v2508
      %v2524 = vpack.c.b16 %v2511, %v2510
      %v2525 = vpack.c.b16 %v2513, %v2512
      %v2526 = vpack.c.b16 %v2515, %v2514
      %v2527 = vpack.c.b16 %v2517, %v2516
      %v2528 = vpack.c.b16 %v2519, %v2518
      %v2529 = vpack.c.b16 %v2521, %v2520
      %v2554 = vunpack.c.l.b16 %v2490
      %v2555 = vunpack.c.l.b16 %v2491
      %v2556 = vunpack.c.l.b16 %v2492
      %v2557 = vunpack.c.l.b16 %v2493
      %v2558 = vunpack.c.l.b16 %v2494
      %v2559 = vunpack.c.l.b16 %v2495
      %v2560 = vunpack.c.l.b16 %v2496
      %v2561 = vunpack.c.l.b16 %v2497
      %v2562 = vunpack.c.l.b16 %v2498
      %v2563 = vunpack.c.l.b16 %v2499
      %v2564 = vunpack.c.l.b16 %v2500
      %v2565 = vunpack.c.l.b16 %v2501
      %v2566 = vunpack.c.l.b16 %v2502
      %v2567 = vunpack.c.l.b16 %v2503
      %v2568 = vunpack.c.l.b16 %v2504
      %v2569 = vunpack.c.l.b16 %v2505
      %v2570 = vpack.c.b16 %v2555, %v2554
      %v2571 = vpack.c.b16 %v2557, %v2556
      %v2572 = vpack.c.b16 %v2559, %v2558
      %v2573 = vpack.c.b16 %v2561, %v2560
      %v2574 = vpack.c.b16 %v2563, %v2562
      %v2575 = vpack.c.b16 %v2565, %v2564
      %v2576 = vpack.c.b16 %v2567, %v2566
      %v2577 = vpack.c.b16 %v2569, %v2568
      %2586 = vmatprep.subr.bf16.mxu0 0
      %2587 = vmatpush1.bf16.msra.mxu0 %v2570
      %2588 = vmatprep.subr.bf16.mxu0 0
      %2589 = vmatpush1.bf16.msra.mxu0 %v2571
      %2590 = vmatprep.subr.bf16.mxu0 0
      %2591 = vmatpush1.bf16.msra.mxu0 %v2572
      %2592 = vmatprep.subr.bf16.mxu0 0
      %2593 = vmatpush1.bf16.msra.mxu0 %v2573
      %2594 = vmatprep.subr.bf16.mxu0 0
      %2595 = vmatpush1.bf16.msra.mxu0 %v2574
      %2596 = vmatprep.subr.bf16.mxu0 0
      %2597 = vmatpush1.bf16.msra.mxu0 %v2575
      %2598 = vmatprep.subr.bf16.mxu0 0
      %2599 = vmatpush1.bf16.msra.mxu0 %v2576
      %2600 = vmatprep.subr.bf16.mxu0 0
      %2601 = vmatpush1.bf16.msra.mxu0 %v2577
      %2602 = vmatprep.subr.bf16.mxu0 0
      %2603 = vmatpush1.bf16.msra.mxu0 0
      %2604 = vmatprep.subr.bf16.mxu0 0
      %2605 = vmatpush1.bf16.msra.mxu0 0
      %2606 = vmatprep.subr.bf16.mxu0 0
      %2607 = vmatpush1.bf16.msra.mxu0 0
      %2608 = vmatprep.subr.bf16.mxu0 0
      %2609 = vmatpush1.bf16.msra.mxu0 0
      %2610 = vmatprep.subr.bf16.mxu0 0
      %2611 = vmatpush1.bf16.msra.mxu0 0
      %2612 = vmatprep.subr.bf16.mxu0 0
      %2613 = vmatpush1.bf16.msra.mxu0 0
      %2614 = vmatprep.subr.bf16.mxu0 0
      %2615 = vmatpush1.bf16.msra.mxu0 0
      %2616 = vmatprep.subr.bf16.mxu0 0
      %2617 = vmatpush1.bf16.msra.mxu0 0
      %2618 = vmatprep.mubr.bf16.mxu0 0
      %2619 = vmatmul.mubr.bf16.gmra.mrb[0].mxu0 %v2522
      %v2620 = vpop.f32.mrb[0].mxu0
      %v2621 = vadd.f32 0.0, %v2620
      %v2622 = vpop.f32.mrb[0].mxu0
      %v2623 = vpop.f32.mrb[0].mxu0
      %v2624 = vadd.f32 0.0, %v2623
      %v2625 = vpop.f32.mrb[0].mxu0
      %2626 = vmatprep.mubr.bf16.mxu0 0
      %2627 = vmatmul.mubr.bf16.gmra.mrb[0].mxu0 %v2523
      %v2628 = vpop.f32.mrb[0].mxu0
      %v2629 = vadd.f32 0.0, %v2628
      %v2630 = vpop.f32.mrb[0].mxu0
      %v2631 = vpop.f32.mrb[0].mxu0
      %v2632 = vadd.f32 0.0, %v2631
      %v2633 = vpop.f32.mrb[0].mxu0
      %2634 = vmatprep.mubr.bf16.mxu0 0
      %2635 = vmatmul.mubr.bf16.gmra.mrb[0].mxu0 %v2524
      %v2636 = vpop.f32.mrb[0].mxu0
      %v2637 = vadd.f32 0.0, %v2636
      %v2638 = vpop.f32.mrb[0].mxu0
      %v2639 = vpop.f32.mrb[0].mxu0
      %v2640 = vadd.f32 0.0, %v2639
      %v2641 = vpop.f32.mrb[0].mxu0
      %2642 = vmatprep.mubr.bf16.mxu0 0
      %2643 = vmatmul.mubr.bf16.gmra.mrb[0].mxu0 %v2525
      %v2644 = vpop.f32.mrb[0].mxu0
      %v2645 = vadd.f32 0.0, %v2644
      %v2646 = vpop.f32.mrb[0].mxu0
      %v2647 = vpop.f32.mrb[0].mxu0
      %v2648 = vadd.f32 0.0, %v2647
      %v2649 = vpop.f32.mrb[0].mxu0
      %2650 = vmatprep.mubr.bf16.mxu0 0
      %2651 = vmatmul.mubr.bf16.gmra.mrb[0].mxu0 %v2526
      %v2652 = vpop.f32.mrb[0].mxu0
      %v2653 = vadd.f32 0.0, %v2652
      %v2654 = vpop.f32.mrb[0].mxu0
      %v2655 = vpop.f32.mrb[0].mxu0
      %v2656 = vadd.f32 0.0, %v2655
      %v2657 = vpop.f32.mrb[0].mxu0
      %2658 = vmatprep.mubr.bf16.mxu0 0
      %2659 = vmatmul.mubr.bf16.gmra.mrb[0].mxu0 %v2527
      %v2660 = vpop.f32.mrb[0].mxu0
      %v2661 = vadd.f32 0.0, %v2660
      %v2662 = vpop.f32.mrb[0].mxu0
      %v2663 = vpop.f32.mrb[0].mxu0
      %v2664 = vadd.f32 0.0, %v2663
      %v2665 = vpop.f32.mrb[0].mxu0
      %2666 = vmatprep.mubr.bf16.mxu0 0
      %2667 = vmatmul.mubr.bf16.gmra.mrb[0].mxu0 %v2528
      %v2668 = vpop.f32.mrb[0].mxu0
      %v2669 = vadd.f32 0.0, %v2668
      %v2670 = vpop.f32.mrb[0].mxu0
      %v2671 = vpop.f32.mrb[0].mxu0
      %v2672 = vadd.f32 0.0, %v2671
      %v2673 = vpop.f32.mrb[0].mxu0
      %2674 = vmatprep.mubr.bf16.mxu0 0
      %2675 = vmatmul.mubr.bf16.gmra.mrb[0].mxu0 %v2529
      %v2676 = vpop.f32.mrb[0].mxu0
      %v2677 = vadd.f32 0.0, %v2676
      %v2678 = vpop.f32.mrb[0].mxu0
      %v2679 = vpop.f32.mrb[0].mxu0
      %v2680 = vadd.f32 0.0, %v2679
      %v2681 = vpop.f32.mrb[0].mxu0
      %2682 = vdwg.mxu0
      %v2683 = vadd.f32 %v2281, %v2621
      %v2684 = vadd.f32 %v2282, %v2624
      %v2685 = vadd.f32 %v2283, %v2629
      %v2686 = vadd.f32 %v2284, %v2632
      %v2687 = vadd.f32 %v2285, %v2637
      %v2688 = vadd.f32 %v2286, %v2640
      %v2689 = vadd.f32 %v2287, %v2645
      %v2690 = vadd.f32 %v2288, %v2648
      %v2691 = vadd.f32 %v2289, %v2653
      %v2692 = vadd.f32 %v2290, %v2656
      %v2693 = vadd.f32 %v2291, %v2661
      %v2694 = vadd.f32 %v2292, %v2664
      %v2695 = vadd.f32 %v2293, %v2669
      %v2696 = vadd.f32 %v2294, %v2672
      %v2697 = vadd.f32 %v2295, %v2677
      %v2698 = vadd.f32 %v2296, %v2680
      %v2707 = vrot.slane %v2047, 5
      %v2708 = vrot.slane %v2707, 4
      %v2709 = vrot.slane %v2048, 5
      %v2710 = vsel %vm846, %v2708, %v2709
      %v2711 = vrot.slane %v2709, 4
      %v2712 = vrot.slane %v2049, 5
      %v2713 = vsel %vm846, %v2711, %v2712
      %v2714 = vrot.slane %v2050, 5
      %v2715 = vrot.slane %v2714, 4
      %v2716 = vrot.slane %v2051, 5
      %v2717 = vsel %vm846, %v2715, %v2716
      %v2718 = vrot.slane %v2716, 4
      %v2719 = vrot.slane %v2052, 5
      %v2720 = vsel %vm846, %v2718, %v2719
      %v2721 = vrot.slane %v2053, 5
      %v2722 = vrot.slane %v2721, 4
      %v2723 = vrot.slane %v2054, 5
      %v2724 = vsel %vm846, %v2722, %v2723
      %v2725 = vrot.slane %v2723, 4
      %v2726 = vrot.slane %v2055, 5
      %v2727 = vsel %vm846, %v2725, %v2726
      %v2728 = vrot.slane %v2056, 5
      %v2729 = vrot.slane %v2728, 4
      %v2730 = vrot.slane %v2057, 5
      %v2731 = vsel %vm846, %v2729, %v2730
      %v2732 = vrot.slane %v2730, 4
      %v2733 = vrot.slane %v2058, 5
      %v2734 = vsel %vm846, %v2732, %v2733
      %v2735 = vrot.slane %v2059, 5
      %v2736 = vrot.slane %v2735, 4
      %v2737 = vrot.slane %v2060, 5
      %v2738 = vsel %vm846, %v2736, %v2737
      %v2739 = vrot.slane %v2737, 4
      %v2740 = vrot.slane %v2061, 5
      %v2741 = vsel %vm846, %v2739, %v2740
      %v2742 = vrot.slane %v2062, 5
      %v2743 = vrot.slane %v2742, 4
      %v2744 = vrot.slane %v2063, 5
      %v2745 = vsel %vm846, %v2743, %v2744
      %v2746 = vrot.slane %v2744, 4
      %v2747 = vrot.slane %v2064, 5
      %v2748 = vsel %vm846, %v2746, %v2747
      %v2749 = vrot.slane %v2065, 5
      %v2750 = vrot.slane %v2749, 4
      %v2751 = vrot.slane %v2066, 5
      %v2752 = vsel %vm846, %v2750, %v2751
      %v2753 = vrot.slane %v2751, 4
      %v2754 = vrot.slane %v2067, 5
      %v2755 = vsel %vm846, %v2753, %v2754
      %v2756 = vrot.slane %v2068, 5
      %v2757 = vrot.slane %v2756, 4
      %v2758 = vrot.slane %v2069, 5
      %v2759 = vsel %vm846, %v2757, %v2758
      %v2760 = vrot.slane %v2758, 4
      %v2761 = vrot.slane %v2070, 5
      %v2762 = vsel %vm846, %v2760, %v2761
      %s2763 = scalar_lea.vmem %s1, 512
      %v2764 = vld [vmem:[%s2763] sm:$0xf]
      %v2765 = vld [vmem:[%s2763 + $0x4] sm:$0xf]
      %v2766 = vld [vmem:[%s2763 + $0x8] sm:$0xf]
      %v2767 = vld [vmem:[%s2763 + $0xc] sm:$0xf]
      %v2768 = vld [vmem:[%s2763 + $0x10] sm:$0xf]
      %v2769 = vld [vmem:[%s2763 + $0x14] sm:$0xf]
      %v2770 = vld [vmem:[%s2763 + $0x18] sm:$0xf]
      %v2771 = vld [vmem:[%s2763 + $0x1c] sm:$0xf]
      %v2772 = vld [vmem:[%s2763 + $0x20] sm:$0xf]
      %v2773 = vld [vmem:[%s2763 + $0x24] sm:$0xf]
      %v2774 = vld [vmem:[%s2763 + $0x28] sm:$0xf]
      %v2775 = vld [vmem:[%s2763 + $0x2c] sm:$0xf]
      %v2776 = vld [vmem:[%s2763 + $0x30] sm:$0xf]
      %v2777 = vld [vmem:[%s2763 + $0x34] sm:$0xf]
      %v2778 = vld [vmem:[%s2763 + $0x38] sm:$0xf]
      %v2779 = vld [vmem:[%s2763 + $0x3c] sm:$0xf]
      %v2780 = vunpack.c.l.b16 %v2710
      %v2781 = vunpack.c.l.b16 %v2713
      %v2782 = vunpack.c.l.b16 %v2717
      %v2783 = vunpack.c.l.b16 %v2720
      %v2784 = vunpack.c.l.b16 %v2724
      %v2785 = vunpack.c.l.b16 %v2727
      %v2786 = vunpack.c.l.b16 %v2731
      %v2787 = vunpack.c.l.b16 %v2734
      %v2788 = vunpack.c.l.b16 %v2738
      %v2789 = vunpack.c.l.b16 %v2741
      %v2790 = vunpack.c.l.b16 %v2745
      %v2791 = vunpack.c.l.b16 %v2748
      %v2792 = vunpack.c.l.b16 %v2752
      %v2793 = vunpack.c.l.b16 %v2755
      %v2794 = vunpack.c.l.b16 %v2759
      %v2795 = vunpack.c.l.b16 %v2762
      %v2796 = vpack.c.b16 %v2781, %v2780
      %v2797 = vpack.c.b16 %v2783, %v2782
      %v2798 = vpack.c.b16 %v2785, %v2784
      %v2799 = vpack.c.b16 %v2787, %v2786
      %v2800 = vpack.c.b16 %v2789, %v2788
      %v2801 = vpack.c.b16 %v2791, %v2790
      %v2802 = vpack.c.b16 %v2793, %v2792
      %v2803 = vpack.c.b16 %v2795, %v2794
      %v2828 = vunpack.c.l.b16 %v2764
      %v2829 = vunpack.c.l.b16 %v2765
      %v2830 = vunpack.c.l.b16 %v2766
      %v2831 = vunpack.c.l.b16 %v2767
      %v2832 = vunpack.c.l.b16 %v2768
      %v2833 = vunpack.c.l.b16 %v2769
      %v2834 = vunpack.c.l.b16 %v2770
      %v2835 = vunpack.c.l.b16 %v2771
      %v2836 = vunpack.c.l.b16 %v2772
      %v2837 = vunpack.c.l.b16 %v2773
      %v2838 = vunpack.c.l.b16 %v2774
      %v2839 = vunpack.c.l.b16 %v2775
      %v2840 = vunpack.c.l.b16 %v2776
      %v2841 = vunpack.c.l.b16 %v2777
      %v2842 = vunpack.c.l.b16 %v2778
      %v2843 = vunpack.c.l.b16 %v2779
      %v2844 = vpack.c.b16 %v2829, %v2828
      %v2845 = vpack.c.b16 %v2831, %v2830
      %v2846 = vpack.c.b16 %v2833, %v2832
      %v2847 = vpack.c.b16 %v2835, %v2834
      %v2848 = vpack.c.b16 %v2837, %v2836
      %v2849 = vpack.c.b16 %v2839, %v2838
      %v2850 = vpack.c.b16 %v2841, %v2840
      %v2851 = vpack.c.b16 %v2843, %v2842
      %2860 = vmatprep.subr.bf16.mxu0 0
      %2861 = vmatpush1.bf16.msra.mxu0 %v2844
      %2862 = vmatprep.subr.bf16.mxu0 0
      %2863 = vmatpush1.bf16.msra.mxu0 %v2845
      %2864 = vmatprep.subr.bf16.mxu0 0
      %2865 = vmatpush1.bf16.msra.mxu0 %v2846
      %2866 = vmatprep.subr.bf16.mxu0 0
      %2867 = vmatpush1.bf16.msra.mxu0 %v2847
      %2868 = vmatprep.subr.bf16.mxu0 0
      %2869 = vmatpush1.bf16.msra.mxu0 %v2848
      %2870 = vmatprep.subr.bf16.mxu0 0
      %2871 = vmatpush1.bf16.msra.mxu0 %v2849
      %2872 = vmatprep.subr.bf16.mxu0 0
      %2873 = vmatpush1.bf16.msra.mxu0 %v2850
      %2874 = vmatprep.subr.bf16.mxu0 0
      %2875 = vmatpush1.bf16.msra.mxu0 %v2851
      %2876 = vmatprep.subr.bf16.mxu0 0
      %2877 = vmatpush1.bf16.msra.mxu0 0
      %2878 = vmatprep.subr.bf16.mxu0 0
      %2879 = vmatpush1.bf16.msra.mxu0 0
      %2880 = vmatprep.subr.bf16.mxu0 0
      %2881 = vmatpush1.bf16.msra.mxu0 0
      %2882 = vmatprep.subr.bf16.mxu0 0
      %2883 = vmatpush1.bf16.msra.mxu0 0
      %2884 = vmatprep.subr.bf16.mxu0 0
      %2885 = vmatpush1.bf16.msra.mxu0 0
      %2886 = vmatprep.subr.bf16.mxu0 0
      %2887 = vmatpush1.bf16.msra.mxu0 0
      %2888 = vmatprep.subr.bf16.mxu0 0
      %2889 = vmatpush1.bf16.msra.mxu0 0
      %2890 = vmatprep.subr.bf16.mxu0 0
      %2891 = vmatpush1.bf16.msra.mxu0 0
      %2892 = vmatprep.mubr.bf16.mxu0 0
      %2893 = vmatmul.mubr.bf16.gmra.mrb[0].mxu0 %v2796
      %v2894 = vpop.f32.mrb[0].mxu0
      %v2895 = vadd.f32 0.0, %v2894
      %v2896 = vpop.f32.mrb[0].mxu0
      %v2897 = vpop.f32.mrb[0].mxu0
      %v2898 = vadd.f32 0.0, %v2897
      %v2899 = vpop.f32.mrb[0].mxu0
      %2900 = vmatprep.mubr.bf16.mxu0 0
      %2901 = vmatmul.mubr.bf16.gmra.mrb[0].mxu0 %v2797
      %v2902 = vpop.f32.mrb[0].mxu0
      %v2903 = vadd.f32 0.0, %v2902
      %v2904 = vpop.f32.mrb[0].mxu0
      %v2905 = vpop.f32.mrb[0].mxu0
      %v2906 = vadd.f32 0.0, %v2905
      %v2907 = vpop.f32.mrb[0].mxu0
      %2908 = vmatprep.mubr.bf16.mxu0 0
      %2909 = vmatmul.mubr.bf16.gmra.mrb[0].mxu0 %v2798
      %v2910 = vpop.f32.mrb[0].mxu0
      %v2911 = vadd.f32 0.0, %v2910
      %v2912 = vpop.f32.mrb[0].mxu0
      %v2913 = vpop.f32.mrb[0].mxu0
      %v2914 = vadd.f32 0.0, %v2913
      %v2915 = vpop.f32.mrb[0].mxu0
      %2916 = vmatprep.mubr.bf16.mxu0 0
      %2917 = vmatmul.mubr.bf16.gmra.mrb[0].mxu0 %v2799
      %v2918 = vpop.f32.mrb[0].mxu0
      %v2919 = vadd.f32 0.0, %v2918
      %v2920 = vpop.f32.mrb[0].mxu0
      %v2921 = vpop.f32.mrb[0].mxu0
      %v2922 = vadd.f32 0.0, %v2921
      %v2923 = vpop.f32.mrb[0].mxu0
      %2924 = vmatprep.mubr.bf16.mxu0 0
      %2925 = vmatmul.mubr.bf16.gmra.mrb[0].mxu0 %v2800
      %v2926 = vpop.f32.mrb[0].mxu0
      %v2927 = vadd.f32 0.0, %v2926
      %v2928 = vpop.f32.mrb[0].mxu0
      %v2929 = vpop.f32.mrb[0].mxu0
      %v2930 = vadd.f32 0.0, %v2929
      %v2931 = vpop.f32.mrb[0].mxu0
      %2932 = vmatprep.mubr.bf16.mxu0 0
      %2933 = vmatmul.mubr.bf16.gmra.mrb[0].mxu0 %v2801
      %v2934 = vpop.f32.mrb[0].mxu0
      %v2935 = vadd.f32 0.0, %v2934
      %v2936 = vpop.f32.mrb[0].mxu0
      %v2937 = vpop.f32.mrb[0].mxu0
      %v2938 = vadd.f32 0.0, %v2937
      %v2939 = vpop.f32.mrb[0].mxu0
      %2940 = vmatprep.mubr.bf16.mxu0 0
      %2941 = vmatmul.mubr.bf16.gmra.mrb[0].mxu0 %v2802
      %v2942 = vpop.f32.mrb[0].mxu0
      %v2943 = vadd.f32 0.0, %v2942
      %v2944 = vpop.f32.mrb[0].mxu0
      %v2945 = vpop.f32.mrb[0].mxu0
      %v2946 = vadd.f32 0.0, %v2945
      %v2947 = vpop.f32.mrb[0].mxu0
      %2948 = vmatprep.mubr.bf16.mxu0 0
      %2949 = vmatmul.mubr.bf16.gmra.mrb[0].mxu0 %v2803
      %v2950 = vpop.f32.mrb[0].mxu0
      %v2951 = vadd.f32 0.0, %v2950
      %v2952 = vpop.f32.mrb[0].mxu0
      %v2953 = vpop.f32.mrb[0].mxu0
      %v2954 = vadd.f32 0.0, %v2953
      %v2955 = vpop.f32.mrb[0].mxu0
      %2956 = vdwg.mxu0
      %v2957 = vadd.f32 %v2683, %v2895
      %v2958 = vadd.f32 %v2684, %v2898
      %v2959 = vadd.f32 %v2685, %v2903
      %v2960 = vadd.f32 %v2686, %v2906
      %v2961 = vadd.f32 %v2687, %v2911
      %v2962 = vadd.f32 %v2688, %v2914
      %v2963 = vadd.f32 %v2689, %v2919
      %v2964 = vadd.f32 %v2690, %v2922
      %v2965 = vadd.f32 %v2691, %v2927
      %v2966 = vadd.f32 %v2692, %v2930
      %v2967 = vadd.f32 %v2693, %v2935
      %v2968 = vadd.f32 %v2694, %v2938
      %v2969 = vadd.f32 %v2695, %v2943
      %v2970 = vadd.f32 %v2696, %v2946
      %v2971 = vadd.f32 %v2697, %v2951
      %v2972 = vadd.f32 %v2698, %v2954
      %2973 = vst [vmem:[%s197] sm:$0xff] %v2957
      %2974 = vst [vmem:[%s197 + $0x8] sm:$0xff] %v2958
      %2975 = vst [vmem:[%s197 + $0x10] sm:$0xff] %v2959
      %2976 = vst [vmem:[%s197 + $0x18] sm:$0xff] %v2960
      %2977 = vst [vmem:[%s197 + $0x20] sm:$0xff] %v2961
      %2978 = vst [vmem:[%s197 + $0x28] sm:$0xff] %v2962
      %2979 = vst [vmem:[%s197 + $0x30] sm:$0xff] %v2963
      %2980 = vst [vmem:[%s197 + $0x38] sm:$0xff] %v2964
      %2981 = vst [vmem:[%s197 + $0x40] sm:$0xff] %v2965
      %2982 = vst [vmem:[%s197 + $0x48] sm:$0xff] %v2966
      %2983 = vst [vmem:[%s197 + $0x50] sm:$0xff] %v2967
      %2984 = vst [vmem:[%s197 + $0x58] sm:$0xff] %v2968
      %2985 = vst [vmem:[%s197 + $0x60] sm:$0xff] %v2969
      %2986 = vst [vmem:[%s197 + $0x68] sm:$0xff] %v2970
      %2987 = vst [vmem:[%s197 + $0x70] sm:$0xff] %v2971
      %2988 = vst [vmem:[%s197 + $0x78] sm:$0xff] %v2972
      %v2989 = vld [vmem:[%s203] sm:$0x1]
      %v2990 = vadd.f32 %v2957, %v2958
      %v2991 = vadd.f32 %v2990, %v2959
      %v2992 = vadd.f32 %v2991, %v2960
      %v2993 = vadd.f32 %v2992, %v2961
      %v2994 = vadd.f32 %v2993, %v2962
      %v2995 = vadd.f32 %v2994, %v2963
      %v2996 = vadd.f32 %v2995, %v2964
      %v2997 = vadd.f32 %v2996, %v2965
      %v2998 = vadd.f32 %v2997, %v2966
      %v2999 = vadd.f32 %v2998, %v2967
      %v3000 = vadd.f32 %v2999, %v2968
      %v3001 = vadd.f32 %v3000, %v2969
      %v3002 = vadd.f32 %v3001, %v2970
      %v3003 = vadd.f32 %v3002, %v2971
      %v3004 = vadd.f32 %v3003, %v2972
      %v3005 = vrot.slane %v3004, 4
      %v3006 = vadd.f32 %v3004, %v3005
      %v3007 = vrot.slane %v3006, 2
      %v3008 = vadd.f32 %v3006, %v3007
      %v3009 = vrot.slane %v3008, 1
      %v3010 = vadd.f32 %v3008, %v3009
      %v3011 = vadd.f32 %v2989, %v3010
      %3012 = vst [vmem:[%s203] sm:$0x1] %v3011
      %v3013 = vld [vmem:[%s203 + $0x1] sm:$0x1]
      %v3014 = vmul.f32 %v2957, %v2957
      %v3015 = vmul.f32 %v2958, %v2958
      %v3016 = vmul.f32 %v2959, %v2959
      %v3017 = vmul.f32 %v2960, %v2960
      %v3018 = vmul.f32 %v2961, %v2961
      %v3019 = vmul.f32 %v2962, %v2962
      %v3020 = vmul.f32 %v2963, %v2963
      %v3021 = vmul.f32 %v2964, %v2964
      %v3022 = vmul.f32 %v2965, %v2965
      %v3023 = vmul.f32 %v2966, %v2966
      %v3024 = vmul.f32 %v2967, %v2967
      %v3025 = vmul.f32 %v2968, %v2968
      %v3026 = vmul.f32 %v2969, %v2969
      %v3027 = vmul.f32 %v2970, %v2970
      %v3028 = vmul.f32 %v2971, %v2971
      %v3029 = vmul.f32 %v2972, %v2972
      %v3030 = vadd.f32 %v3014, %v3015
      %v3031 = vadd.f32 %v3030, %v3016
      %v3032 = vadd.f32 %v3031, %v3017
      %v3033 = vadd.f32 %v3032, %v3018
      %v3034 = vadd.f32 %v3033, %v3019
      %v3035 = vadd.f32 %v3034, %v3020
      %v3036 = vadd.f32 %v3035, %v3021
      %v3037 = vadd.f32 %v3036, %v3022
      %v3038 = vadd.f32 %v3037, %v3023
      %v3039 = vadd.f32 %v3038, %v3024
      %v3040 = vadd.f32 %v3039, %v3025
      %v3041 = vadd.f32 %v3040, %v3026
      %v3042 = vadd.f32 %v3041, %v3027
      %v3043 = vadd.f32 %v3042, %v3028
      %v3044 = vadd.f32 %v3043, %v3029
      %v3045 = vrot.slane %v3044, 4
      %v3046 = vadd.f32 %v3044, %v3045
      %v3047 = vrot.slane %v3046, 2
      %v3048 = vadd.f32 %v3046, %v3047
      %v3049 = vrot.slane %v3048, 1
      %v3050 = vadd.f32 %v3048, %v3049
      %v3051 = vadd.f32 %v3013, %v3050
      %3052 = vst [vmem:[%s203 + $0x1] sm:$0x1] %v3051
      %s3053 = smul.u32 %s19, 2
      %s3054 = sadd.s32 %s3053, %s20
      %p3055 = scmp.lt.s32.totalorder %s3054, 3
      %s3056 = scalar_select %p3055, %s3054, 3
      %s3057 = smul.addr %s3056, 16
      %s3058 = smul.addr %s3057, 8
      %s3059 = scalar_lea.vmem %s2, %s3058
      %p3060 = scmp.lt.s32.totalorder %s19, 1
      %s3061 = scalar_select %p3060, %s19, 1
      %s3062 = smul.addr %s3061, 2
      %s3063 = scalar_lea.vmem %s3, %s3062
      // Predicated region
      $region33: #{double_2d_conv.4} parent=27 // pred_check
        %p3064 = pneg %p96
      $region34: #{double_2d_conv.4} parent=27 // pred_check_branch
        %3066 = sbr.rel (%p3064) target = $region36
      $region35: #{double_2d_conv.4} parent=27 // pred_region
        %s3067 = smul.u32 %s19, 2
        %s3068 = sadd.s32 %s3067, %s20
      $region36: #{double_2d_conv.4} parent=27 // pred_fallthru
        _
      // Predicated region
      $region37: #{double_2d_conv.4} parent=27 // pred_check
        %p3069 = pneg %p122
      $region38: #{double_2d_conv.4} parent=27 // pred_check_branch
        %3071 = sbr.rel (%p3069) target = $region40
      $region39: #{double_2d_conv.4} parent=27 // pred_region
        _
      $region40: #{double_2d_conv.4} parent=27 // pred_fallthru
        _
    $region28: #{double_2d_conv.4} parent=5 // pred_fallthru
      _
    %p3072 = scmp.le.s32.totalorder 2, %s10
    // Predicated region
    $region41: #{double_2d_conv.4} parent=5 // pred_check
      %p3073 = pneg %p3072
    $region42: #{double_2d_conv.4} parent=5 // pred_check_branch
      %3075 = sbr.rel (%p3073) target = $region44
    $region43: #{double_2d_conv.4} parent=5 // pred_region
      %s3076 = ssub.s32 %s10, 2
      // Predicated region
      $region45: #{double_2d_conv.4} parent=43 // pred_check
        %p3077 = pneg %p102
      $region46: #{double_2d_conv.4} parent=43 // pred_check_branch
        %3079 = sbr.rel (%p3077) target = $region48
      $region47: #{double_2d_conv.4} parent=43 // pred_region
        %s3080 = smul.u32 %s21, 2
        %s3081 = sadd.s32 %s3080, %s22
        %p3082 = scmp.lt.s32.totalorder %s3081, 3
        %s3083 = scalar_select %p3082, %s3081, 3
        %s3084 = smul.addr %s3083, 16
        %s3085 = smul.addr %s3084, 8
        %s3086 = scalar_lea.vmem %s2, %s3085
      $region48: #{double_2d_conv.4} parent=43 // pred_fallthru
        _
      // Predicated region
      $region49: #{double_2d_conv.4} parent=43 // pred_check
        %p3087 = pneg %p128
      $region50: #{double_2d_conv.4} parent=43 // pred_check_branch
        %3089 = sbr.rel (%p3087) target = $region52
      $region51: #{double_2d_conv.4} parent=43 // pred_region
        %p3090 = scmp.lt.s32.totalorder %s21, 1
        %s3091 = scalar_select %p3090, %s21, 1
        %s3092 = smul.addr %s3091, 2
        %s3093 = scalar_lea.vmem %s3, %s3092
      $region52: #{double_2d_conv.4} parent=43 // pred_fallthru
        _
    $region44: #{double_2d_conv.4} parent=5 // pred_fallthru
      _
  $region6: #{double_2d_conv.4} parent=0 // loop_footer
    %s14 = sadd.s32 1, %s10
  $region7: #{double_2d_conv.4} parent=0 // loop_footer_branch
    %9 = sbr.rel target = $region3
  $region8: #{double_2d_conv.4} parent=0 // loop_exit
    _

</llo_original>
